<compile_context>
chip_gen: v7x
topology: tpu7x:2x2x1
jax: 0.10.0
libtpu: 0.0.40
codegen_flags: <defaults>
</compile_context>

<pallas_src>
import functools

import jax
import jax.numpy as jnp
from jax import lax
from jax.experimental import pallas as pl
from jax.experimental.pallas import tpu as pltpu

BN_EPS = 1e-5


def _round_up(x, m):
    return (x + m - 1) // m * m


def _elu(y):
    # nn.ELU(alpha=1): x if x > 0 else exp(x) - 1 (EUP exp; guarded against overflow)
    return jnp.where(y > 0, y, jnp.expm1(jnp.minimum(y, 0.0)))


def _conv_accumulate(x_ref, w_ref, acc_ref, *, KH, KW, W, OHW):
    """Whole-image conv as KH*KW large MXU matmuls on shifted flattened slabs.

    x_ref:  (1, H*W + KW-1, C) bf16  -- image rows flattened along H*W
    w_ref:  (KH*KW, C, OCp) bf16     -- one (C, OCp) matrix per kernel tap
    acc_ref:(OHW, OCp) f32 VMEM scratch, OHW = OH*W (includes ghost columns ow>=OW)
    """
    acc_ref[...] = jnp.zeros_like(acc_ref)
    for kh in range(KH):                       # static unroll over the kernel window
        for kw in range(KW):
            slab = x_ref[0, pl.ds(kh * W + kw, OHW), :]          # (OHW, C) bf16
            acc_ref[...] += jnp.dot(slab, w_ref[kh * KW + kw],
                                    preferred_element_type=jnp.float32)


def _conv_stats_kernel(x_ref, w_ref, m_ref, y_ref, sum_ref, sq_ref, acc_ref,
                       *, KH, KW, W, OHW):
    """Pass 1 (with_bn=True): conv (no bias -- cancelled by BN mean subtraction),
    writes bf16 conv output plus per-image channel sum / sum-of-squares (f32,
    ghost columns masked out by m_ref)."""
    _conv_accumulate(x_ref, w_ref, acc_ref, KH=KH, KW=KW, W=W, OHW=OHW)
    acc = acc_ref[...]
    accv = acc * m_ref[...]                     # zero the ow >= OW ghost columns
    sum_ref[...] = accv.sum(axis=0, keepdims=True)[None]
    sq_ref[...] = (accv * accv).sum(axis=0, keepdims=True)[None]
    y_ref[0] = acc.astype(y_ref.dtype)


def _conv_bias_act_kernel(x_ref, w_ref, b_ref, o_ref, acc_ref,
                          *, KH, KW, W, OHW, with_relu):
    """Single-pass variant (with_bn=False): conv + bias (+ ELU) -> final output."""
    _conv_accumulate(x_ref, w_ref, acc_ref, KH=KH, KW=KW, W=W, OHW=OHW)
    y = acc_ref[...] + b_ref[...]
    if with_relu:
        y = _elu(y)
    o_ref[0] = y.astype(o_ref.dtype)


def _bn_act_kernel(y_ref, scale_ref, shift_ref, o_ref, *, with_relu):
    """Pass 2: folded BN affine (y*scale + shift) + ELU, tiled (TM, OCp) over M."""
    y = y_ref[...].astype(jnp.float32) * scale_ref[...] + shift_ref[...]
    if with_relu:
        y = _elu(y)
    o_ref[...] = y.astype(o_ref.dtype)


def conv_block_forward(x_nchw, w_oihw, bias, gamma, beta,
                       with_bn=True, with_relu=True):
    """x_nchw: (N, C, H, W); w_oihw: (OC, C, KH, KW); bias/gamma/beta: (OC,)."""
    N, C, H, W = x_nchw.shape
    OC, _, KH, KW = w_oihw.shape
    OH, OW = H - KH + 1, W - KW + 1        # Conv2d defaults: stride=1, padding=0
    OHW = OH * W                           # per-image conv rows incl. ghost cols
    M = N * OH * OW                        # real BatchNorm population
    OCp = _round_up(OC, 128)               # lane-dense output channels

    # layout glue: NCHW -> flattened NHWC rows, bf16 MXU inputs, pad OC -> OCp
    x_nhwc = jnp.transpose(x_nchw, (0, 2, 3, 1)).astype(jnp.bfloat16)
    x_flat = x_nhwc.reshape(N, H * W, C)
    if KW > 1:                              # KW-1 zero rows so the last slab stays in-bounds
        x_flat = jnp.pad(x_flat, ((0, 0), (0, KW - 1), (0, 0)))
    HWp = x_flat.shape[1]

    w_k = jnp.transpose(w_oihw, (2, 3, 1, 0)).reshape(KH * KW, C, OC)
    w_k = jnp.pad(w_k, ((0, 0), (0, 0), (0, OCp - OC))).astype(jnp.bfloat16)

    x_spec = pl.BlockSpec((1, HWp, C), lambda n: (n, 0, 0))
    w_spec = pl.BlockSpec((KH * KW, C, OCp), lambda n: (0, 0, 0))
    y_spec = pl.BlockSpec((1, OHW, OCp), lambda n: (n, 0, 0))

    conv_flops = 2 * N * OHW * KH * KW * C * OCp
    y_itemsize = 2 if with_bn else 4
    conv_bytes = (x_flat.size * 2 + w_k.size * 2
                  + N * OHW * OCp * y_itemsize + 2 * N * OCp * 4)
    step_bytes = (2 * HWp * C * 2 + KH * KW * C * OCp * 2
                  + 2 * OHW * OCp * y_itemsize + OHW * OCp * 4
                  + OHW * 4 + 4 * OCp * 4)
    vmem_limit = int(min(96 * 2**20, max(16 * 2**20, 4 * step_bytes)))
    conv_params = pltpu.CompilerParams(dimension_semantics=("parallel",),
                                       vmem_limit_bytes=vmem_limit)

    if with_bn:
        # ---- pass 1: whole-image conv + per-image channel sum / sumsq ----
        mask = (jnp.arange(OHW) % W < OW).astype(jnp.float32).reshape(OHW, 1)
        kernel1 = functools.partial(_conv_stats_kernel, KH=KH, KW=KW, W=W, OHW=OHW)
        y, psum, psq = pl.pallas_call(
            kernel1,
            out_shape=(jax.ShapeDtypeStruct((N, OHW, OCp), jnp.bfloat16),
                       jax.ShapeDtypeStruct((N, 1, OCp), jnp.float32),
                       jax.ShapeDtypeStruct((N, 1, OCp), jnp.float32)),
            grid_spec=pltpu.PrefetchScalarGridSpec(
                num_scalar_prefetch=0, grid=(N,),
                in_specs=[x_spec, w_spec,
                          pl.BlockSpec((OHW, 1), lambda n: (0, 0))],
                out_specs=[y_spec,
                           pl.BlockSpec((1, 1, OCp), lambda n: (n, 0, 0)),
                           pl.BlockSpec((1, 1, OCp), lambda n: (n, 0, 0))],
                scratch_shapes=[pltpu.VMEM((OHW, OCp), jnp.float32)]),
            compiler_params=conv_params,
            cost_estimate=pl.CostEstimate(flops=conv_flops, transcendentals=0,
                                          bytes_accessed=conv_bytes),
        )(x_flat, w_k, mask)

        # ---- fold batch stats (biased var, eps=1e-5) into one scale/shift per channel ----
        mean = psum.sum(axis=0) / M                                   # (1, OCp)
        var = jnp.maximum(psq.sum(axis=0) / M - mean * mean, 0.0)     # biased variance
        g = jnp.pad(gamma.astype(jnp.float32), (0, OCp - OC)).reshape(1, OCp)
        b = jnp.pad(beta.astype(jnp.float32), (0, OCp - OC)).reshape(1, OCp)
        scale = g * lax.rsqrt(var + BN_EPS)
        shift = b - mean * scale
        # conv bias intentionally skipped: a per-channel constant is exactly
        # cancelled by the BN mean subtraction.

        # ---- pass 2: (TM, OCp)-tiled affine + ELU over flattened N*OH*W axis ----
        Mfull = N * OHW
        y2d = y.reshape(Mfull, OCp)
        if Mfull >= 1024:
            TM = 512
        elif Mfull >= 256:
            TM = 256
        else:
            TM = Mfull
        grid_m = pl.cdiv(Mfull, TM)
        kernel2 = functools.partial(_bn_act_kernel, with_relu=with_relu)
        out2d = pl.pallas_call(
            kernel2,
            out_shape=jax.ShapeDtypeStruct((Mfull, OCp), jnp.float32),
            grid_spec=pltpu.PrefetchScalarGridSpec(
                num_scalar_prefetch=0, grid=(grid_m,),
                in_specs=[pl.BlockSpec((TM, OCp), lambda i: (i, 0)),
                          pl.BlockSpec((1, OCp), lambda i: (0, 0)),
                          pl.BlockSpec((1, OCp), lambda i: (0, 0))],
                out_specs=pl.BlockSpec((TM, OCp), lambda i: (i, 0))),
            compiler_params=pltpu.CompilerParams(dimension_semantics=("parallel",),
                                                 vmem_limit_bytes=vmem_limit),
            cost_estimate=pl.CostEstimate(
                flops=2 * Mfull * OCp,
                transcendentals=Mfull * OCp if with_relu else 0,
                bytes_accessed=Mfull * OCp * (2 + 4)),
        )(y2d, scale, shift)
        out = out2d.reshape(N, OH, W, OCp)
    else:
        bias_p = jnp.pad(bias.astype(jnp.float32), (0, OCp - OC)).reshape(1, OCp)
        kernel1 = functools.partial(_conv_bias_act_kernel, KH=KH, KW=KW, W=W,
                                    OHW=OHW, with_relu=with_relu)
        out = pl.pallas_call(
            kernel1,
            out_shape=jax.ShapeDtypeStruct((N, OHW, OCp), jnp.float32),
            grid_spec=pltpu.PrefetchScalarGridSpec(
                num_scalar_prefetch=0, grid=(N,),
                in_specs=[x_spec, w_spec, pl.BlockSpec((1, OCp), lambda n: (0, 0))],
                out_specs=y_spec,
                scratch_shapes=[pltpu.VMEM((OHW, OCp), jnp.float32)]),
            compiler_params=conv_params,
            cost_estimate=pl.CostEstimate(
                flops=conv_flops,
                transcendentals=N * OHW * OCp if with_relu else 0,
                bytes_accessed=conv_bytes),
        )(x_flat, w_k, bias_p)
        out = out.reshape(N, OH, W, OCp)

    # strip the ghost columns and the channel padding, return to NCHW
    return jnp.transpose(out[:, :, :OW, :OC], (0, 3, 1, 2))


def _reference(x, w, b, gamma, beta, with_bn=True, with_relu=True):
    y = lax.conv_general_dilated(x, w, window_strides=(1, 1), padding="VALID",
                                 dimension_numbers=("NCHW", "OIHW", "NCHW"))
    y = y + b.reshape(1, -1, 1, 1)
    if with_bn:
        mean = y.mean(axis=(0, 2, 3), keepdims=True)
        var = ((y - mean) ** 2).mean(axis=(0, 2, 3), keepdims=True)
        y = (y - mean) * lax.rsqrt(var + BN_EPS)
        y = y * gamma.reshape(1, -1, 1, 1) + beta.reshape(1, -1, 1, 1)
    if with_relu:
        y = jnp.where(y > 0, y, jnp.expm1(jnp.minimum(y, 0.0)))
    return y


if __name__ == "__main__":
    key = jax.random.PRNGKey(0)
    k_x, k_w, k_b = jax.random.split(key, 3)

    # ConvBlock(in_channels=4, out_channels=8, kernel_size=3)
    N, C, H, W = 2, 4, 16, 16
    OC, KH, KW = 8, 3, 3

    x = jax.random.normal(k_x, (N, C, H, W), dtype=jnp.float32)
    w = jax.random.normal(k_w, (OC, C, KH, KW), dtype=jnp.float32) * 0.1
    b = jax.random.normal(k_b, (OC,), dtype=jnp.float32) * 0.1
    gamma = jnp.ones((OC,), dtype=jnp.float32)   # BatchNorm2d weight init
    beta = jnp.zeros((OC,), dtype=jnp.float32)   # BatchNorm2d bias init

    # main config: Conv -> BN (batch stats) -> ELU
    out = conv_block_forward(x, w, b, gamma, beta, with_bn=True, with_relu=True)
    out = jax.block_until_ready(out)
    assert out.shape == (N, OC, H - KH + 1, W - KW + 1)
    ref = _reference(x, w, b, gamma, beta, with_bn=True, with_relu=True)
    assert bool(jnp.allclose(out, ref, atol=1e-1, rtol=1e-1)), \
        float(jnp.max(jnp.abs(out - ref)))

    # also exercise the single-pass (no-BN) kernel
    out2 = conv_block_forward(x, w, b, gamma, beta, with_bn=False, with_relu=True)
    out2 = jax.block_until_ready(out2)
    ref2 = _reference(x, w, b, gamma, beta, with_bn=False, with_relu=True)
    assert bool(jnp.allclose(out2, ref2, atol=5e-2, rtol=5e-2)), \
        float(jnp.max(jnp.abs(out2 - ref2)))

    print("KERNEL_OK")
</pallas_src>

<mosaic_0001>
module attributes {stable_mosaic.version = 11 : i64} {
  func.func @_conv_stats_kernel(%arg0: i32, %arg1: memref<1x258x4xbf16, #tpu.memory_space<vmem>>, %arg2: memref<9x4x128xbf16, #tpu.memory_space<vmem>>, %arg3: memref<224x1xf32, #tpu.memory_space<vmem>>, %arg4: memref<1x224x128xbf16, #tpu.memory_space<vmem>>, %arg5: memref<1x1x128xf32, #tpu.memory_space<vmem>>, %arg6: memref<1x1x128xf32, #tpu.memory_space<vmem>>, %arg7: memref<224x128xf32, #tpu.memory_space<vmem>>) attributes {dimension_semantics = [#tpu.dimension_semantics<parallel>], iteration_bounds = array<i64: 2>, scalar_prefetch = 0 : i64, scratch_operands = 1 : i64, tpu.core_type = #tpu.core_type<tc>, window_params = [{transform_indices = @transform_0, window_bounds = array<i64: 1, 258, 4>}, {pipeline_mode = #tpu.pipeline_mode<synchronous>, transform_indices = @transform_1, window_bounds = array<i64: 9, 4, 128>}, {pipeline_mode = #tpu.pipeline_mode<synchronous>, transform_indices = @transform_2, window_bounds = array<i64: 224, 1>}, {transform_indices = @transform_3, window_bounds = array<i64: 1, 224, 128>}, {transform_indices = @transform_4, window_bounds = array<i64: 1, 1, 128>}, {transform_indices = @transform_5, window_bounds = array<i64: 1, 1, 128>}]} {
    %cst = arith.constant 0.000000e+00 : f32
    %0 = vector.broadcast %cst : f32 to vector<224x128xf32>
    %c0 = arith.constant 0 : index
    %c0_0 = arith.constant 0 : index
    %1 = vector.load %arg7[%c0, %c0_0] : memref<224x128xf32, #tpu.memory_space<vmem>>, vector<224x128xf32>
    tpu.vector_store %arg7[%c0, %c0_0], %0 {strides = array<i32>} : memref<224x128xf32, #tpu.memory_space<vmem>>, vector<224x128xf32>,
    %c0_1 = arith.constant 0 : index
    %c0_2 = arith.constant 0 : index
    %c0_3 = arith.constant 0 : index
    %2 = vector.load %arg1[%c0_1, %c0_2, %c0_3] : memref<1x258x4xbf16, #tpu.memory_space<vmem>>, vector<1x224x4xbf16>
    %3 = vector.shape_cast %2 : vector<1x224x4xbf16> to vector<224x4xbf16>
    %c0_4 = arith.constant 0 : index
    %c0_5 = arith.constant 0 : index
    %4 = vector.load %arg7[%c0_4, %c0_5] : memref<224x128xf32, #tpu.memory_space<vmem>>, vector<224x128xf32>
    %c0_6 = arith.constant 0 : index
    %c0_7 = arith.constant 0 : index
    %c0_8 = arith.constant 0 : index
    %5 = vector.load %arg2[%c0_6, %c0_7, %c0_8] : memref<9x4x128xbf16, #tpu.memory_space<vmem>>, vector<1x4x128xbf16>
    %6 = vector.shape_cast %5 : vector<1x4x128xbf16> to vector<4x128xbf16>
    %cst_9 = arith.constant dense<0.000000e+00> : vector<224x128xf32>
    %7 = tpu.matmul %3, %6, %cst_9 {dimension_numbers = #tpu.dot_dimension_numbers<[1], [0], [0], [1], [0, 0, 1, 1], [], []>} : vector<224x4xbf16>, vector<4x128xbf16>, vector<224x128xf32> -> vector<224x128xf32>
    %8 = arith.addf %4, %7 : vector<224x128xf32>
    %c0_10 = arith.constant 0 : index
    %c0_11 = arith.constant 0 : index
    %9 = vector.load %arg7[%c0_10, %c0_11] : memref<224x128xf32, #tpu.memory_space<vmem>>, vector<224x128xf32>
    tpu.vector_store %arg7[%c0_10, %c0_11], %8 {strides = array<i32>} : memref<224x128xf32, #tpu.memory_space<vmem>>, vector<224x128xf32>,
    %c0_12 = arith.constant 0 : index
    %c1 = arith.constant 1 : index
    %c0_13 = arith.constant 0 : index
    %10 = vector.load %arg1[%c0_12, %c1, %c0_13] : memref<1x258x4xbf16, #tpu.memory_space<vmem>>, vector<1x224x4xbf16>
    %11 = vector.shape_cast %10 : vector<1x224x4xbf16> to vector<224x4xbf16>
    %c0_14 = arith.constant 0 : index
    %c0_15 = arith.constant 0 : index
    %12 = vector.load %arg7[%c0_14, %c0_15] : memref<224x128xf32, #tpu.memory_space<vmem>>, vector<224x128xf32>
    %c1_16 = arith.constant 1 : index
    %c0_17 = arith.constant 0 : index
    %c0_18 = arith.constant 0 : index
    %13 = vector.load %arg2[%c1_16, %c0_17, %c0_18] : memref<9x4x128xbf16, #tpu.memory_space<vmem>>, vector<1x4x128xbf16>
    %14 = vector.shape_cast %13 : vector<1x4x128xbf16> to vector<4x128xbf16>
    %cst_19 = arith.constant dense<0.000000e+00> : vector<224x128xf32>
    %15 = tpu.matmul %11, %14, %cst_19 {dimension_numbers = #tpu.dot_dimension_numbers<[1], [0], [0], [1], [0, 0, 1, 1], [], []>} : vector<224x4xbf16>, vector<4x128xbf16>, vector<224x128xf32> -> vector<224x128xf32>
    %16 = arith.addf %12, %15 : vector<224x128xf32>
    %c0_20 = arith.constant 0 : index
    %c0_21 = arith.constant 0 : index
    %17 = vector.load %arg7[%c0_20, %c0_21] : memref<224x128xf32, #tpu.memory_space<vmem>>, vector<224x128xf32>
    tpu.vector_store %arg7[%c0_20, %c0_21], %16 {strides = array<i32>} : memref<224x128xf32, #tpu.memory_space<vmem>>, vector<224x128xf32>,
    %c0_22 = arith.constant 0 : index
    %c2 = arith.constant 2 : index
    %c0_23 = arith.constant 0 : index
    %18 = vector.load %arg1[%c0_22, %c2, %c0_23] : memref<1x258x4xbf16, #tpu.memory_space<vmem>>, vector<1x224x4xbf16>
    %19 = vector.shape_cast %18 : vector<1x224x4xbf16> to vector<224x4xbf16>
    %c0_24 = arith.constant 0 : index
    %c0_25 = arith.constant 0 : index
    %20 = vector.load %arg7[%c0_24, %c0_25] : memref<224x128xf32, #tpu.memory_space<vmem>>, vector<224x128xf32>
    %c2_26 = arith.constant 2 : index
    %c0_27 = arith.constant 0 : index
    %c0_28 = arith.constant 0 : index
    %21 = vector.load %arg2[%c2_26, %c0_27, %c0_28] : memref<9x4x128xbf16, #tpu.memory_space<vmem>>, vector<1x4x128xbf16>
    %22 = vector.shape_cast %21 : vector<1x4x128xbf16> to vector<4x128xbf16>
    %cst_29 = arith.constant dense<0.000000e+00> : vector<224x128xf32>
    %23 = tpu.matmul %19, %22, %cst_29 {dimension_numbers = #tpu.dot_dimension_numbers<[1], [0], [0], [1], [0, 0, 1, 1], [], []>} : vector<224x4xbf16>, vector<4x128xbf16>, vector<224x128xf32> -> vector<224x128xf32>
    %24 = arith.addf %20, %23 : vector<224x128xf32>
    %c0_30 = arith.constant 0 : index
    %c0_31 = arith.constant 0 : index
    %25 = vector.load %arg7[%c0_30, %c0_31] : memref<224x128xf32, #tpu.memory_space<vmem>>, vector<224x128xf32>
    tpu.vector_store %arg7[%c0_30, %c0_31], %24 {strides = array<i32>} : memref<224x128xf32, #tpu.memory_space<vmem>>, vector<224x128xf32>,
    %c0_32 = arith.constant 0 : index
    %c16 = arith.constant 16 : index
    %c0_33 = arith.constant 0 : index
    %26 = vector.load %arg1[%c0_32, %c16, %c0_33] : memref<1x258x4xbf16, #tpu.memory_space<vmem>>, vector<1x224x4xbf16>
    %27 = vector.shape_cast %26 : vector<1x224x4xbf16> to vector<224x4xbf16>
    %c0_34 = arith.constant 0 : index
    %c0_35 = arith.constant 0 : index
    %28 = vector.load %arg7[%c0_34, %c0_35] : memref<224x128xf32, #tpu.memory_space<vmem>>, vector<224x128xf32>
    %c3 = arith.constant 3 : index
    %c0_36 = arith.constant 0 : index
    %c0_37 = arith.constant 0 : index
    %29 = vector.load %arg2[%c3, %c0_36, %c0_37] : memref<9x4x128xbf16, #tpu.memory_space<vmem>>, vector<1x4x128xbf16>
    %30 = vector.shape_cast %29 : vector<1x4x128xbf16> to vector<4x128xbf16>
    %cst_38 = arith.constant dense<0.000000e+00> : vector<224x128xf32>
    %31 = tpu.matmul %27, %30, %cst_38 {dimension_numbers = #tpu.dot_dimension_numbers<[1], [0], [0], [1], [0, 0, 1, 1], [], []>} : vector<224x4xbf16>, vector<4x128xbf16>, vector<224x128xf32> -> vector<224x128xf32>
    %32 = arith.addf %28, %31 : vector<224x128xf32>
    %c0_39 = arith.constant 0 : index
    %c0_40 = arith.constant 0 : index
    %33 = vector.load %arg7[%c0_39, %c0_40] : memref<224x128xf32, #tpu.memory_space<vmem>>, vector<224x128xf32>
    tpu.vector_store %arg7[%c0_39, %c0_40], %32 {strides = array<i32>} : memref<224x128xf32, #tpu.memory_space<vmem>>, vector<224x128xf32>,
    %c0_41 = arith.constant 0 : index
    %c17 = arith.constant 17 : index
    %c0_42 = arith.constant 0 : index
    %34 = vector.load %arg1[%c0_41, %c17, %c0_42] : memref<1x258x4xbf16, #tpu.memory_space<vmem>>, vector<1x224x4xbf16>
    %35 = vector.shape_cast %34 : vector<1x224x4xbf16> to vector<224x4xbf16>
    %c0_43 = arith.constant 0 : index
    %c0_44 = arith.constant 0 : index
    %36 = vector.load %arg7[%c0_43, %c0_44] : memref<224x128xf32, #tpu.memory_space<vmem>>, vector<224x128xf32>
    %c4 = arith.constant 4 : index
    %c0_45 = arith.constant 0 : index
    %c0_46 = arith.constant 0 : index
    %37 = vector.load %arg2[%c4, %c0_45, %c0_46] : memref<9x4x128xbf16, #tpu.memory_space<vmem>>, vector<1x4x128xbf16>
    %38 = vector.shape_cast %37 : vector<1x4x128xbf16> to vector<4x128xbf16>
    %cst_47 = arith.constant dense<0.000000e+00> : vector<224x128xf32>
    %39 = tpu.matmul %35, %38, %cst_47 {dimension_numbers = #tpu.dot_dimension_numbers<[1], [0], [0], [1], [0, 0, 1, 1], [], []>} : vector<224x4xbf16>, vector<4x128xbf16>, vector<224x128xf32> -> vector<224x128xf32>
    %40 = arith.addf %36, %39 : vector<224x128xf32>
    %c0_48 = arith.constant 0 : index
    %c0_49 = arith.constant 0 : index
    %41 = vector.load %arg7[%c0_48, %c0_49] : memref<224x128xf32, #tpu.memory_space<vmem>>, vector<224x128xf32>
    tpu.vector_store %arg7[%c0_48, %c0_49], %40 {strides = array<i32>} : memref<224x128xf32, #tpu.memory_space<vmem>>, vector<224x128xf32>,
    %c0_50 = arith.constant 0 : index
    %c18 = arith.constant 18 : index
    %c0_51 = arith.constant 0 : index
    %42 = vector.load %arg1[%c0_50, %c18, %c0_51] : memref<1x258x4xbf16, #tpu.memory_space<vmem>>, vector<1x224x4xbf16>
    %43 = vector.shape_cast %42 : vector<1x224x4xbf16> to vector<224x4xbf16>
    %c0_52 = arith.constant 0 : index
    %c0_53 = arith.constant 0 : index
    %44 = vector.load %arg7[%c0_52, %c0_53] : memref<224x128xf32, #tpu.memory_space<vmem>>, vector<224x128xf32>
    %c5 = arith.constant 5 : index
    %c0_54 = arith.constant 0 : index
    %c0_55 = arith.constant 0 : index
    %45 = vector.load %arg2[%c5, %c0_54, %c0_55] : memref<9x4x128xbf16, #tpu.memory_space<vmem>>, vector<1x4x128xbf16>
    %46 = vector.shape_cast %45 : vector<1x4x128xbf16> to vector<4x128xbf16>
    %cst_56 = arith.constant dense<0.000000e+00> : vector<224x128xf32>
    %47 = tpu.matmul %43, %46, %cst_56 {dimension_numbers = #tpu.dot_dimension_numbers<[1], [0], [0], [1], [0, 0, 1, 1], [], []>} : vector<224x4xbf16>, vector<4x128xbf16>, vector<224x128xf32> -> vector<224x128xf32>
    %48 = arith.addf %44, %47 : vector<224x128xf32>
    %c0_57 = arith.constant 0 : index
    %c0_58 = arith.constant 0 : index
    %49 = vector.load %arg7[%c0_57, %c0_58] : memref<224x128xf32, #tpu.memory_space<vmem>>, vector<224x128xf32>
    tpu.vector_store %arg7[%c0_57, %c0_58], %48 {strides = array<i32>} : memref<224x128xf32, #tpu.memory_space<vmem>>, vector<224x128xf32>,
    %c0_59 = arith.constant 0 : index
    %c32 = arith.constant 32 : index
    %c0_60 = arith.constant 0 : index
    %50 = vector.load %arg1[%c0_59, %c32, %c0_60] : memref<1x258x4xbf16, #tpu.memory_space<vmem>>, vector<1x224x4xbf16>
    %51 = vector.shape_cast %50 : vector<1x224x4xbf16> to vector<224x4xbf16>
    %c0_61 = arith.constant 0 : index
    %c0_62 = arith.constant 0 : index
    %52 = vector.load %arg7[%c0_61, %c0_62] : memref<224x128xf32, #tpu.memory_space<vmem>>, vector<224x128xf32>
    %c6 = arith.constant 6 : index
    %c0_63 = arith.constant 0 : index
    %c0_64 = arith.constant 0 : index
    %53 = vector.load %arg2[%c6, %c0_63, %c0_64] : memref<9x4x128xbf16, #tpu.memory_space<vmem>>, vector<1x4x128xbf16>
    %54 = vector.shape_cast %53 : vector<1x4x128xbf16> to vector<4x128xbf16>
    %cst_65 = arith.constant dense<0.000000e+00> : vector<224x128xf32>
    %55 = tpu.matmul %51, %54, %cst_65 {dimension_numbers = #tpu.dot_dimension_numbers<[1], [0], [0], [1], [0, 0, 1, 1], [], []>} : vector<224x4xbf16>, vector<4x128xbf16>, vector<224x128xf32> -> vector<224x128xf32>
    %56 = arith.addf %52, %55 : vector<224x128xf32>
    %c0_66 = arith.constant 0 : index
    %c0_67 = arith.constant 0 : index
    %57 = vector.load %arg7[%c0_66, %c0_67] : memref<224x128xf32, #tpu.memory_space<vmem>>, vector<224x128xf32>
    tpu.vector_store %arg7[%c0_66, %c0_67], %56 {strides = array<i32>} : memref<224x128xf32, #tpu.memory_space<vmem>>, vector<224x128xf32>,
    %c0_68 = arith.constant 0 : index
    %c33 = arith.constant 33 : index
    %c0_69 = arith.constant 0 : index
    %58 = vector.load %arg1[%c0_68, %c33, %c0_69] : memref<1x258x4xbf16, #tpu.memory_space<vmem>>, vector<1x224x4xbf16>
    %59 = vector.shape_cast %58 : vector<1x224x4xbf16> to vector<224x4xbf16>
    %c0_70 = arith.constant 0 : index
    %c0_71 = arith.constant 0 : index
    %60 = vector.load %arg7[%c0_70, %c0_71] : memref<224x128xf32, #tpu.memory_space<vmem>>, vector<224x128xf32>
    %c7 = arith.constant 7 : index
    %c0_72 = arith.constant 0 : index
    %c0_73 = arith.constant 0 : index
    %61 = vector.load %arg2[%c7, %c0_72, %c0_73] : memref<9x4x128xbf16, #tpu.memory_space<vmem>>, vector<1x4x128xbf16>
    %62 = vector.shape_cast %61 : vector<1x4x128xbf16> to vector<4x128xbf16>
    %cst_74 = arith.constant dense<0.000000e+00> : vector<224x128xf32>
    %63 = tpu.matmul %59, %62, %cst_74 {dimension_numbers = #tpu.dot_dimension_numbers<[1], [0], [0], [1], [0, 0, 1, 1], [], []>} : vector<224x4xbf16>, vector<4x128xbf16>, vector<224x128xf32> -> vector<224x128xf32>
    %64 = arith.addf %60, %63 : vector<224x128xf32>
    %c0_75 = arith.constant 0 : index
    %c0_76 = arith.constant 0 : index
    %65 = vector.load %arg7[%c0_75, %c0_76] : memref<224x128xf32, #tpu.memory_space<vmem>>, vector<224x128xf32>
    tpu.vector_store %arg7[%c0_75, %c0_76], %64 {strides = array<i32>} : memref<224x128xf32, #tpu.memory_space<vmem>>, vector<224x128xf32>,
    %c0_77 = arith.constant 0 : index
    %c34 = arith.constant 34 : index
    %c0_78 = arith.constant 0 : index
    %66 = vector.load %arg1[%c0_77, %c34, %c0_78] : memref<1x258x4xbf16, #tpu.memory_space<vmem>>, vector<1x224x4xbf16>
    %67 = vector.shape_cast %66 : vector<1x224x4xbf16> to vector<224x4xbf16>
    %c0_79 = arith.constant 0 : index
    %c0_80 = arith.constant 0 : index
    %68 = vector.load %arg7[%c0_79, %c0_80] : memref<224x128xf32, #tpu.memory_space<vmem>>, vector<224x128xf32>
    %c8 = arith.constant 8 : index
    %c0_81 = arith.constant 0 : index
    %c0_82 = arith.constant 0 : index
    %69 = vector.load %arg2[%c8, %c0_81, %c0_82] : memref<9x4x128xbf16, #tpu.memory_space<vmem>>, vector<1x4x128xbf16>
    %70 = vector.shape_cast %69 : vector<1x4x128xbf16> to vector<4x128xbf16>
    %cst_83 = arith.constant dense<0.000000e+00> : vector<224x128xf32>
    %71 = tpu.matmul %67, %70, %cst_83 {dimension_numbers = #tpu.dot_dimension_numbers<[1], [0], [0], [1], [0, 0, 1, 1], [], []>} : vector<224x4xbf16>, vector<4x128xbf16>, vector<224x128xf32> -> vector<224x128xf32>
    %72 = arith.addf %68, %71 : vector<224x128xf32>
    %c0_84 = arith.constant 0 : index
    %c0_85 = arith.constant 0 : index
    %73 = vector.load %arg7[%c0_84, %c0_85] : memref<224x128xf32, #tpu.memory_space<vmem>>, vector<224x128xf32>
    tpu.vector_store %arg7[%c0_84, %c0_85], %72 {strides = array<i32>} : memref<224x128xf32, #tpu.memory_space<vmem>>, vector<224x128xf32>,
    %c0_86 = arith.constant 0 : index
    %c0_87 = arith.constant 0 : index
    %74 = vector.load %arg7[%c0_86, %c0_87] : memref<224x128xf32, #tpu.memory_space<vmem>>, vector<224x128xf32>
    %c0_88 = arith.constant 0 : index
    %c0_89 = arith.constant 0 : index
    %75 = vector.load %arg3[%c0_88, %c0_89] : memref<224x1xf32, #tpu.memory_space<vmem>>, vector<224x1xf32>
    %76 = vector.broadcast %75 : vector<224x1xf32> to vector<224x128xf32>
    %77 = arith.mulf %74, %76 : vector<224x128xf32>
    %cst_90 = arith.constant dense<0.000000e+00> : vector<128xf32>
    %78 = vector.multi_reduction <add>, %77, %cst_90 [0] : vector<224x128xf32> to vector<128xf32>
    %79 = vector.shape_cast %78 : vector<128xf32> to vector<1x128xf32>
    %80 = vector.shape_cast %79 : vector<1x128xf32> to vector<1x1x128xf32>
    %c0_91 = arith.constant 0 : index
    %c0_92 = arith.constant 0 : index
    %c0_93 = arith.constant 0 : index
    %81 = vector.load %arg5[%c0_91, %c0_92, %c0_93] : memref<1x1x128xf32, #tpu.memory_space<vmem>>, vector<1x1x128xf32>
    tpu.vector_store %arg5[%c0_91, %c0_92, %c0_93], %80 {strides = array<i32>} : memref<1x1x128xf32, #tpu.memory_space<vmem>>, vector<1x1x128xf32>,
    %82 = arith.mulf %77, %77 : vector<224x128xf32>
    %cst_94 = arith.constant dense<0.000000e+00> : vector<128xf32>
    %83 = vector.multi_reduction <add>, %82, %cst_94 [0] : vector<224x128xf32> to vector<128xf32>
    %84 = vector.shape_cast %83 : vector<128xf32> to vector<1x128xf32>
    %85 = vector.shape_cast %84 : vector<1x128xf32> to vector<1x1x128xf32>
    %c0_95 = arith.constant 0 : index
    %c0_96 = arith.constant 0 : index
    %c0_97 = arith.constant 0 : index
    %86 = vector.load %arg6[%c0_95, %c0_96, %c0_97] : memref<1x1x128xf32, #tpu.memory_space<vmem>>, vector<1x1x128xf32>
    tpu.vector_store %arg6[%c0_95, %c0_96, %c0_97], %85 {strides = array<i32>} : memref<1x1x128xf32, #tpu.memory_space<vmem>>, vector<1x1x128xf32>,
    %87 = arith.truncf %74 : vector<224x128xf32> to vector<224x128xbf16>
    %c0_98 = arith.constant 0 : index
    %c0_99 = arith.constant 0 : index
    %c0_100 = arith.constant 0 : index
    %88 = vector.load %arg4[%c0_98, %c0_99, %c0_100] : memref<1x224x128xbf16, #tpu.memory_space<vmem>>, vector<1x224x128xbf16>
    %89 = vector.shape_cast %88 : vector<1x224x128xbf16> to vector<224x128xbf16>
    %90 = vector.shape_cast %87 : vector<224x128xbf16> to vector<1x224x128xbf16>
    tpu.vector_store %arg4[%c0_98, %c0_99, %c0_100], %90 {strides = array<i32>} : memref<1x224x128xbf16, #tpu.memory_space<vmem>>, vector<1x224x128xbf16>,
    return
  }
  func.func @transform_0(%arg0: i32) -> (i32, i32, i32) {
    %c0_i32 = arith.constant 0 : i32
    %c0_i32_0 = arith.constant 0 : i32
    %c0_i32_1 = arith.constant 0 : i32
    return %arg0, %c0_i32, %c0_i32_0 : i32, i32, i32
  }
  func.func @transform_1(%arg0: i32) -> (i32, i32, i32) {
    %c0_i32 = arith.constant 0 : i32
    %c0_i32_0 = arith.constant 0 : i32
    %c0_i32_1 = arith.constant 0 : i32
    %c0_i32_2 = arith.constant 0 : i32
    return %c0_i32, %c0_i32_0, %c0_i32_1 : i32, i32, i32
  }
  func.func @transform_2(%arg0: i32) -> (i32, i32) {
    %c0_i32 = arith.constant 0 : i32
    %c0_i32_0 = arith.constant 0 : i32
    %c0_i32_1 = arith.constant 0 : i32
    return %c0_i32, %c0_i32_0 : i32, i32
  }
  func.func @transform_3(%arg0: i32) -> (i32, i32, i32) {
    %c0_i32 = arith.constant 0 : i32
    %c0_i32_0 = arith.constant 0 : i32
    %c0_i32_1 = arith.constant 0 : i32
    return %arg0, %c0_i32, %c0_i32_0 : i32, i32, i32
  }
  func.func @transform_4(%arg0: i32) -> (i32, i32, i32) {
    %c0_i32 = arith.constant 0 : i32
    %c0_i32_0 = arith.constant 0 : i32
    %c0_i32_1 = arith.constant 0 : i32
    return %arg0, %c0_i32, %c0_i32_0 : i32, i32, i32
  }
  func.func @transform_5(%arg0: i32) -> (i32, i32, i32) {
    %c0_i32 = arith.constant 0 : i32
    %c0_i32_0 = arith.constant 0 : i32
    %c0_i32_1 = arith.constant 0 : i32
    return %arg0, %c0_i32, %c0_i32_0 : i32, i32, i32
  }
}

</mosaic_0001>

<llo_original>
// kernel: tpu_custom_call.1
$region0: #{tpu_custom_call.1}
  #allocation0 [shape = 'u32[]', space=smem, size = 0x4, offset = 0x4, fixed_abs, tag = 'smem constant byte address 0x4 - core index']
  #allocation1 [shape = 'u32[144,128]{1,0:T(1,128)}', space=vmem, size = 0x12000, scoped, tag = 'internal scratch']
  #allocation2 [shape = 'f32[224,128]{1,0:T(8,128)}', space=vmem, size = 0x1c000, scoped, tag = 'scratch operand']
  %s0 = inlined_call_operand.vmem [shape: bf16[2,258,4], index: 0, kind: input, shape index: {}]
  %s1 = inlined_call_operand.vmem [shape: bf16[9,4,128], index: 1, kind: input, shape index: {}]
  %s2 = inlined_call_operand.vmem [shape: f32[224,1], index: 2, kind: input, shape index: {}]
  %s3 = inlined_call_operand.hbm [shape: bf16[2,224,128], index: 3, kind: output, shape index: {0}]
  %s4 = inlined_call_operand.hbm [shape: f32[2,1,128], index: 4, kind: output, shape index: {1}]
  %s5 = inlined_call_operand.hbm [shape: f32[2,1,128], index: 5, kind: output, shape index: {2}]
  %6 = xla_tuple %s3, %s4, %s5
  %s7 = sld [smem:[#allocation0]]
  $region61: #{tpu_custom_call.1} parent=0
    _
  %s9 = ssub.s32 1, %s7
  %s10 = scalar_select 0, %s9, %s7
  $region1: #{tpu_custom_call.1} parent=0
    #allocation3 [shape = 'u8[114688]{0}', space=vmem, size = 0x1c000, scoped, tag = 'output window, operand 0']
    #allocation4 [shape = 's32[2]{0}', space=sflag, size = 0x8, scoped, tag = 'scoped memory for tpu_custom_call.1']
    #allocation5 [shape = 'u8[1024]{0}', space=vmem, size = 0x400, scoped, tag = 'output window, operand 1']
    #allocation6 [shape = 's32[2]{0}', space=sflag, size = 0x8, scoped, tag = 'scoped memory for tpu_custom_call.1']
    #allocation7 [shape = 'u8[1024]{0}', space=vmem, size = 0x400, scoped, tag = 'output window, operand 2']
    %11 = vsyncpa [#allocation4], 0
    %s12 = scalar_lea.sflag [#allocation4], 1
    %13 = vsyncpa %s12, 0
    %14 = vsyncpa [#allocation6], 0
    %s15 = scalar_lea.sflag [#allocation6], 1
    %16 = vsyncpa %s15, 0
    loop: start=0, step=1, limit=4
    $region2: #{tpu_custom_call.1} parent=1 // loop_pre_header
      _
    $region3: #{tpu_custom_call.1} parent=1 // loop_header
      %s18 = sphi 0, %s22
      %p19 = scmp.ge.s32.totalorder %s18, 4
      %s28 = sphi 0, %s30
      %s31 = sphi 0, %s28
      %s32 = sphi 0, %s31
      %s48 = sphi 0, %s32
      %s52 = sphi 0, %s52
      %s54 = sphi 0, %s52
      %s55 = sphi 0, %s54
      %s69 = sphi 0, %s55
      %s73 = sphi 0, %s73
      %s75 = sphi 0, %s73
      %s76 = sphi 0, %s75
      %s90 = sphi 0, %s76
      %s96 = sphi 0, %s98
      %s99 = sphi 0, %s96
      %s100 = sphi 0, %s99
      %s116 = sphi 0, %s100
      %s122 = sphi 0, %s124
      %s125 = sphi 0, %s122
      %s126 = sphi 0, %s125
      %s142 = sphi 0, %s126
      %s148 = sphi 0, %s150
      %s151 = sphi 0, %s148
      %s152 = sphi 0, %s151
      %s168 = sphi 0, %s152
    $region4: #{tpu_custom_call.1} parent=1 // loop_header_branch
      %21 = sbr.rel (%p19) target = $region8
    $region5: #{tpu_custom_call.1} parent=1 // loop_body
      %s23 = ssub.s32 %s18, 1
      %s24 = ssub.s32 %s18, 2
      %s25 = sadd.s32 %s18, 1
      %s26 = ssub.s32 %s18, %s25
      %p27 = scmp.eq.s32.totalorder %s26, 0
      %s29 = sadd.s32 %s28, 1
      %s30 = scalar_select %p27, %s28, %s29
      %p33 = pneg %p27
      %p34 = scmp.eq.s32.totalorder %s18, 1
      %p35 = por %p33, %p34
      %p36 = scmp.ne.s32.totalorder %s28, %s31
      %p37 = scmp.eq.s32.totalorder %s18, 0
      %p38 = por %p36, %p37
      %p39 = scmp.ne.s32.totalorder %s28, %s31
      %p40 = scmp.eq.s32.totalorder %s23, 1
      %p41 = por %p39, %p40
      %p42 = scmp.ne.s32.totalorder %s31, %s32
      %p43 = scmp.eq.s32.totalorder %s23, 0
      %p44 = por %p42, %p43
      %p45 = scmp.ne.s32.totalorder %s31, %s32
      %p46 = scmp.eq.s32.totalorder %s24, 1
      %p47 = por %p45, %p46
      %p49 = scmp.ne.s32.totalorder %s32, %s48
      %p50 = scmp.eq.s32.totalorder %s24, 0
      %p51 = por %p49, %p50
      %s53 = sadd.s32 %s52, 1
      %p56 = scmp.eq.s32.totalorder %s18, 1
      %p57 = scmp.ne.s32.totalorder %s52, %s54
      %p58 = scmp.eq.s32.totalorder %s18, 0
      %p59 = por %p57, %p58
      %p60 = scmp.ne.s32.totalorder %s52, %s54
      %p61 = scmp.eq.s32.totalorder %s23, 1
      %p62 = por %p60, %p61
      %p63 = scmp.ne.s32.totalorder %s54, %s55
      %p64 = scmp.eq.s32.totalorder %s23, 0
      %p65 = por %p63, %p64
      %p66 = scmp.ne.s32.totalorder %s54, %s55
      %p67 = scmp.eq.s32.totalorder %s24, 1
      %p68 = por %p66, %p67
      %p70 = scmp.ne.s32.totalorder %s55, %s69
      %p71 = scmp.eq.s32.totalorder %s24, 0
      %p72 = por %p70, %p71
      %s74 = sadd.s32 %s73, 1
      %p77 = scmp.eq.s32.totalorder %s18, 1
      %p78 = scmp.ne.s32.totalorder %s73, %s75
      %p79 = scmp.eq.s32.totalorder %s18, 0
      %p80 = por %p78, %p79
      %p81 = scmp.ne.s32.totalorder %s73, %s75
      %p82 = scmp.eq.s32.totalorder %s23, 1
      %p83 = por %p81, %p82
      %p84 = scmp.ne.s32.totalorder %s75, %s76
      %p85 = scmp.eq.s32.totalorder %s23, 0
      %p86 = por %p84, %p85
      %p87 = scmp.ne.s32.totalorder %s75, %s76
      %p88 = scmp.eq.s32.totalorder %s24, 1
      %p89 = por %p87, %p88
      %p91 = scmp.ne.s32.totalorder %s76, %s90
      %p92 = scmp.eq.s32.totalorder %s24, 0
      %p93 = por %p91, %p92
      %s94 = ssub.s32 %s18, %s25
      %p95 = scmp.eq.s32.totalorder %s94, 0
      %s97 = sadd.s32 %s96, 1
      %s98 = scalar_select %p95, %s96, %s97
      %p101 = pneg %p95
      %p102 = scmp.eq.s32.totalorder %s18, 1
      %p103 = por %p101, %p102
      %p104 = scmp.ne.s32.totalorder %s96, %s99
      %p105 = scmp.eq.s32.totalorder %s18, 0
      %p106 = por %p104, %p105
      %p107 = scmp.ne.s32.totalorder %s96, %s99
      %p108 = scmp.eq.s32.totalorder %s23, 1
      %p109 = por %p107, %p108
      %p110 = scmp.ne.s32.totalorder %s99, %s100
      %p111 = scmp.eq.s32.totalorder %s23, 0
      %p112 = por %p110, %p111
      %p113 = scmp.ne.s32.totalorder %s99, %s100
      %p114 = scmp.eq.s32.totalorder %s24, 1
      %p115 = por %p113, %p114
      %p117 = scmp.ne.s32.totalorder %s100, %s116
      %p118 = scmp.eq.s32.totalorder %s24, 0
      %p119 = por %p117, %p118
      %s120 = ssub.s32 %s18, %s25
      %p121 = scmp.eq.s32.totalorder %s120, 0
      %s123 = sadd.s32 %s122, 1
      %s124 = scalar_select %p121, %s122, %s123
      %p127 = pneg %p121
      %p128 = scmp.eq.s32.totalorder %s18, 1
      %p129 = por %p127, %p128
      %p130 = scmp.ne.s32.totalorder %s122, %s125
      %p131 = scmp.eq.s32.totalorder %s18, 0
      %p132 = por %p130, %p131
      %p133 = scmp.ne.s32.totalorder %s122, %s125
      %p134 = scmp.eq.s32.totalorder %s23, 1
      %p135 = por %p133, %p134
      %p136 = scmp.ne.s32.totalorder %s125, %s126
      %p137 = scmp.eq.s32.totalorder %s23, 0
      %p138 = por %p136, %p137
      %p139 = scmp.ne.s32.totalorder %s125, %s126
      %p140 = scmp.eq.s32.totalorder %s24, 1
      %p141 = por %p139, %p140
      %p143 = scmp.ne.s32.totalorder %s126, %s142
      %p144 = scmp.eq.s32.totalorder %s24, 0
      %p145 = por %p143, %p144
      %s146 = ssub.s32 %s18, %s25
      %p147 = scmp.eq.s32.totalorder %s146, 0
      %s149 = sadd.s32 %s148, 1
      %s150 = scalar_select %p147, %s148, %s149
      %p153 = pneg %p147
      %p154 = scmp.eq.s32.totalorder %s18, 1
      %p155 = por %p153, %p154
      %p156 = scmp.ne.s32.totalorder %s148, %s151
      %p157 = scmp.eq.s32.totalorder %s18, 0
      %p158 = por %p156, %p157
      %p159 = scmp.ne.s32.totalorder %s148, %s151
      %p160 = scmp.eq.s32.totalorder %s23, 1
      %p161 = por %p159, %p160
      %p162 = scmp.ne.s32.totalorder %s151, %s152
      %p163 = scmp.eq.s32.totalorder %s23, 0
      %p164 = por %p162, %p163
      %p165 = scmp.ne.s32.totalorder %s151, %s152
      %p166 = scmp.eq.s32.totalorder %s24, 1
      %p167 = por %p165, %p166
      %p169 = scmp.ne.s32.totalorder %s152, %s168
      %p170 = scmp.eq.s32.totalorder %s24, 0
      %p171 = por %p169, %p170
      %p172 = scmp.le.s32.totalorder 1, %s18
      %p173 = scmp.lt.s32.totalorder %s18, 3
      %p174 = pnand %p172, %p173
      %p175 = pneg %p174
      // Predicated region
      $region9: #{tpu_custom_call.1} parent=5 // pred_check
        _
      $region10: #{tpu_custom_call.1} parent=5 // pred_check_branch
        %177 = sbr.rel (%p174) target = $region12
      $region11: #{tpu_custom_call.1} parent=5 // pred_region
        %s178 = ssub.s32 %s18, 1
        // Predicated region
        $region13: #{tpu_custom_call.1} parent=11 // pred_check
          %p179 = pneg %p65
        $region14: #{tpu_custom_call.1} parent=11 // pred_check_branch
          %181 = sbr.rel (%p179) target = $region16
        $region15: #{tpu_custom_call.1} parent=11 // pred_region
          _
        $region16: #{tpu_custom_call.1} parent=11 // pred_fallthru
          _
        // Predicated region
        $region17: #{tpu_custom_call.1} parent=11 // pred_check
          %p182 = pneg %p86
        $region18: #{tpu_custom_call.1} parent=11 // pred_check_branch
          %184 = sbr.rel (%p182) target = $region20
        $region19: #{tpu_custom_call.1} parent=11 // pred_region
          _
        $region20: #{tpu_custom_call.1} parent=11 // pred_fallthru
          _
      $region12: #{tpu_custom_call.1} parent=5 // pred_fallthru
        _
      %p185 = scmp.lt.s32.totalorder %s18, 2
      // Predicated region
      $region21: #{tpu_custom_call.1} parent=5 // pred_check
        %p186 = pneg %p185
      $region22: #{tpu_custom_call.1} parent=5 // pred_check_branch
        %188 = sbr.rel (%p186) target = $region24
      $region23: #{tpu_custom_call.1} parent=5 // pred_region
        // Predicated region
        $region25: #{tpu_custom_call.1} parent=23 // pred_check
          %p189 = pneg %p38
        $region26: #{tpu_custom_call.1} parent=23 // pred_check_branch
          %191 = sbr.rel (%p189) target = $region28
        $region27: #{tpu_custom_call.1} parent=23 // pred_region
          %p192 = scmp.lt.s32.totalorder %s18, 1
          %s193 = scalar_select %p192, %s18, 1
          %s194 = smul.addr %s193, 33
          %s195 = smul.addr %s194, 4
          %s196 = scalar_lea.vmem %s0, %s195
        $region28: #{tpu_custom_call.1} parent=23 // pred_fallthru
          _
      $region24: #{tpu_custom_call.1} parent=5 // pred_fallthru
        _
      %p197 = scmp.le.s32.totalorder 1, %s18
      %p198 = scmp.lt.s32.totalorder %s18, 3
      %p199 = pnand %p197, %p198
      %p200 = pneg %p199
      // Predicated region
      $region29: #{tpu_custom_call.1} parent=5 // pred_check
        _
      $region30: #{tpu_custom_call.1} parent=5 // pred_check_branch
        %202 = sbr.rel (%p199) target = $region32
      $region31: #{tpu_custom_call.1} parent=5 // pred_region
        %s203 = ssub.s32 %s18, 1
        %p204 = scmp.lt.s32.totalorder %s23, 1
        %s205 = scalar_select %p204, %s23, 1
        %s206 = smul.addr %s205, 33
        %s207 = smul.addr %s206, 4
        %s208 = scalar_lea.vmem %s0, %s207
        %p209 = pneg %p44
        %p210 = pneg %p41
        %p211 = pneg %p65
        %p212 = pneg %p62
        %p213 = pneg %p86
        %p214 = pneg %p83
        %p215 = pneg %p112
        %p216 = pneg %p109
        %s217 = sand.u32 %s99, 1
        %s218 = scalar_lea.sflag [#allocation4], %s217
        %s219 = sand.u32 %s99, 1
        %s220 = smul.addr %s219, 112
        %s221 = scalar_lea.vmem [#allocation3], %s220
        %p222 = pneg %p138
        %p223 = pneg %p135
        %s224 = sand.u32 %s23, 1
        %s225 = scalar_lea.sflag [#allocation6], %s224
        %s226 = sand.u32 %s125, 1
        %s227 = scalar_lea.vmem [#allocation5], %s226
        %p228 = pneg %p164
        %p229 = pneg %p161
        %s230 = sand.u32 %s23, 1
        %s231 = scalar_lea.sflag [#allocation6], %s230
        %s232 = sand.u32 %s151, 1
        %s233 = scalar_lea.vmem [#allocation7], %s232
        %p234 = scmp.lt.s32.totalorder %s23, 1
        %s235 = scalar_select %p234, %s23, 1
        %s236 = smul.addr %s235, 33
        %s237 = smul.addr %s236, 4
        %s238 = scalar_lea.vmem %s0, %s237
        %240 = vst [vmem:[#allocation2] sm:$0xff] 0.0
        %241 = vst [vmem:[#allocation2 + $0x8] sm:$0xff] 0.0
        %242 = vst [vmem:[#allocation2 + $0x10] sm:$0xff] 0.0
        %243 = vst [vmem:[#allocation2 + $0x18] sm:$0xff] 0.0
        %244 = vst [vmem:[#allocation2 + $0x20] sm:$0xff] 0.0
        %245 = vst [vmem:[#allocation2 + $0x28] sm:$0xff] 0.0
        %246 = vst [vmem:[#allocation2 + $0x30] sm:$0xff] 0.0
        %247 = vst [vmem:[#allocation2 + $0x38] sm:$0xff] 0.0
        %248 = vst [vmem:[#allocation2 + $0x40] sm:$0xff] 0.0
        %249 = vst [vmem:[#allocation2 + $0x48] sm:$0xff] 0.0
        %250 = vst [vmem:[#allocation2 + $0x50] sm:$0xff] 0.0
        %251 = vst [vmem:[#allocation2 + $0x58] sm:$0xff] 0.0
        %252 = vst [vmem:[#allocation2 + $0x60] sm:$0xff] 0.0
        %253 = vst [vmem:[#allocation2 + $0x68] sm:$0xff] 0.0
        %254 = vst [vmem:[#allocation2 + $0x70] sm:$0xff] 0.0
        %255 = vst [vmem:[#allocation2 + $0x78] sm:$0xff] 0.0
        %256 = vst [vmem:[#allocation2 + $0x80] sm:$0xff] 0.0
        %257 = vst [vmem:[#allocation2 + $0x88] sm:$0xff] 0.0
        %258 = vst [vmem:[#allocation2 + $0x90] sm:$0xff] 0.0
        %259 = vst [vmem:[#allocation2 + $0x98] sm:$0xff] 0.0
        %260 = vst [vmem:[#allocation2 + $0xa0] sm:$0xff] 0.0
        %261 = vst [vmem:[#allocation2 + $0xa8] sm:$0xff] 0.0
        %262 = vst [vmem:[#allocation2 + $0xb0] sm:$0xff] 0.0
        %263 = vst [vmem:[#allocation2 + $0xb8] sm:$0xff] 0.0
        %264 = vst [vmem:[#allocation2 + $0xc0] sm:$0xff] 0.0
        %265 = vst [vmem:[#allocation2 + $0xc8] sm:$0xff] 0.0
        %266 = vst [vmem:[#allocation2 + $0xd0] sm:$0xff] 0.0
        %267 = vst [vmem:[#allocation2 + $0xd8] sm:$0xff] 0.0
        %v268 = vld [vmem:[%s238] sm:$0xf]
        %v269 = vld [vmem:[%s238 + $0x4] sm:$0xf]
        %v270 = vld [vmem:[%s238 + $0x8] sm:$0xf]
        %v271 = vld [vmem:[%s238 + $0xc] sm:$0xf]
        %v272 = vld [vmem:[%s238 + $0x10] sm:$0xf]
        %v273 = vld [vmem:[%s238 + $0x14] sm:$0xf]
        %v274 = vld [vmem:[%s238 + $0x18] sm:$0xf]
        %v275 = vld [vmem:[%s238 + $0x1c] sm:$0xf]
        %v276 = vld [vmem:[%s238 + $0x20] sm:$0xf]
        %v277 = vld [vmem:[%s238 + $0x24] sm:$0xf]
        %v278 = vld [vmem:[%s238 + $0x28] sm:$0xf]
        %v279 = vld [vmem:[%s238 + $0x2c] sm:$0xf]
        %v280 = vld [vmem:[%s238 + $0x30] sm:$0xf]
        %v281 = vld [vmem:[%s238 + $0x34] sm:$0xf]
        %v282 = vld [vmem:[%s238 + $0x38] sm:$0xf]
        %v283 = vld [vmem:[%s238 + $0x3c] sm:$0xf]
        %v284 = vld [vmem:[%s238 + $0x40] sm:$0xf]
        %v285 = vld [vmem:[%s238 + $0x44] sm:$0xf]
        %v286 = vld [vmem:[%s238 + $0x48] sm:$0xf]
        %v287 = vld [vmem:[%s238 + $0x4c] sm:$0xf]
        %v288 = vld [vmem:[%s238 + $0x50] sm:$0xf]
        %v289 = vld [vmem:[%s238 + $0x54] sm:$0xf]
        %v290 = vld [vmem:[%s238 + $0x58] sm:$0xf]
        %v291 = vld [vmem:[%s238 + $0x5c] sm:$0xf]
        %v292 = vld [vmem:[%s238 + $0x60] sm:$0xf]
        %v293 = vld [vmem:[%s238 + $0x64] sm:$0xf]
        %v294 = vld [vmem:[%s238 + $0x68] sm:$0xf]
        %v295 = vld [vmem:[%s238 + $0x6c] sm:$0xf]
        %v296 = vld [vmem:[#allocation2] sm:$0xff]
        %v297 = vld [vmem:[#allocation2 + $0x8] sm:$0xff]
        %v298 = vld [vmem:[#allocation2 + $0x10] sm:$0xff]
        %v299 = vld [vmem:[#allocation2 + $0x18] sm:$0xff]
        %v300 = vld [vmem:[#allocation2 + $0x20] sm:$0xff]
        %v301 = vld [vmem:[#allocation2 + $0x28] sm:$0xff]
        %v302 = vld [vmem:[#allocation2 + $0x30] sm:$0xff]
        %v303 = vld [vmem:[#allocation2 + $0x38] sm:$0xff]
        %v304 = vld [vmem:[#allocation2 + $0x40] sm:$0xff]
        %v305 = vld [vmem:[#allocation2 + $0x48] sm:$0xff]
        %v306 = vld [vmem:[#allocation2 + $0x50] sm:$0xff]
        %v307 = vld [vmem:[#allocation2 + $0x58] sm:$0xff]
        %v308 = vld [vmem:[#allocation2 + $0x60] sm:$0xff]
        %v309 = vld [vmem:[#allocation2 + $0x68] sm:$0xff]
        %v310 = vld [vmem:[#allocation2 + $0x70] sm:$0xff]
        %v311 = vld [vmem:[#allocation2 + $0x78] sm:$0xff]
        %v312 = vld [vmem:[#allocation2 + $0x80] sm:$0xff]
        %v313 = vld [vmem:[#allocation2 + $0x88] sm:$0xff]
        %v314 = vld [vmem:[#allocation2 + $0x90] sm:$0xff]
        %v315 = vld [vmem:[#allocation2 + $0x98] sm:$0xff]
        %v316 = vld [vmem:[#allocation2 + $0xa0] sm:$0xff]
        %v317 = vld [vmem:[#allocation2 + $0xa8] sm:$0xff]
        %v318 = vld [vmem:[#allocation2 + $0xb0] sm:$0xff]
        %v319 = vld [vmem:[#allocation2 + $0xb8] sm:$0xff]
        %v320 = vld [vmem:[#allocation2 + $0xc0] sm:$0xff]
        %v321 = vld [vmem:[#allocation2 + $0xc8] sm:$0xff]
        %v322 = vld [vmem:[#allocation2 + $0xd0] sm:$0xff]
        %v323 = vld [vmem:[#allocation2 + $0xd8] sm:$0xff]
        %v324 = vld [vmem:[%s1] sm:$0x3]
        %v353 = vunpack.c.l.b16 %v268
        %v354 = vunpack.c.l.b16 %v269
        %v355 = vunpack.c.l.b16 %v270
        %v356 = vunpack.c.l.b16 %v271
        %v357 = vunpack.c.l.b16 %v272
        %v358 = vunpack.c.l.b16 %v273
        %v359 = vunpack.c.l.b16 %v274
        %v360 = vunpack.c.l.b16 %v275
        %v361 = vunpack.c.l.b16 %v276
        %v362 = vunpack.c.l.b16 %v277
        %v363 = vunpack.c.l.b16 %v278
        %v364 = vunpack.c.l.b16 %v279
        %v365 = vunpack.c.l.b16 %v280
        %v366 = vunpack.c.l.b16 %v281
        %v367 = vunpack.c.l.b16 %v282
        %v368 = vunpack.c.l.b16 %v283
        %v369 = vunpack.c.l.b16 %v284
        %v370 = vunpack.c.l.b16 %v285
        %v371 = vunpack.c.l.b16 %v286
        %v372 = vunpack.c.l.b16 %v287
        %v373 = vunpack.c.l.b16 %v288
        %v374 = vunpack.c.l.b16 %v289
        %v375 = vunpack.c.l.b16 %v290
        %v376 = vunpack.c.l.b16 %v291
        %v377 = vunpack.c.l.b16 %v292
        %v378 = vunpack.c.l.b16 %v293
        %v379 = vunpack.c.l.b16 %v294
        %v380 = vunpack.c.l.b16 %v295
        %v381 = vpack.c.b16 %v354, %v353
        %v382 = vpack.c.b16 %v356, %v355
        %v383 = vpack.c.b16 %v358, %v357
        %v384 = vpack.c.b16 %v360, %v359
        %v385 = vpack.c.b16 %v362, %v361
        %v386 = vpack.c.b16 %v364, %v363
        %v387 = vpack.c.b16 %v366, %v365
        %v388 = vpack.c.b16 %v368, %v367
        %v389 = vpack.c.b16 %v370, %v369
        %v390 = vpack.c.b16 %v372, %v371
        %v391 = vpack.c.b16 %v374, %v373
        %v392 = vpack.c.b16 %v376, %v375
        %v393 = vpack.c.b16 %v378, %v377
        %v394 = vpack.c.b16 %v380, %v379
        %vm395 = vcmask 31744
        %v397 = vsel %vm395, %v381, 0
        %v400 = vsel %vm395, %v382, 0
        %v403 = vsel %vm395, %v383, 0
        %v406 = vsel %vm395, %v384, 0
        %v409 = vsel %vm395, %v385, 0
        %v412 = vsel %vm395, %v386, 0
        %v415 = vsel %vm395, %v387, 0
        %v418 = vsel %vm395, %v388, 0
        %v421 = vsel %vm395, %v389, 0
        %v424 = vsel %vm395, %v390, 0
        %v427 = vsel %vm395, %v391, 0
        %v430 = vsel %vm395, %v392, 0
        %v433 = vsel %vm395, %v393, 0
        %v436 = vsel %vm395, %v394, 0
        %vm438 = vcmask 1041408
        %v440 = vsel %vm438, %v324, 0
        %442 = vmatprep.subr.bf16.mxu0 0
        %443 = vmatpush1.bf16.msra.mxu0 %v440
        %444 = vmatprep.subr.bf16.mxu0 0
        %445 = vmatpush1.bf16.msra.mxu0 0
        %446 = vmatprep.subr.bf16.mxu0 0
        %447 = vmatpush1.bf16.msra.mxu0 0
        %448 = vmatprep.subr.bf16.mxu0 0
        %449 = vmatpush1.bf16.msra.mxu0 0
        %450 = vmatprep.subr.bf16.mxu0 0
        %451 = vmatpush1.bf16.msra.mxu0 0
        %452 = vmatprep.subr.bf16.mxu0 0
        %453 = vmatpush1.bf16.msra.mxu0 0
        %454 = vmatprep.subr.bf16.mxu0 0
        %455 = vmatpush1.bf16.msra.mxu0 0
        %456 = vmatprep.subr.bf16.mxu0 0
        %457 = vmatpush1.bf16.msra.mxu0 0
        %458 = vmatprep.subr.bf16.mxu0 0
        %459 = vmatpush1.bf16.msra.mxu0 0
        %460 = vmatprep.subr.bf16.mxu0 0
        %461 = vmatpush1.bf16.msra.mxu0 0
        %462 = vmatprep.subr.bf16.mxu0 0
        %463 = vmatpush1.bf16.msra.mxu0 0
        %464 = vmatprep.subr.bf16.mxu0 0
        %465 = vmatpush1.bf16.msra.mxu0 0
        %466 = vmatprep.subr.bf16.mxu0 0
        %467 = vmatpush1.bf16.msra.mxu0 0
        %468 = vmatprep.subr.bf16.mxu0 0
        %469 = vmatpush1.bf16.msra.mxu0 0
        %470 = vmatprep.subr.bf16.mxu0 0
        %471 = vmatpush1.bf16.msra.mxu0 0
        %472 = vmatprep.subr.bf16.mxu0 0
        %473 = vmatpush1.bf16.msra.mxu0 0
        %474 = vmatprep.mubr.bf16.mxu0 0
        %475 = vmatmul.mubr.bf16.gmra.mrb[0].mxu0 %v397
        %v476 = vpop.f32.mrb[0].mxu0
        %v477 = vadd.f32 0.0, %v476
        %v478 = vpop.f32.mrb[0].mxu0
        %v479 = vpop.f32.mrb[0].mxu0
        %v480 = vadd.f32 0.0, %v479
        %v481 = vpop.f32.mrb[0].mxu0
        %482 = vmatprep.mubr.bf16.mxu0 0
        %483 = vmatmul.mubr.bf16.gmra.mrb[0].mxu0 %v400
        %v484 = vpop.f32.mrb[0].mxu0
        %v485 = vadd.f32 0.0, %v484
        %v486 = vpop.f32.mrb[0].mxu0
        %v487 = vpop.f32.mrb[0].mxu0
        %v488 = vadd.f32 0.0, %v487
        %v489 = vpop.f32.mrb[0].mxu0
        %490 = vmatprep.mubr.bf16.mxu0 0
        %491 = vmatmul.mubr.bf16.gmra.mrb[0].mxu0 %v403
        %v492 = vpop.f32.mrb[0].mxu0
        %v493 = vadd.f32 0.0, %v492
        %v494 = vpop.f32.mrb[0].mxu0
        %v495 = vpop.f32.mrb[0].mxu0
        %v496 = vadd.f32 0.0, %v495
        %v497 = vpop.f32.mrb[0].mxu0
        %498 = vmatprep.mubr.bf16.mxu0 0
        %499 = vmatmul.mubr.bf16.gmra.mrb[0].mxu0 %v406
        %v500 = vpop.f32.mrb[0].mxu0
        %v501 = vadd.f32 0.0, %v500
        %v502 = vpop.f32.mrb[0].mxu0
        %v503 = vpop.f32.mrb[0].mxu0
        %v504 = vadd.f32 0.0, %v503
        %v505 = vpop.f32.mrb[0].mxu0
        %506 = vmatprep.mubr.bf16.mxu0 0
        %507 = vmatmul.mubr.bf16.gmra.mrb[0].mxu0 %v409
        %v508 = vpop.f32.mrb[0].mxu0
        %v509 = vadd.f32 0.0, %v508
        %v510 = vpop.f32.mrb[0].mxu0
        %v511 = vpop.f32.mrb[0].mxu0
        %v512 = vadd.f32 0.0, %v511
        %v513 = vpop.f32.mrb[0].mxu0
        %514 = vmatprep.mubr.bf16.mxu0 0
        %515 = vmatmul.mubr.bf16.gmra.mrb[0].mxu0 %v412
        %v516 = vpop.f32.mrb[0].mxu0
        %v517 = vadd.f32 0.0, %v516
        %v518 = vpop.f32.mrb[0].mxu0
        %v519 = vpop.f32.mrb[0].mxu0
        %v520 = vadd.f32 0.0, %v519
        %v521 = vpop.f32.mrb[0].mxu0
        %522 = vmatprep.mubr.bf16.mxu0 0
        %523 = vmatmul.mubr.bf16.gmra.mrb[0].mxu0 %v415
        %v524 = vpop.f32.mrb[0].mxu0
        %v525 = vadd.f32 0.0, %v524
        %v526 = vpop.f32.mrb[0].mxu0
        %v527 = vpop.f32.mrb[0].mxu0
        %v528 = vadd.f32 0.0, %v527
        %v529 = vpop.f32.mrb[0].mxu0
        %530 = vmatprep.mubr.bf16.mxu0 0
        %531 = vmatmul.mubr.bf16.gmra.mrb[0].mxu0 %v418
        %v532 = vpop.f32.mrb[0].mxu0
        %v533 = vadd.f32 0.0, %v532
        %v534 = vpop.f32.mrb[0].mxu0
        %v535 = vpop.f32.mrb[0].mxu0
        %v536 = vadd.f32 0.0, %v535
        %v537 = vpop.f32.mrb[0].mxu0
        %538 = vmatprep.mubr.bf16.mxu0 0
        %539 = vmatmul.mubr.bf16.gmra.mrb[0].mxu0 %v421
        %v540 = vpop.f32.mrb[0].mxu0
        %v541 = vadd.f32 0.0, %v540
        %v542 = vpop.f32.mrb[0].mxu0
        %v543 = vpop.f32.mrb[0].mxu0
        %v544 = vadd.f32 0.0, %v543
        %v545 = vpop.f32.mrb[0].mxu0
        %546 = vmatprep.mubr.bf16.mxu0 0
        %547 = vmatmul.mubr.bf16.gmra.mrb[0].mxu0 %v424
        %v548 = vpop.f32.mrb[0].mxu0
        %v549 = vadd.f32 0.0, %v548
        %v550 = vpop.f32.mrb[0].mxu0
        %v551 = vpop.f32.mrb[0].mxu0
        %v552 = vadd.f32 0.0, %v551
        %v553 = vpop.f32.mrb[0].mxu0
        %554 = vmatprep.mubr.bf16.mxu0 0
        %555 = vmatmul.mubr.bf16.gmra.mrb[0].mxu0 %v427
        %v556 = vpop.f32.mrb[0].mxu0
        %v557 = vadd.f32 0.0, %v556
        %v558 = vpop.f32.mrb[0].mxu0
        %v559 = vpop.f32.mrb[0].mxu0
        %v560 = vadd.f32 0.0, %v559
        %v561 = vpop.f32.mrb[0].mxu0
        %562 = vmatprep.mubr.bf16.mxu0 0
        %563 = vmatmul.mubr.bf16.gmra.mrb[0].mxu0 %v430
        %v564 = vpop.f32.mrb[0].mxu0
        %v565 = vadd.f32 0.0, %v564
        %v566 = vpop.f32.mrb[0].mxu0
        %v567 = vpop.f32.mrb[0].mxu0
        %v568 = vadd.f32 0.0, %v567
        %v569 = vpop.f32.mrb[0].mxu0
        %570 = vmatprep.mubr.bf16.mxu0 0
        %571 = vmatmul.mubr.bf16.gmra.mrb[0].mxu0 %v433
        %v572 = vpop.f32.mrb[0].mxu0
        %v573 = vadd.f32 0.0, %v572
        %v574 = vpop.f32.mrb[0].mxu0
        %v575 = vpop.f32.mrb[0].mxu0
        %v576 = vadd.f32 0.0, %v575
        %v577 = vpop.f32.mrb[0].mxu0
        %578 = vmatprep.mubr.bf16.mxu0 0
        %579 = vmatmul.mubr.bf16.gmra.mrb[0].mxu0 %v436
        %v580 = vpop.f32.mrb[0].mxu0
        %v581 = vadd.f32 0.0, %v580
        %v582 = vpop.f32.mrb[0].mxu0
        %v583 = vpop.f32.mrb[0].mxu0
        %v584 = vadd.f32 0.0, %v583
        %v585 = vpop.f32.mrb[0].mxu0
        %586 = vdwg.mxu0
        %v587 = vadd.f32 %v296, %v477
        %v588 = vadd.f32 %v297, %v480
        %v589 = vadd.f32 %v298, %v485
        %v590 = vadd.f32 %v299, %v488
        %v591 = vadd.f32 %v300, %v493
        %v592 = vadd.f32 %v301, %v496
        %v593 = vadd.f32 %v302, %v501
        %v594 = vadd.f32 %v303, %v504
        %v595 = vadd.f32 %v304, %v509
        %v596 = vadd.f32 %v305, %v512
        %v597 = vadd.f32 %v306, %v517
        %v598 = vadd.f32 %v307, %v520
        %v599 = vadd.f32 %v308, %v525
        %v600 = vadd.f32 %v309, %v528
        %v601 = vadd.f32 %v310, %v533
        %v602 = vadd.f32 %v311, %v536
        %v603 = vadd.f32 %v312, %v541
        %v604 = vadd.f32 %v313, %v544
        %v605 = vadd.f32 %v314, %v549
        %v606 = vadd.f32 %v315, %v552
        %v607 = vadd.f32 %v316, %v557
        %v608 = vadd.f32 %v317, %v560
        %v609 = vadd.f32 %v318, %v565
        %v610 = vadd.f32 %v319, %v568
        %v611 = vadd.f32 %v320, %v573
        %v612 = vadd.f32 %v321, %v576
        %v613 = vadd.f32 %v322, %v581
        %v614 = vadd.f32 %v323, %v584
        %615 = vst [vmem:[#allocation2] sm:$0xff] %v587
        %616 = vst [vmem:[#allocation2 + $0x8] sm:$0xff] %v588
        %617 = vst [vmem:[#allocation2 + $0x10] sm:$0xff] %v589
        %618 = vst [vmem:[#allocation2 + $0x18] sm:$0xff] %v590
        %619 = vst [vmem:[#allocation2 + $0x20] sm:$0xff] %v591
        %620 = vst [vmem:[#allocation2 + $0x28] sm:$0xff] %v592
        %621 = vst [vmem:[#allocation2 + $0x30] sm:$0xff] %v593
        %622 = vst [vmem:[#allocation2 + $0x38] sm:$0xff] %v594
        %623 = vst [vmem:[#allocation2 + $0x40] sm:$0xff] %v595
        %624 = vst [vmem:[#allocation2 + $0x48] sm:$0xff] %v596
        %625 = vst [vmem:[#allocation2 + $0x50] sm:$0xff] %v597
        %626 = vst [vmem:[#allocation2 + $0x58] sm:$0xff] %v598
        %627 = vst [vmem:[#allocation2 + $0x60] sm:$0xff] %v599
        %628 = vst [vmem:[#allocation2 + $0x68] sm:$0xff] %v600
        %629 = vst [vmem:[#allocation2 + $0x70] sm:$0xff] %v601
        %630 = vst [vmem:[#allocation2 + $0x78] sm:$0xff] %v602
        %631 = vst [vmem:[#allocation2 + $0x80] sm:$0xff] %v603
        %632 = vst [vmem:[#allocation2 + $0x88] sm:$0xff] %v604
        %633 = vst [vmem:[#allocation2 + $0x90] sm:$0xff] %v605
        %634 = vst [vmem:[#allocation2 + $0x98] sm:$0xff] %v606
        %635 = vst [vmem:[#allocation2 + $0xa0] sm:$0xff] %v607
        %636 = vst [vmem:[#allocation2 + $0xa8] sm:$0xff] %v608
        %637 = vst [vmem:[#allocation2 + $0xb0] sm:$0xff] %v609
        %638 = vst [vmem:[#allocation2 + $0xb8] sm:$0xff] %v610
        %639 = vst [vmem:[#allocation2 + $0xc0] sm:$0xff] %v611
        %640 = vst [vmem:[#allocation2 + $0xc8] sm:$0xff] %v612
        %641 = vst [vmem:[#allocation2 + $0xd0] sm:$0xff] %v613
        %642 = vst [vmem:[#allocation2 + $0xd8] sm:$0xff] %v614
        %v643 = vld [vmem:[%s238] sm:$0xf]
        %v644 = vld [vmem:[%s238 + $0x4] sm:$0xf]
        %v645 = vld [vmem:[%s238 + $0x8] sm:$0xf]
        %v646 = vld [vmem:[%s238 + $0xc] sm:$0xf]
        %v647 = vld [vmem:[%s238 + $0x10] sm:$0xf]
        %v648 = vld [vmem:[%s238 + $0x14] sm:$0xf]
        %v649 = vld [vmem:[%s238 + $0x18] sm:$0xf]
        %v650 = vld [vmem:[%s238 + $0x1c] sm:$0xf]
        %v651 = vld [vmem:[%s238 + $0x20] sm:$0xf]
        %v652 = vld [vmem:[%s238 + $0x24] sm:$0xf]
        %v653 = vld [vmem:[%s238 + $0x28] sm:$0xf]
        %v654 = vld [vmem:[%s238 + $0x2c] sm:$0xf]
        %v655 = vld [vmem:[%s238 + $0x30] sm:$0xf]
        %v656 = vld [vmem:[%s238 + $0x34] sm:$0xf]
        %v657 = vld [vmem:[%s238 + $0x38] sm:$0xf]
        %v658 = vld [vmem:[%s238 + $0x3c] sm:$0xf]
        %v659 = vld [vmem:[%s238 + $0x40] sm:$0xf]
        %v660 = vld [vmem:[%s238 + $0x44] sm:$0xf]
        %v661 = vld [vmem:[%s238 + $0x48] sm:$0xf]
        %v662 = vld [vmem:[%s238 + $0x4c] sm:$0xf]
        %v663 = vld [vmem:[%s238 + $0x50] sm:$0xf]
        %v664 = vld [vmem:[%s238 + $0x54] sm:$0xf]
        %v665 = vld [vmem:[%s238 + $0x58] sm:$0xf]
        %v666 = vld [vmem:[%s238 + $0x5c] sm:$0xf]
        %v667 = vld [vmem:[%s238 + $0x60] sm:$0xf]
        %v668 = vld [vmem:[%s238 + $0x64] sm:$0xf]
        %v669 = vld [vmem:[%s238 + $0x68] sm:$0xf]
        %v670 = vld [vmem:[%s238 + $0x6c] sm:$0xf]
        %v671 = vld [vmem:[%s238 + $0x70] sm:$0x1]
        %v672 = vld [vmem:[#allocation2] sm:$0xff]
        %v673 = vld [vmem:[#allocation2 + $0x8] sm:$0xff]
        %v674 = vld [vmem:[#allocation2 + $0x10] sm:$0xff]
        %v675 = vld [vmem:[#allocation2 + $0x18] sm:$0xff]
        %v676 = vld [vmem:[#allocation2 + $0x20] sm:$0xff]
        %v677 = vld [vmem:[#allocation2 + $0x28] sm:$0xff]
        %v678 = vld [vmem:[#allocation2 + $0x30] sm:$0xff]
        %v679 = vld [vmem:[#allocation2 + $0x38] sm:$0xff]
        %v680 = vld [vmem:[#allocation2 + $0x40] sm:$0xff]
        %v681 = vld [vmem:[#allocation2 + $0x48] sm:$0xff]
        %v682 = vld [vmem:[#allocation2 + $0x50] sm:$0xff]
        %v683 = vld [vmem:[#allocation2 + $0x58] sm:$0xff]
        %v684 = vld [vmem:[#allocation2 + $0x60] sm:$0xff]
        %v685 = vld [vmem:[#allocation2 + $0x68] sm:$0xff]
        %v686 = vld [vmem:[#allocation2 + $0x70] sm:$0xff]
        %v687 = vld [vmem:[#allocation2 + $0x78] sm:$0xff]
        %v688 = vld [vmem:[#allocation2 + $0x80] sm:$0xff]
        %v689 = vld [vmem:[#allocation2 + $0x88] sm:$0xff]
        %v690 = vld [vmem:[#allocation2 + $0x90] sm:$0xff]
        %v691 = vld [vmem:[#allocation2 + $0x98] sm:$0xff]
        %v692 = vld [vmem:[#allocation2 + $0xa0] sm:$0xff]
        %v693 = vld [vmem:[#allocation2 + $0xa8] sm:$0xff]
        %v694 = vld [vmem:[#allocation2 + $0xb0] sm:$0xff]
        %v695 = vld [vmem:[#allocation2 + $0xb8] sm:$0xff]
        %v696 = vld [vmem:[#allocation2 + $0xc0] sm:$0xff]
        %v697 = vld [vmem:[#allocation2 + $0xc8] sm:$0xff]
        %v698 = vld [vmem:[#allocation2 + $0xd0] sm:$0xff]
        %v699 = vld [vmem:[#allocation2 + $0xd8] sm:$0xff]
        %s700 = scalar_lea.vmem %s1, 2
        %v701 = vld [vmem:[%s700] sm:$0x3]
        %v731 = vunpack.c.l.b16 %v643
        %v732 = vunpack.c.l.b16 %v644
        %v733 = vunpack.c.l.b16 %v645
        %v734 = vunpack.c.l.b16 %v646
        %v735 = vunpack.c.l.b16 %v647
        %v736 = vunpack.c.l.b16 %v648
        %v737 = vunpack.c.l.b16 %v649
        %v738 = vunpack.c.l.b16 %v650
        %v739 = vunpack.c.l.b16 %v651
        %v740 = vunpack.c.l.b16 %v652
        %v741 = vunpack.c.l.b16 %v653
        %v742 = vunpack.c.l.b16 %v654
        %v743 = vunpack.c.l.b16 %v655
        %v744 = vunpack.c.l.b16 %v656
        %v745 = vunpack.c.l.b16 %v657
        %v746 = vunpack.c.l.b16 %v658
        %v747 = vunpack.c.l.b16 %v659
        %v748 = vunpack.c.l.b16 %v660
        %v749 = vunpack.c.l.b16 %v661
        %v750 = vunpack.c.l.b16 %v662
        %v751 = vunpack.c.l.b16 %v663
        %v752 = vunpack.c.l.b16 %v664
        %v753 = vunpack.c.l.b16 %v665
        %v754 = vunpack.c.l.b16 %v666
        %v755 = vunpack.c.l.b16 %v667
        %v756 = vunpack.c.l.b16 %v668
        %v757 = vunpack.c.l.b16 %v669
        %v758 = vunpack.c.l.b16 %v670
        %v759 = vunpack.c.l.b16 %v671
        %v760 = vpack.c.b16 %v732, %v731
        %v761 = vpack.c.b16 %v734, %v733
        %v762 = vpack.c.b16 %v736, %v735
        %v763 = vpack.c.b16 %v738, %v737
        %v764 = vpack.c.b16 %v740, %v739
        %v765 = vpack.c.b16 %v742, %v741
        %v766 = vpack.c.b16 %v744, %v743
        %v767 = vpack.c.b16 %v746, %v745
        %v768 = vpack.c.b16 %v748, %v747
        %v769 = vpack.c.b16 %v750, %v749
        %v770 = vpack.c.b16 %v752, %v751
        %v771 = vpack.c.b16 %v754, %v753
        %v772 = vpack.c.b16 %v756, %v755
        %v773 = vpack.c.b16 %v758, %v757
        %v774 = vpack.c.b16 %v759, %v759
        %vm775 = vsmask.f32 7424
        %v777 = vshrl.u32 %v760, 16
        %v779 = vshll.u32 %v760, 16
        %v781 = vrot.slane %v779, 1
        %v782 = vor.u32 %v777, %v781
        %v784 = vshll.u32 %v761, 16
        %v786 = vrot.slane %v784, 1
        %v787 = vsel %vm775, %v782, %v786
        %v788 = vshrl.u32 %v761, 16
        %v790 = vor.u32 %v788, %v786
        %v792 = vshll.u32 %v762, 16
        %v794 = vrot.slane %v792, 1
        %v795 = vsel %vm775, %v790, %v794
        %v796 = vshrl.u32 %v762, 16
        %v798 = vor.u32 %v796, %v794
        %v800 = vshll.u32 %v763, 16
        %v802 = vrot.slane %v800, 1
        %v803 = vsel %vm775, %v798, %v802
        %v804 = vshrl.u32 %v763, 16
        %v806 = vor.u32 %v804, %v802
        %v808 = vshll.u32 %v764, 16
        %v810 = vrot.slane %v808, 1
        %v811 = vsel %vm775, %v806, %v810
        %v812 = vshrl.u32 %v764, 16
        %v814 = vor.u32 %v812, %v810
        %v816 = vshll.u32 %v765, 16
        %v818 = vrot.slane %v816, 1
        %v819 = vsel %vm775, %v814, %v818
        %v820 = vshrl.u32 %v765, 16
        %v822 = vor.u32 %v820, %v818
        %v824 = vshll.u32 %v766, 16
        %v826 = vrot.slane %v824, 1
        %v827 = vsel %vm775, %v822, %v826
        %v828 = vshrl.u32 %v766, 16
        %v830 = vor.u32 %v828, %v826
        %v832 = vshll.u32 %v767, 16
        %v834 = vrot.slane %v832, 1
        %v835 = vsel %vm775, %v830, %v834
        %v836 = vshrl.u32 %v767, 16
        %v838 = vor.u32 %v836, %v834
        %v840 = vshll.u32 %v768, 16
        %v842 = vrot.slane %v840, 1
        %v843 = vsel %vm775, %v838, %v842
        %v844 = vshrl.u32 %v768, 16
        %v846 = vor.u32 %v844, %v842
        %v848 = vshll.u32 %v769, 16
        %v850 = vrot.slane %v848, 1
        %v851 = vsel %vm775, %v846, %v850
        %v852 = vshrl.u32 %v769, 16
        %v854 = vor.u32 %v852, %v850
        %v856 = vshll.u32 %v770, 16
        %v858 = vrot.slane %v856, 1
        %v859 = vsel %vm775, %v854, %v858
        %v860 = vshrl.u32 %v770, 16
        %v862 = vor.u32 %v860, %v858
        %v864 = vshll.u32 %v771, 16
        %v866 = vrot.slane %v864, 1
        %v867 = vsel %vm775, %v862, %v866
        %v868 = vshrl.u32 %v771, 16
        %v870 = vor.u32 %v868, %v866
        %v872 = vshll.u32 %v772, 16
        %v874 = vrot.slane %v872, 1
        %v875 = vsel %vm775, %v870, %v874
        %v876 = vshrl.u32 %v772, 16
        %v878 = vor.u32 %v876, %v874
        %v880 = vshll.u32 %v773, 16
        %v882 = vrot.slane %v880, 1
        %v883 = vsel %vm775, %v878, %v882
        %v884 = vshrl.u32 %v773, 16
        %v886 = vor.u32 %v884, %v882
        %v888 = vshll.u32 %v774, 16
        %v890 = vrot.slane %v888, 1
        %v891 = vsel %vm775, %v886, %v890
        %v893 = vsel %vm395, %v787, 0
        %v896 = vsel %vm395, %v795, 0
        %v899 = vsel %vm395, %v803, 0
        %v902 = vsel %vm395, %v811, 0
        %v905 = vsel %vm395, %v819, 0
        %v908 = vsel %vm395, %v827, 0
        %v911 = vsel %vm395, %v835, 0
        %v914 = vsel %vm395, %v843, 0
        %v917 = vsel %vm395, %v851, 0
        %v920 = vsel %vm395, %v859, 0
        %v923 = vsel %vm395, %v867, 0
        %v926 = vsel %vm395, %v875, 0
        %v929 = vsel %vm395, %v883, 0
        %v932 = vsel %vm395, %v891, 0
        %v935 = vsel %vm438, %v701, 0
        %937 = vmatprep.subr.bf16.mxu0 0
        %938 = vmatpush1.bf16.msra.mxu0 %v935
        %939 = vmatprep.subr.bf16.mxu0 0
        %940 = vmatpush1.bf16.msra.mxu0 0
        %941 = vmatprep.subr.bf16.mxu0 0
        %942 = vmatpush1.bf16.msra.mxu0 0
        %943 = vmatprep.subr.bf16.mxu0 0
        %944 = vmatpush1.bf16.msra.mxu0 0
        %945 = vmatprep.subr.bf16.mxu0 0
        %946 = vmatpush1.bf16.msra.mxu0 0
        %947 = vmatprep.subr.bf16.mxu0 0
        %948 = vmatpush1.bf16.msra.mxu0 0
        %949 = vmatprep.subr.bf16.mxu0 0
        %950 = vmatpush1.bf16.msra.mxu0 0
        %951 = vmatprep.subr.bf16.mxu0 0
        %952 = vmatpush1.bf16.msra.mxu0 0
        %953 = vmatprep.subr.bf16.mxu0 0
        %954 = vmatpush1.bf16.msra.mxu0 0
        %955 = vmatprep.subr.bf16.mxu0 0
        %956 = vmatpush1.bf16.msra.mxu0 0
        %957 = vmatprep.subr.bf16.mxu0 0
        %958 = vmatpush1.bf16.msra.mxu0 0
        %959 = vmatprep.subr.bf16.mxu0 0
        %960 = vmatpush1.bf16.msra.mxu0 0
        %961 = vmatprep.subr.bf16.mxu0 0
        %962 = vmatpush1.bf16.msra.mxu0 0
        %963 = vmatprep.subr.bf16.mxu0 0
        %964 = vmatpush1.bf16.msra.mxu0 0
        %965 = vmatprep.subr.bf16.mxu0 0
        %966 = vmatpush1.bf16.msra.mxu0 0
        %967 = vmatprep.subr.bf16.mxu0 0
        %968 = vmatpush1.bf16.msra.mxu0 0
        %969 = vmatprep.mubr.bf16.mxu0 0
        %970 = vmatmul.mubr.bf16.gmra.mrb[0].mxu0 %v893
        %v971 = vpop.f32.mrb[0].mxu0
        %v972 = vadd.f32 0.0, %v971
        %v973 = vpop.f32.mrb[0].mxu0
        %v974 = vpop.f32.mrb[0].mxu0
        %v975 = vadd.f32 0.0, %v974
        %v976 = vpop.f32.mrb[0].mxu0
        %977 = vmatprep.mubr.bf16.mxu0 0
        %978 = vmatmul.mubr.bf16.gmra.mrb[0].mxu0 %v896
        %v979 = vpop.f32.mrb[0].mxu0
        %v980 = vadd.f32 0.0, %v979
        %v981 = vpop.f32.mrb[0].mxu0
        %v982 = vpop.f32.mrb[0].mxu0
        %v983 = vadd.f32 0.0, %v982
        %v984 = vpop.f32.mrb[0].mxu0
        %985 = vmatprep.mubr.bf16.mxu0 0
        %986 = vmatmul.mubr.bf16.gmra.mrb[0].mxu0 %v899
        %v987 = vpop.f32.mrb[0].mxu0
        %v988 = vadd.f32 0.0, %v987
        %v989 = vpop.f32.mrb[0].mxu0
        %v990 = vpop.f32.mrb[0].mxu0
        %v991 = vadd.f32 0.0, %v990
        %v992 = vpop.f32.mrb[0].mxu0
        %993 = vmatprep.mubr.bf16.mxu0 0
        %994 = vmatmul.mubr.bf16.gmra.mrb[0].mxu0 %v902
        %v995 = vpop.f32.mrb[0].mxu0
        %v996 = vadd.f32 0.0, %v995
        %v997 = vpop.f32.mrb[0].mxu0
        %v998 = vpop.f32.mrb[0].mxu0
        %v999 = vadd.f32 0.0, %v998
        %v1000 = vpop.f32.mrb[0].mxu0
        %1001 = vmatprep.mubr.bf16.mxu0 0
        %1002 = vmatmul.mubr.bf16.gmra.mrb[0].mxu0 %v905
        %v1003 = vpop.f32.mrb[0].mxu0
        %v1004 = vadd.f32 0.0, %v1003
        %v1005 = vpop.f32.mrb[0].mxu0
        %v1006 = vpop.f32.mrb[0].mxu0
        %v1007 = vadd.f32 0.0, %v1006
        %v1008 = vpop.f32.mrb[0].mxu0
        %1009 = vmatprep.mubr.bf16.mxu0 0
        %1010 = vmatmul.mubr.bf16.gmra.mrb[0].mxu0 %v908
        %v1011 = vpop.f32.mrb[0].mxu0
        %v1012 = vadd.f32 0.0, %v1011
        %v1013 = vpop.f32.mrb[0].mxu0
        %v1014 = vpop.f32.mrb[0].mxu0
        %v1015 = vadd.f32 0.0, %v1014
        %v1016 = vpop.f32.mrb[0].mxu0
        %1017 = vmatprep.mubr.bf16.mxu0 0
        %1018 = vmatmul.mubr.bf16.gmra.mrb[0].mxu0 %v911
        %v1019 = vpop.f32.mrb[0].mxu0
        %v1020 = vadd.f32 0.0, %v1019
        %v1021 = vpop.f32.mrb[0].mxu0
        %v1022 = vpop.f32.mrb[0].mxu0
        %v1023 = vadd.f32 0.0, %v1022
        %v1024 = vpop.f32.mrb[0].mxu0
        %1025 = vmatprep.mubr.bf16.mxu0 0
        %1026 = vmatmul.mubr.bf16.gmra.mrb[0].mxu0 %v914
        %v1027 = vpop.f32.mrb[0].mxu0
        %v1028 = vadd.f32 0.0, %v1027
        %v1029 = vpop.f32.mrb[0].mxu0
        %v1030 = vpop.f32.mrb[0].mxu0
        %v1031 = vadd.f32 0.0, %v1030
        %v1032 = vpop.f32.mrb[0].mxu0
        %1033 = vmatprep.mubr.bf16.mxu0 0
        %1034 = vmatmul.mubr.bf16.gmra.mrb[0].mxu0 %v917
        %v1035 = vpop.f32.mrb[0].mxu0
        %v1036 = vadd.f32 0.0, %v1035
        %v1037 = vpop.f32.mrb[0].mxu0
        %v1038 = vpop.f32.mrb[0].mxu0
        %v1039 = vadd.f32 0.0, %v1038
        %v1040 = vpop.f32.mrb[0].mxu0
        %1041 = vmatprep.mubr.bf16.mxu0 0
        %1042 = vmatmul.mubr.bf16.gmra.mrb[0].mxu0 %v920
        %v1043 = vpop.f32.mrb[0].mxu0
        %v1044 = vadd.f32 0.0, %v1043
        %v1045 = vpop.f32.mrb[0].mxu0
        %v1046 = vpop.f32.mrb[0].mxu0
        %v1047 = vadd.f32 0.0, %v1046
        %v1048 = vpop.f32.mrb[0].mxu0
        %1049 = vmatprep.mubr.bf16.mxu0 0
        %1050 = vmatmul.mubr.bf16.gmra.mrb[0].mxu0 %v923
        %v1051 = vpop.f32.mrb[0].mxu0
        %v1052 = vadd.f32 0.0, %v1051
        %v1053 = vpop.f32.mrb[0].mxu0
        %v1054 = vpop.f32.mrb[0].mxu0
        %v1055 = vadd.f32 0.0, %v1054
        %v1056 = vpop.f32.mrb[0].mxu0
        %1057 = vmatprep.mubr.bf16.mxu0 0
        %1058 = vmatmul.mubr.bf16.gmra.mrb[0].mxu0 %v926
        %v1059 = vpop.f32.mrb[0].mxu0
        %v1060 = vadd.f32 0.0, %v1059
        %v1061 = vpop.f32.mrb[0].mxu0
        %v1062 = vpop.f32.mrb[0].mxu0
        %v1063 = vadd.f32 0.0, %v1062
        %v1064 = vpop.f32.mrb[0].mxu0
        %1065 = vmatprep.mubr.bf16.mxu0 0
        %1066 = vmatmul.mubr.bf16.gmra.mrb[0].mxu0 %v929
        %v1067 = vpop.f32.mrb[0].mxu0
        %v1068 = vadd.f32 0.0, %v1067
        %v1069 = vpop.f32.mrb[0].mxu0
        %v1070 = vpop.f32.mrb[0].mxu0
        %v1071 = vadd.f32 0.0, %v1070
        %v1072 = vpop.f32.mrb[0].mxu0
        %1073 = vmatprep.mubr.bf16.mxu0 0
        %1074 = vmatmul.mubr.bf16.gmra.mrb[0].mxu0 %v932
        %v1075 = vpop.f32.mrb[0].mxu0
        %v1076 = vadd.f32 0.0, %v1075
        %v1077 = vpop.f32.mrb[0].mxu0
        %v1078 = vpop.f32.mrb[0].mxu0
        %v1079 = vadd.f32 0.0, %v1078
        %v1080 = vpop.f32.mrb[0].mxu0
        %1081 = vdwg.mxu0
        %v1082 = vadd.f32 %v672, %v972
        %v1083 = vadd.f32 %v673, %v975
        %v1084 = vadd.f32 %v674, %v980
        %v1085 = vadd.f32 %v675, %v983
        %v1086 = vadd.f32 %v676, %v988
        %v1087 = vadd.f32 %v677, %v991
        %v1088 = vadd.f32 %v678, %v996
        %v1089 = vadd.f32 %v679, %v999
        %v1090 = vadd.f32 %v680, %v1004
        %v1091 = vadd.f32 %v681, %v1007
        %v1092 = vadd.f32 %v682, %v1012
        %v1093 = vadd.f32 %v683, %v1015
        %v1094 = vadd.f32 %v684, %v1020
        %v1095 = vadd.f32 %v685, %v1023
        %v1096 = vadd.f32 %v686, %v1028
        %v1097 = vadd.f32 %v687, %v1031
        %v1098 = vadd.f32 %v688, %v1036
        %v1099 = vadd.f32 %v689, %v1039
        %v1100 = vadd.f32 %v690, %v1044
        %v1101 = vadd.f32 %v691, %v1047
        %v1102 = vadd.f32 %v692, %v1052
        %v1103 = vadd.f32 %v693, %v1055
        %v1104 = vadd.f32 %v694, %v1060
        %v1105 = vadd.f32 %v695, %v1063
        %v1106 = vadd.f32 %v696, %v1068
        %v1107 = vadd.f32 %v697, %v1071
        %v1108 = vadd.f32 %v698, %v1076
        %v1109 = vadd.f32 %v699, %v1079
        %1110 = vst [vmem:[#allocation2] sm:$0xff] %v1082
        %1111 = vst [vmem:[#allocation2 + $0x8] sm:$0xff] %v1083
        %1112 = vst [vmem:[#allocation2 + $0x10] sm:$0xff] %v1084
        %1113 = vst [vmem:[#allocation2 + $0x18] sm:$0xff] %v1085
        %1114 = vst [vmem:[#allocation2 + $0x20] sm:$0xff] %v1086
        %1115 = vst [vmem:[#allocation2 + $0x28] sm:$0xff] %v1087
        %1116 = vst [vmem:[#allocation2 + $0x30] sm:$0xff] %v1088
        %1117 = vst [vmem:[#allocation2 + $0x38] sm:$0xff] %v1089
        %1118 = vst [vmem:[#allocation2 + $0x40] sm:$0xff] %v1090
        %1119 = vst [vmem:[#allocation2 + $0x48] sm:$0xff] %v1091
        %1120 = vst [vmem:[#allocation2 + $0x50] sm:$0xff] %v1092
        %1121 = vst [vmem:[#allocation2 + $0x58] sm:$0xff] %v1093
        %1122 = vst [vmem:[#allocation2 + $0x60] sm:$0xff] %v1094
        %1123 = vst [vmem:[#allocation2 + $0x68] sm:$0xff] %v1095
        %1124 = vst [vmem:[#allocation2 + $0x70] sm:$0xff] %v1096
        %1125 = vst [vmem:[#allocation2 + $0x78] sm:$0xff] %v1097
        %1126 = vst [vmem:[#allocation2 + $0x80] sm:$0xff] %v1098
        %1127 = vst [vmem:[#allocation2 + $0x88] sm:$0xff] %v1099
        %1128 = vst [vmem:[#allocation2 + $0x90] sm:$0xff] %v1100
        %1129 = vst [vmem:[#allocation2 + $0x98] sm:$0xff] %v1101
        %1130 = vst [vmem:[#allocation2 + $0xa0] sm:$0xff] %v1102
        %1131 = vst [vmem:[#allocation2 + $0xa8] sm:$0xff] %v1103
        %1132 = vst [vmem:[#allocation2 + $0xb0] sm:$0xff] %v1104
        %1133 = vst [vmem:[#allocation2 + $0xb8] sm:$0xff] %v1105
        %1134 = vst [vmem:[#allocation2 + $0xc0] sm:$0xff] %v1106
        %1135 = vst [vmem:[#allocation2 + $0xc8] sm:$0xff] %v1107
        %1136 = vst [vmem:[#allocation2 + $0xd0] sm:$0xff] %v1108
        %1137 = vst [vmem:[#allocation2 + $0xd8] sm:$0xff] %v1109
        %v1138 = vld [vmem:[%s238] sm:$0xe]
        %v1139 = vld [vmem:[%s238 + $0x4] sm:$0xf]
        %v1140 = vld [vmem:[%s238 + $0x8] sm:$0xf]
        %v1141 = vld [vmem:[%s238 + $0xc] sm:$0xf]
        %v1142 = vld [vmem:[%s238 + $0x10] sm:$0xf]
        %v1143 = vld [vmem:[%s238 + $0x14] sm:$0xf]
        %v1144 = vld [vmem:[%s238 + $0x18] sm:$0xf]
        %v1145 = vld [vmem:[%s238 + $0x1c] sm:$0xf]
        %v1146 = vld [vmem:[%s238 + $0x20] sm:$0xf]
        %v1147 = vld [vmem:[%s238 + $0x24] sm:$0xf]
        %v1148 = vld [vmem:[%s238 + $0x28] sm:$0xf]
        %v1149 = vld [vmem:[%s238 + $0x2c] sm:$0xf]
        %v1150 = vld [vmem:[%s238 + $0x30] sm:$0xf]
        %v1151 = vld [vmem:[%s238 + $0x34] sm:$0xf]
        %v1152 = vld [vmem:[%s238 + $0x38] sm:$0xf]
        %v1153 = vld [vmem:[%s238 + $0x3c] sm:$0xf]
        %v1154 = vld [vmem:[%s238 + $0x40] sm:$0xf]
        %v1155 = vld [vmem:[%s238 + $0x44] sm:$0xf]
        %v1156 = vld [vmem:[%s238 + $0x48] sm:$0xf]
        %v1157 = vld [vmem:[%s238 + $0x4c] sm:$0xf]
        %v1158 = vld [vmem:[%s238 + $0x50] sm:$0xf]
        %v1159 = vld [vmem:[%s238 + $0x54] sm:$0xf]
        %v1160 = vld [vmem:[%s238 + $0x58] sm:$0xf]
        %v1161 = vld [vmem:[%s238 + $0x5c] sm:$0xf]
        %v1162 = vld [vmem:[%s238 + $0x60] sm:$0xf]
        %v1163 = vld [vmem:[%s238 + $0x64] sm:$0xf]
        %v1164 = vld [vmem:[%s238 + $0x68] sm:$0xf]
        %v1165 = vld [vmem:[%s238 + $0x6c] sm:$0xf]
        %v1166 = vld [vmem:[%s238 + $0x70] sm:$0x1]
        %v1167 = vld [vmem:[#allocation2] sm:$0xff]
        %v1168 = vld [vmem:[#allocation2 + $0x8] sm:$0xff]
        %v1169 = vld [vmem:[#allocation2 + $0x10] sm:$0xff]
        %v1170 = vld [vmem:[#allocation2 + $0x18] sm:$0xff]
        %v1171 = vld [vmem:[#allocation2 + $0x20] sm:$0xff]
        %v1172 = vld [vmem:[#allocation2 + $0x28] sm:$0xff]
        %v1173 = vld [vmem:[#allocation2 + $0x30] sm:$0xff]
        %v1174 = vld [vmem:[#allocation2 + $0x38] sm:$0xff]
        %v1175 = vld [vmem:[#allocation2 + $0x40] sm:$0xff]
        %v1176 = vld [vmem:[#allocation2 + $0x48] sm:$0xff]
        %v1177 = vld [vmem:[#allocation2 + $0x50] sm:$0xff]
        %v1178 = vld [vmem:[#allocation2 + $0x58] sm:$0xff]
        %v1179 = vld [vmem:[#allocation2 + $0x60] sm:$0xff]
        %v1180 = vld [vmem:[#allocation2 + $0x68] sm:$0xff]
        %v1181 = vld [vmem:[#allocation2 + $0x70] sm:$0xff]
        %v1182 = vld [vmem:[#allocation2 + $0x78] sm:$0xff]
        %v1183 = vld [vmem:[#allocation2 + $0x80] sm:$0xff]
        %v1184 = vld [vmem:[#allocation2 + $0x88] sm:$0xff]
        %v1185 = vld [vmem:[#allocation2 + $0x90] sm:$0xff]
        %v1186 = vld [vmem:[#allocation2 + $0x98] sm:$0xff]
        %v1187 = vld [vmem:[#allocation2 + $0xa0] sm:$0xff]
        %v1188 = vld [vmem:[#allocation2 + $0xa8] sm:$0xff]
        %v1189 = vld [vmem:[#allocation2 + $0xb0] sm:$0xff]
        %v1190 = vld [vmem:[#allocation2 + $0xb8] sm:$0xff]
        %v1191 = vld [vmem:[#allocation2 + $0xc0] sm:$0xff]
        %v1192 = vld [vmem:[#allocation2 + $0xc8] sm:$0xff]
        %v1193 = vld [vmem:[#allocation2 + $0xd0] sm:$0xff]
        %v1194 = vld [vmem:[#allocation2 + $0xd8] sm:$0xff]
        %s1195 = scalar_lea.vmem %s1, 4
        %v1196 = vld [vmem:[%s1195] sm:$0x3]
        %v1226 = vunpack.c.l.b16 %v1138
        %v1227 = vunpack.c.l.b16 %v1139
        %v1228 = vunpack.c.l.b16 %v1140
        %v1229 = vunpack.c.l.b16 %v1141
        %v1230 = vunpack.c.l.b16 %v1142
        %v1231 = vunpack.c.l.b16 %v1143
        %v1232 = vunpack.c.l.b16 %v1144
        %v1233 = vunpack.c.l.b16 %v1145
        %v1234 = vunpack.c.l.b16 %v1146
        %v1235 = vunpack.c.l.b16 %v1147
        %v1236 = vunpack.c.l.b16 %v1148
        %v1237 = vunpack.c.l.b16 %v1149
        %v1238 = vunpack.c.l.b16 %v1150
        %v1239 = vunpack.c.l.b16 %v1151
        %v1240 = vunpack.c.l.b16 %v1152
        %v1241 = vunpack.c.l.b16 %v1153
        %v1242 = vunpack.c.l.b16 %v1154
        %v1243 = vunpack.c.l.b16 %v1155
        %v1244 = vunpack.c.l.b16 %v1156
        %v1245 = vunpack.c.l.b16 %v1157
        %v1246 = vunpack.c.l.b16 %v1158
        %v1247 = vunpack.c.l.b16 %v1159
        %v1248 = vunpack.c.l.b16 %v1160
        %v1249 = vunpack.c.l.b16 %v1161
        %v1250 = vunpack.c.l.b16 %v1162
        %v1251 = vunpack.c.l.b16 %v1163
        %v1252 = vunpack.c.l.b16 %v1164
        %v1253 = vunpack.c.l.b16 %v1165
        %v1254 = vunpack.c.l.b16 %v1166
        %v1255 = vpack.c.b16 %v1227, %v1226
        %v1256 = vpack.c.b16 %v1229, %v1228
        %v1257 = vpack.c.b16 %v1231, %v1230
        %v1258 = vpack.c.b16 %v1233, %v1232
        %v1259 = vpack.c.b16 %v1235, %v1234
        %v1260 = vpack.c.b16 %v1237, %v1236
        %v1261 = vpack.c.b16 %v1239, %v1238
        %v1262 = vpack.c.b16 %v1241, %v1240
        %v1263 = vpack.c.b16 %v1243, %v1242
        %v1264 = vpack.c.b16 %v1245, %v1244
        %v1265 = vpack.c.b16 %v1247, %v1246
        %v1266 = vpack.c.b16 %v1249, %v1248
        %v1267 = vpack.c.b16 %v1251, %v1250
        %v1268 = vpack.c.b16 %v1253, %v1252
        %v1269 = vpack.c.b16 %v1254, %v1254
        %vm1270 = vcmask 1046528
        %v1271 = vrot.slane %v1255, 1
        %v1272 = vrot.slane %v1256, 1
        %v1273 = vsel %vm1270, %v1271, %v1272
        %v1274 = vrot.slane %v1257, 1
        %v1275 = vsel %vm1270, %v1272, %v1274
        %v1276 = vrot.slane %v1258, 1
        %v1277 = vsel %vm1270, %v1274, %v1276
        %v1278 = vrot.slane %v1259, 1
        %v1279 = vsel %vm1270, %v1276, %v1278
        %v1280 = vrot.slane %v1260, 1
        %v1281 = vsel %vm1270, %v1278, %v1280
        %v1282 = vrot.slane %v1261, 1
        %v1283 = vsel %vm1270, %v1280, %v1282
        %v1284 = vrot.slane %v1262, 1
        %v1285 = vsel %vm1270, %v1282, %v1284
        %v1286 = vrot.slane %v1263, 1
        %v1287 = vsel %vm1270, %v1284, %v1286
        %v1288 = vrot.slane %v1264, 1
        %v1289 = vsel %vm1270, %v1286, %v1288
        %v1290 = vrot.slane %v1265, 1
        %v1291 = vsel %vm1270, %v1288, %v1290
        %v1292 = vrot.slane %v1266, 1
        %v1293 = vsel %vm1270, %v1290, %v1292
        %v1294 = vrot.slane %v1267, 1
        %v1295 = vsel %vm1270, %v1292, %v1294
        %v1296 = vrot.slane %v1268, 1
        %v1297 = vsel %vm1270, %v1294, %v1296
        %v1298 = vrot.slane %v1269, 1
        %v1299 = vsel %vm1270, %v1296, %v1298
        %v1301 = vsel %vm395, %v1273, 0
        %v1304 = vsel %vm395, %v1275, 0
        %v1307 = vsel %vm395, %v1277, 0
        %v1310 = vsel %vm395, %v1279, 0
        %v1313 = vsel %vm395, %v1281, 0
        %v1316 = vsel %vm395, %v1283, 0
        %v1319 = vsel %vm395, %v1285, 0
        %v1322 = vsel %vm395, %v1287, 0
        %v1325 = vsel %vm395, %v1289, 0
        %v1328 = vsel %vm395, %v1291, 0
        %v1331 = vsel %vm395, %v1293, 0
        %v1334 = vsel %vm395, %v1295, 0
        %v1337 = vsel %vm395, %v1297, 0
        %v1340 = vsel %vm395, %v1299, 0
        %v1343 = vsel %vm438, %v1196, 0
        %1345 = vmatprep.subr.bf16.mxu0 0
        %1346 = vmatpush1.bf16.msra.mxu0 %v1343
        %1347 = vmatprep.subr.bf16.mxu0 0
        %1348 = vmatpush1.bf16.msra.mxu0 0
        %1349 = vmatprep.subr.bf16.mxu0 0
        %1350 = vmatpush1.bf16.msra.mxu0 0
        %1351 = vmatprep.subr.bf16.mxu0 0
        %1352 = vmatpush1.bf16.msra.mxu0 0
        %1353 = vmatprep.subr.bf16.mxu0 0
        %1354 = vmatpush1.bf16.msra.mxu0 0
        %1355 = vmatprep.subr.bf16.mxu0 0
        %1356 = vmatpush1.bf16.msra.mxu0 0
        %1357 = vmatprep.subr.bf16.mxu0 0
        %1358 = vmatpush1.bf16.msra.mxu0 0
        %1359 = vmatprep.subr.bf16.mxu0 0
        %1360 = vmatpush1.bf16.msra.mxu0 0
        %1361 = vmatprep.subr.bf16.mxu0 0
        %1362 = vmatpush1.bf16.msra.mxu0 0
        %1363 = vmatprep.subr.bf16.mxu0 0
        %1364 = vmatpush1.bf16.msra.mxu0 0
        %1365 = vmatprep.subr.bf16.mxu0 0
        %1366 = vmatpush1.bf16.msra.mxu0 0
        %1367 = vmatprep.subr.bf16.mxu0 0
        %1368 = vmatpush1.bf16.msra.mxu0 0
        %1369 = vmatprep.subr.bf16.mxu0 0
        %1370 = vmatpush1.bf16.msra.mxu0 0
        %1371 = vmatprep.subr.bf16.mxu0 0
        %1372 = vmatpush1.bf16.msra.mxu0 0
        %1373 = vmatprep.subr.bf16.mxu0 0
        %1374 = vmatpush1.bf16.msra.mxu0 0
        %1375 = vmatprep.subr.bf16.mxu0 0
        %1376 = vmatpush1.bf16.msra.mxu0 0
        %1377 = vmatprep.mubr.bf16.mxu0 0
        %1378 = vmatmul.mubr.bf16.gmra.mrb[0].mxu0 %v1301
        %v1379 = vpop.f32.mrb[0].mxu0
        %v1380 = vadd.f32 0.0, %v1379
        %v1381 = vpop.f32.mrb[0].mxu0
        %v1382 = vpop.f32.mrb[0].mxu0
        %v1383 = vadd.f32 0.0, %v1382
        %v1384 = vpop.f32.mrb[0].mxu0
        %1385 = vmatprep.mubr.bf16.mxu0 0
        %1386 = vmatmul.mubr.bf16.gmra.mrb[0].mxu0 %v1304
        %v1387 = vpop.f32.mrb[0].mxu0
        %v1388 = vadd.f32 0.0, %v1387
        %v1389 = vpop.f32.mrb[0].mxu0
        %v1390 = vpop.f32.mrb[0].mxu0
        %v1391 = vadd.f32 0.0, %v1390
        %v1392 = vpop.f32.mrb[0].mxu0
        %1393 = vmatprep.mubr.bf16.mxu0 0
        %1394 = vmatmul.mubr.bf16.gmra.mrb[0].mxu0 %v1307
        %v1395 = vpop.f32.mrb[0].mxu0
        %v1396 = vadd.f32 0.0, %v1395
        %v1397 = vpop.f32.mrb[0].mxu0
        %v1398 = vpop.f32.mrb[0].mxu0
        %v1399 = vadd.f32 0.0, %v1398
        %v1400 = vpop.f32.mrb[0].mxu0
        %1401 = vmatprep.mubr.bf16.mxu0 0
        %1402 = vmatmul.mubr.bf16.gmra.mrb[0].mxu0 %v1310
        %v1403 = vpop.f32.mrb[0].mxu0
        %v1404 = vadd.f32 0.0, %v1403
        %v1405 = vpop.f32.mrb[0].mxu0
        %v1406 = vpop.f32.mrb[0].mxu0
        %v1407 = vadd.f32 0.0, %v1406
        %v1408 = vpop.f32.mrb[0].mxu0
        %1409 = vmatprep.mubr.bf16.mxu0 0
        %1410 = vmatmul.mubr.bf16.gmra.mrb[0].mxu0 %v1313
        %v1411 = vpop.f32.mrb[0].mxu0
        %v1412 = vadd.f32 0.0, %v1411
        %v1413 = vpop.f32.mrb[0].mxu0
        %v1414 = vpop.f32.mrb[0].mxu0
        %v1415 = vadd.f32 0.0, %v1414
        %v1416 = vpop.f32.mrb[0].mxu0
        %1417 = vmatprep.mubr.bf16.mxu0 0
        %1418 = vmatmul.mubr.bf16.gmra.mrb[0].mxu0 %v1316
        %v1419 = vpop.f32.mrb[0].mxu0
        %v1420 = vadd.f32 0.0, %v1419
        %v1421 = vpop.f32.mrb[0].mxu0
        %v1422 = vpop.f32.mrb[0].mxu0
        %v1423 = vadd.f32 0.0, %v1422
        %v1424 = vpop.f32.mrb[0].mxu0
        %1425 = vmatprep.mubr.bf16.mxu0 0
        %1426 = vmatmul.mubr.bf16.gmra.mrb[0].mxu0 %v1319
        %v1427 = vpop.f32.mrb[0].mxu0
        %v1428 = vadd.f32 0.0, %v1427
        %v1429 = vpop.f32.mrb[0].mxu0
        %v1430 = vpop.f32.mrb[0].mxu0
        %v1431 = vadd.f32 0.0, %v1430
        %v1432 = vpop.f32.mrb[0].mxu0
        %1433 = vmatprep.mubr.bf16.mxu0 0
        %1434 = vmatmul.mubr.bf16.gmra.mrb[0].mxu0 %v1322
        %v1435 = vpop.f32.mrb[0].mxu0
        %v1436 = vadd.f32 0.0, %v1435
        %v1437 = vpop.f32.mrb[0].mxu0
        %v1438 = vpop.f32.mrb[0].mxu0
        %v1439 = vadd.f32 0.0, %v1438
        %v1440 = vpop.f32.mrb[0].mxu0
        %1441 = vmatprep.mubr.bf16.mxu0 0
        %1442 = vmatmul.mubr.bf16.gmra.mrb[0].mxu0 %v1325
        %v1443 = vpop.f32.mrb[0].mxu0
        %v1444 = vadd.f32 0.0, %v1443
        %v1445 = vpop.f32.mrb[0].mxu0
        %v1446 = vpop.f32.mrb[0].mxu0
        %v1447 = vadd.f32 0.0, %v1446
        %v1448 = vpop.f32.mrb[0].mxu0
        %1449 = vmatprep.mubr.bf16.mxu0 0
        %1450 = vmatmul.mubr.bf16.gmra.mrb[0].mxu0 %v1328
        %v1451 = vpop.f32.mrb[0].mxu0
        %v1452 = vadd.f32 0.0, %v1451
        %v1453 = vpop.f32.mrb[0].mxu0
        %v1454 = vpop.f32.mrb[0].mxu0
        %v1455 = vadd.f32 0.0, %v1454
        %v1456 = vpop.f32.mrb[0].mxu0
        %1457 = vmatprep.mubr.bf16.mxu0 0
        %1458 = vmatmul.mubr.bf16.gmra.mrb[0].mxu0 %v1331
        %v1459 = vpop.f32.mrb[0].mxu0
        %v1460 = vadd.f32 0.0, %v1459
        %v1461 = vpop.f32.mrb[0].mxu0
        %v1462 = vpop.f32.mrb[0].mxu0
        %v1463 = vadd.f32 0.0, %v1462
        %v1464 = vpop.f32.mrb[0].mxu0
        %1465 = vmatprep.mubr.bf16.mxu0 0
        %1466 = vmatmul.mubr.bf16.gmra.mrb[0].mxu0 %v1334
        %v1467 = vpop.f32.mrb[0].mxu0
        %v1468 = vadd.f32 0.0, %v1467
        %v1469 = vpop.f32.mrb[0].mxu0
        %v1470 = vpop.f32.mrb[0].mxu0
        %v1471 = vadd.f32 0.0, %v1470
        %v1472 = vpop.f32.mrb[0].mxu0
        %1473 = vmatprep.mubr.bf16.mxu0 0
        %1474 = vmatmul.mubr.bf16.gmra.mrb[0].mxu0 %v1337
        %v1475 = vpop.f32.mrb[0].mxu0
        %v1476 = vadd.f32 0.0, %v1475
        %v1477 = vpop.f32.mrb[0].mxu0
        %v1478 = vpop.f32.mrb[0].mxu0
        %v1479 = vadd.f32 0.0, %v1478
        %v1480 = vpop.f32.mrb[0].mxu0
        %1481 = vmatprep.mubr.bf16.mxu0 0
        %1482 = vmatmul.mubr.bf16.gmra.mrb[0].mxu0 %v1340
        %v1483 = vpop.f32.mrb[0].mxu0
        %v1484 = vadd.f32 0.0, %v1483
        %v1485 = vpop.f32.mrb[0].mxu0
        %v1486 = vpop.f32.mrb[0].mxu0
        %v1487 = vadd.f32 0.0, %v1486
        %v1488 = vpop.f32.mrb[0].mxu0
        %1489 = vdwg.mxu0
        %v1490 = vadd.f32 %v1167, %v1380
        %v1491 = vadd.f32 %v1168, %v1383
        %v1492 = vadd.f32 %v1169, %v1388
        %v1493 = vadd.f32 %v1170, %v1391
        %v1494 = vadd.f32 %v1171, %v1396
        %v1495 = vadd.f32 %v1172, %v1399
        %v1496 = vadd.f32 %v1173, %v1404
        %v1497 = vadd.f32 %v1174, %v1407
        %v1498 = vadd.f32 %v1175, %v1412
        %v1499 = vadd.f32 %v1176, %v1415
        %v1500 = vadd.f32 %v1177, %v1420
        %v1501 = vadd.f32 %v1178, %v1423
        %v1502 = vadd.f32 %v1179, %v1428
        %v1503 = vadd.f32 %v1180, %v1431
        %v1504 = vadd.f32 %v1181, %v1436
        %v1505 = vadd.f32 %v1182, %v1439
        %v1506 = vadd.f32 %v1183, %v1444
        %v1507 = vadd.f32 %v1184, %v1447
        %v1508 = vadd.f32 %v1185, %v1452
        %v1509 = vadd.f32 %v1186, %v1455
        %v1510 = vadd.f32 %v1187, %v1460
        %v1511 = vadd.f32 %v1188, %v1463
        %v1512 = vadd.f32 %v1189, %v1468
        %v1513 = vadd.f32 %v1190, %v1471
        %v1514 = vadd.f32 %v1191, %v1476
        %v1515 = vadd.f32 %v1192, %v1479
        %v1516 = vadd.f32 %v1193, %v1484
        %v1517 = vadd.f32 %v1194, %v1487
        %1518 = vst [vmem:[#allocation2] sm:$0xff] %v1490
        %1519 = vst [vmem:[#allocation2 + $0x8] sm:$0xff] %v1491
        %1520 = vst [vmem:[#allocation2 + $0x10] sm:$0xff] %v1492
        %1521 = vst [vmem:[#allocation2 + $0x18] sm:$0xff] %v1493
        %1522 = vst [vmem:[#allocation2 + $0x20] sm:$0xff] %v1494
        %1523 = vst [vmem:[#allocation2 + $0x28] sm:$0xff] %v1495
        %1524 = vst [vmem:[#allocation2 + $0x30] sm:$0xff] %v1496
        %1525 = vst [vmem:[#allocation2 + $0x38] sm:$0xff] %v1497
        %1526 = vst [vmem:[#allocation2 + $0x40] sm:$0xff] %v1498
        %1527 = vst [vmem:[#allocation2 + $0x48] sm:$0xff] %v1499
        %1528 = vst [vmem:[#allocation2 + $0x50] sm:$0xff] %v1500
        %1529 = vst [vmem:[#allocation2 + $0x58] sm:$0xff] %v1501
        %1530 = vst [vmem:[#allocation2 + $0x60] sm:$0xff] %v1502
        %1531 = vst [vmem:[#allocation2 + $0x68] sm:$0xff] %v1503
        %1532 = vst [vmem:[#allocation2 + $0x70] sm:$0xff] %v1504
        %1533 = vst [vmem:[#allocation2 + $0x78] sm:$0xff] %v1505
        %1534 = vst [vmem:[#allocation2 + $0x80] sm:$0xff] %v1506
        %1535 = vst [vmem:[#allocation2 + $0x88] sm:$0xff] %v1507
        %1536 = vst [vmem:[#allocation2 + $0x90] sm:$0xff] %v1508
        %1537 = vst [vmem:[#allocation2 + $0x98] sm:$0xff] %v1509
        %1538 = vst [vmem:[#allocation2 + $0xa0] sm:$0xff] %v1510
        %1539 = vst [vmem:[#allocation2 + $0xa8] sm:$0xff] %v1511
        %1540 = vst [vmem:[#allocation2 + $0xb0] sm:$0xff] %v1512
        %1541 = vst [vmem:[#allocation2 + $0xb8] sm:$0xff] %v1513
        %1542 = vst [vmem:[#allocation2 + $0xc0] sm:$0xff] %v1514
        %1543 = vst [vmem:[#allocation2 + $0xc8] sm:$0xff] %v1515
        %1544 = vst [vmem:[#allocation2 + $0xd0] sm:$0xff] %v1516
        %1545 = vst [vmem:[#allocation2 + $0xd8] sm:$0xff] %v1517
        %v1546 = vld [vmem:[%s238 + $0x8] sm:$0xf]
        %v1547 = vld [vmem:[%s238 + $0xc] sm:$0xf]
        %v1548 = vld [vmem:[%s238 + $0x10] sm:$0xf]
        %v1549 = vld [vmem:[%s238 + $0x14] sm:$0xf]
        %v1550 = vld [vmem:[%s238 + $0x18] sm:$0xf]
        %v1551 = vld [vmem:[%s238 + $0x1c] sm:$0xf]
        %v1552 = vld [vmem:[%s238 + $0x20] sm:$0xf]
        %v1553 = vld [vmem:[%s238 + $0x24] sm:$0xf]
        %v1554 = vld [vmem:[%s238 + $0x28] sm:$0xf]
        %v1555 = vld [vmem:[%s238 + $0x2c] sm:$0xf]
        %v1556 = vld [vmem:[%s238 + $0x30] sm:$0xf]
        %v1557 = vld [vmem:[%s238 + $0x34] sm:$0xf]
        %v1558 = vld [vmem:[%s238 + $0x38] sm:$0xf]
        %v1559 = vld [vmem:[%s238 + $0x3c] sm:$0xf]
        %v1560 = vld [vmem:[%s238 + $0x40] sm:$0xf]
        %v1561 = vld [vmem:[%s238 + $0x44] sm:$0xf]
        %v1562 = vld [vmem:[%s238 + $0x48] sm:$0xf]
        %v1563 = vld [vmem:[%s238 + $0x4c] sm:$0xf]
        %v1564 = vld [vmem:[%s238 + $0x50] sm:$0xf]
        %v1565 = vld [vmem:[%s238 + $0x54] sm:$0xf]
        %v1566 = vld [vmem:[%s238 + $0x58] sm:$0xf]
        %v1567 = vld [vmem:[%s238 + $0x5c] sm:$0xf]
        %v1568 = vld [vmem:[%s238 + $0x60] sm:$0xf]
        %v1569 = vld [vmem:[%s238 + $0x64] sm:$0xf]
        %v1570 = vld [vmem:[%s238 + $0x68] sm:$0xf]
        %v1571 = vld [vmem:[%s238 + $0x6c] sm:$0xf]
        %v1572 = vld [vmem:[%s238 + $0x70] sm:$0xf]
        %v1573 = vld [vmem:[%s238 + $0x74] sm:$0xf]
        %v1574 = vld [vmem:[#allocation2] sm:$0xff]
        %v1575 = vld [vmem:[#allocation2 + $0x8] sm:$0xff]
        %v1576 = vld [vmem:[#allocation2 + $0x10] sm:$0xff]
        %v1577 = vld [vmem:[#allocation2 + $0x18] sm:$0xff]
        %v1578 = vld [vmem:[#allocation2 + $0x20] sm:$0xff]
        %v1579 = vld [vmem:[#allocation2 + $0x28] sm:$0xff]
        %v1580 = vld [vmem:[#allocation2 + $0x30] sm:$0xff]
        %v1581 = vld [vmem:[#allocation2 + $0x38] sm:$0xff]
        %v1582 = vld [vmem:[#allocation2 + $0x40] sm:$0xff]
        %v1583 = vld [vmem:[#allocation2 + $0x48] sm:$0xff]
        %v1584 = vld [vmem:[#allocation2 + $0x50] sm:$0xff]
        %v1585 = vld [vmem:[#allocation2 + $0x58] sm:$0xff]
        %v1586 = vld [vmem:[#allocation2 + $0x60] sm:$0xff]
        %v1587 = vld [vmem:[#allocation2 + $0x68] sm:$0xff]
        %v1588 = vld [vmem:[#allocation2 + $0x70] sm:$0xff]
        %v1589 = vld [vmem:[#allocation2 + $0x78] sm:$0xff]
        %v1590 = vld [vmem:[#allocation2 + $0x80] sm:$0xff]
        %v1591 = vld [vmem:[#allocation2 + $0x88] sm:$0xff]
        %v1592 = vld [vmem:[#allocation2 + $0x90] sm:$0xff]
        %v1593 = vld [vmem:[#allocation2 + $0x98] sm:$0xff]
        %v1594 = vld [vmem:[#allocation2 + $0xa0] sm:$0xff]
        %v1595 = vld [vmem:[#allocation2 + $0xa8] sm:$0xff]
        %v1596 = vld [vmem:[#allocation2 + $0xb0] sm:$0xff]
        %v1597 = vld [vmem:[#allocation2 + $0xb8] sm:$0xff]
        %v1598 = vld [vmem:[#allocation2 + $0xc0] sm:$0xff]
        %v1599 = vld [vmem:[#allocation2 + $0xc8] sm:$0xff]
        %v1600 = vld [vmem:[#allocation2 + $0xd0] sm:$0xff]
        %v1601 = vld [vmem:[#allocation2 + $0xd8] sm:$0xff]
        %s1602 = scalar_lea.vmem %s1, 6
        %v1603 = vld [vmem:[%s1602] sm:$0x3]
        %v1632 = vunpack.c.l.b16 %v1546
        %v1633 = vunpack.c.l.b16 %v1547
        %v1634 = vunpack.c.l.b16 %v1548
        %v1635 = vunpack.c.l.b16 %v1549
        %v1636 = vunpack.c.l.b16 %v1550
        %v1637 = vunpack.c.l.b16 %v1551
        %v1638 = vunpack.c.l.b16 %v1552
        %v1639 = vunpack.c.l.b16 %v1553
        %v1640 = vunpack.c.l.b16 %v1554
        %v1641 = vunpack.c.l.b16 %v1555
        %v1642 = vunpack.c.l.b16 %v1556
        %v1643 = vunpack.c.l.b16 %v1557
        %v1644 = vunpack.c.l.b16 %v1558
        %v1645 = vunpack.c.l.b16 %v1559
        %v1646 = vunpack.c.l.b16 %v1560
        %v1647 = vunpack.c.l.b16 %v1561
        %v1648 = vunpack.c.l.b16 %v1562
        %v1649 = vunpack.c.l.b16 %v1563
        %v1650 = vunpack.c.l.b16 %v1564
        %v1651 = vunpack.c.l.b16 %v1565
        %v1652 = vunpack.c.l.b16 %v1566
        %v1653 = vunpack.c.l.b16 %v1567
        %v1654 = vunpack.c.l.b16 %v1568
        %v1655 = vunpack.c.l.b16 %v1569
        %v1656 = vunpack.c.l.b16 %v1570
        %v1657 = vunpack.c.l.b16 %v1571
        %v1658 = vunpack.c.l.b16 %v1572
        %v1659 = vunpack.c.l.b16 %v1573
        %v1660 = vpack.c.b16 %v1633, %v1632
        %v1661 = vpack.c.b16 %v1635, %v1634
        %v1662 = vpack.c.b16 %v1637, %v1636
        %v1663 = vpack.c.b16 %v1639, %v1638
        %v1664 = vpack.c.b16 %v1641, %v1640
        %v1665 = vpack.c.b16 %v1643, %v1642
        %v1666 = vpack.c.b16 %v1645, %v1644
        %v1667 = vpack.c.b16 %v1647, %v1646
        %v1668 = vpack.c.b16 %v1649, %v1648
        %v1669 = vpack.c.b16 %v1651, %v1650
        %v1670 = vpack.c.b16 %v1653, %v1652
        %v1671 = vpack.c.b16 %v1655, %v1654
        %v1672 = vpack.c.b16 %v1657, %v1656
        %v1673 = vpack.c.b16 %v1659, %v1658
        %v1675 = vsel %vm395, %v1660, 0
        %v1678 = vsel %vm395, %v1661, 0
        %v1681 = vsel %vm395, %v1662, 0
        %v1684 = vsel %vm395, %v1663, 0
        %v1687 = vsel %vm395, %v1664, 0
        %v1690 = vsel %vm395, %v1665, 0
        %v1693 = vsel %vm395, %v1666, 0
        %v1696 = vsel %vm395, %v1667, 0
        %v1699 = vsel %vm395, %v1668, 0
        %v1702 = vsel %vm395, %v1669, 0
        %v1705 = vsel %vm395, %v1670, 0
        %v1708 = vsel %vm395, %v1671, 0
        %v1711 = vsel %vm395, %v1672, 0
        %v1714 = vsel %vm395, %v1673, 0
        %v1717 = vsel %vm438, %v1603, 0
        %1719 = vmatprep.subr.bf16.mxu0 0
        %1720 = vmatpush1.bf16.msra.mxu0 %v1717
        %1721 = vmatprep.subr.bf16.mxu0 0
        %1722 = vmatpush1.bf16.msra.mxu0 0
        %1723 = vmatprep.subr.bf16.mxu0 0
        %1724 = vmatpush1.bf16.msra.mxu0 0
        %1725 = vmatprep.subr.bf16.mxu0 0
        %1726 = vmatpush1.bf16.msra.mxu0 0
        %1727 = vmatprep.subr.bf16.mxu0 0
        %1728 = vmatpush1.bf16.msra.mxu0 0
        %1729 = vmatprep.subr.bf16.mxu0 0
        %1730 = vmatpush1.bf16.msra.mxu0 0
        %1731 = vmatprep.subr.bf16.mxu0 0
        %1732 = vmatpush1.bf16.msra.mxu0 0
        %1733 = vmatprep.subr.bf16.mxu0 0
        %1734 = vmatpush1.bf16.msra.mxu0 0
        %1735 = vmatprep.subr.bf16.mxu0 0
        %1736 = vmatpush1.bf16.msra.mxu0 0
        %1737 = vmatprep.subr.bf16.mxu0 0
        %1738 = vmatpush1.bf16.msra.mxu0 0
        %1739 = vmatprep.subr.bf16.mxu0 0
        %1740 = vmatpush1.bf16.msra.mxu0 0
        %1741 = vmatprep.subr.bf16.mxu0 0
        %1742 = vmatpush1.bf16.msra.mxu0 0
        %1743 = vmatprep.subr.bf16.mxu0 0
        %1744 = vmatpush1.bf16.msra.mxu0 0
        %1745 = vmatprep.subr.bf16.mxu0 0
        %1746 = vmatpush1.bf16.msra.mxu0 0
        %1747 = vmatprep.subr.bf16.mxu0 0
        %1748 = vmatpush1.bf16.msra.mxu0 0
        %1749 = vmatprep.subr.bf16.mxu0 0
        %1750 = vmatpush1.bf16.msra.mxu0 0
        %1751 = vmatprep.mubr.bf16.mxu0 0
        %1752 = vmatmul.mubr.bf16.gmra.mrb[0].mxu0 %v1675
        %v1753 = vpop.f32.mrb[0].mxu0
        %v1754 = vadd.f32 0.0, %v1753
        %v1755 = vpop.f32.mrb[0].mxu0
        %v1756 = vpop.f32.mrb[0].mxu0
        %v1757 = vadd.f32 0.0, %v1756
        %v1758 = vpop.f32.mrb[0].mxu0
        %1759 = vmatprep.mubr.bf16.mxu0 0
        %1760 = vmatmul.mubr.bf16.gmra.mrb[0].mxu0 %v1678
        %v1761 = vpop.f32.mrb[0].mxu0
        %v1762 = vadd.f32 0.0, %v1761
        %v1763 = vpop.f32.mrb[0].mxu0
        %v1764 = vpop.f32.mrb[0].mxu0
        %v1765 = vadd.f32 0.0, %v1764
        %v1766 = vpop.f32.mrb[0].mxu0
        %1767 = vmatprep.mubr.bf16.mxu0 0
        %1768 = vmatmul.mubr.bf16.gmra.mrb[0].mxu0 %v1681
        %v1769 = vpop.f32.mrb[0].mxu0
        %v1770 = vadd.f32 0.0, %v1769
        %v1771 = vpop.f32.mrb[0].mxu0
        %v1772 = vpop.f32.mrb[0].mxu0
        %v1773 = vadd.f32 0.0, %v1772
        %v1774 = vpop.f32.mrb[0].mxu0
        %1775 = vmatprep.mubr.bf16.mxu0 0
        %1776 = vmatmul.mubr.bf16.gmra.mrb[0].mxu0 %v1684
        %v1777 = vpop.f32.mrb[0].mxu0
        %v1778 = vadd.f32 0.0, %v1777
        %v1779 = vpop.f32.mrb[0].mxu0
        %v1780 = vpop.f32.mrb[0].mxu0
        %v1781 = vadd.f32 0.0, %v1780
        %v1782 = vpop.f32.mrb[0].mxu0
        %1783 = vmatprep.mubr.bf16.mxu0 0
        %1784 = vmatmul.mubr.bf16.gmra.mrb[0].mxu0 %v1687
        %v1785 = vpop.f32.mrb[0].mxu0
        %v1786 = vadd.f32 0.0, %v1785
        %v1787 = vpop.f32.mrb[0].mxu0
        %v1788 = vpop.f32.mrb[0].mxu0
        %v1789 = vadd.f32 0.0, %v1788
        %v1790 = vpop.f32.mrb[0].mxu0
        %1791 = vmatprep.mubr.bf16.mxu0 0
        %1792 = vmatmul.mubr.bf16.gmra.mrb[0].mxu0 %v1690
        %v1793 = vpop.f32.mrb[0].mxu0
        %v1794 = vadd.f32 0.0, %v1793
        %v1795 = vpop.f32.mrb[0].mxu0
        %v1796 = vpop.f32.mrb[0].mxu0
        %v1797 = vadd.f32 0.0, %v1796
        %v1798 = vpop.f32.mrb[0].mxu0
        %1799 = vmatprep.mubr.bf16.mxu0 0
        %1800 = vmatmul.mubr.bf16.gmra.mrb[0].mxu0 %v1693
        %v1801 = vpop.f32.mrb[0].mxu0
        %v1802 = vadd.f32 0.0, %v1801
        %v1803 = vpop.f32.mrb[0].mxu0
        %v1804 = vpop.f32.mrb[0].mxu0
        %v1805 = vadd.f32 0.0, %v1804
        %v1806 = vpop.f32.mrb[0].mxu0
        %1807 = vmatprep.mubr.bf16.mxu0 0
        %1808 = vmatmul.mubr.bf16.gmra.mrb[0].mxu0 %v1696
        %v1809 = vpop.f32.mrb[0].mxu0
        %v1810 = vadd.f32 0.0, %v1809
        %v1811 = vpop.f32.mrb[0].mxu0
        %v1812 = vpop.f32.mrb[0].mxu0
        %v1813 = vadd.f32 0.0, %v1812
        %v1814 = vpop.f32.mrb[0].mxu0
        %1815 = vmatprep.mubr.bf16.mxu0 0
        %1816 = vmatmul.mubr.bf16.gmra.mrb[0].mxu0 %v1699
        %v1817 = vpop.f32.mrb[0].mxu0
        %v1818 = vadd.f32 0.0, %v1817
        %v1819 = vpop.f32.mrb[0].mxu0
        %v1820 = vpop.f32.mrb[0].mxu0
        %v1821 = vadd.f32 0.0, %v1820
        %v1822 = vpop.f32.mrb[0].mxu0
        %1823 = vmatprep.mubr.bf16.mxu0 0
        %1824 = vmatmul.mubr.bf16.gmra.mrb[0].mxu0 %v1702
        %v1825 = vpop.f32.mrb[0].mxu0
        %v1826 = vadd.f32 0.0, %v1825
        %v1827 = vpop.f32.mrb[0].mxu0
        %v1828 = vpop.f32.mrb[0].mxu0
        %v1829 = vadd.f32 0.0, %v1828
        %v1830 = vpop.f32.mrb[0].mxu0
        %1831 = vmatprep.mubr.bf16.mxu0 0
        %1832 = vmatmul.mubr.bf16.gmra.mrb[0].mxu0 %v1705
        %v1833 = vpop.f32.mrb[0].mxu0
        %v1834 = vadd.f32 0.0, %v1833
        %v1835 = vpop.f32.mrb[0].mxu0
        %v1836 = vpop.f32.mrb[0].mxu0
        %v1837 = vadd.f32 0.0, %v1836
        %v1838 = vpop.f32.mrb[0].mxu0
        %1839 = vmatprep.mubr.bf16.mxu0 0
        %1840 = vmatmul.mubr.bf16.gmra.mrb[0].mxu0 %v1708
        %v1841 = vpop.f32.mrb[0].mxu0
        %v1842 = vadd.f32 0.0, %v1841
        %v1843 = vpop.f32.mrb[0].mxu0
        %v1844 = vpop.f32.mrb[0].mxu0
        %v1845 = vadd.f32 0.0, %v1844
        %v1846 = vpop.f32.mrb[0].mxu0
        %1847 = vmatprep.mubr.bf16.mxu0 0
        %1848 = vmatmul.mubr.bf16.gmra.mrb[0].mxu0 %v1711
        %v1849 = vpop.f32.mrb[0].mxu0
        %v1850 = vadd.f32 0.0, %v1849
        %v1851 = vpop.f32.mrb[0].mxu0
        %v1852 = vpop.f32.mrb[0].mxu0
        %v1853 = vadd.f32 0.0, %v1852
        %v1854 = vpop.f32.mrb[0].mxu0
        %1855 = vmatprep.mubr.bf16.mxu0 0
        %1856 = vmatmul.mubr.bf16.gmra.mrb[0].mxu0 %v1714
        %v1857 = vpop.f32.mrb[0].mxu0
        %v1858 = vadd.f32 0.0, %v1857
        %v1859 = vpop.f32.mrb[0].mxu0
        %v1860 = vpop.f32.mrb[0].mxu0
        %v1861 = vadd.f32 0.0, %v1860
        %v1862 = vpop.f32.mrb[0].mxu0
        %1863 = vdwg.mxu0
        %v1864 = vadd.f32 %v1574, %v1754
        %v1865 = vadd.f32 %v1575, %v1757
        %v1866 = vadd.f32 %v1576, %v1762
        %v1867 = vadd.f32 %v1577, %v1765
        %v1868 = vadd.f32 %v1578, %v1770
        %v1869 = vadd.f32 %v1579, %v1773
        %v1870 = vadd.f32 %v1580, %v1778
        %v1871 = vadd.f32 %v1581, %v1781
        %v1872 = vadd.f32 %v1582, %v1786
        %v1873 = vadd.f32 %v1583, %v1789
        %v1874 = vadd.f32 %v1584, %v1794
        %v1875 = vadd.f32 %v1585, %v1797
        %v1876 = vadd.f32 %v1586, %v1802
        %v1877 = vadd.f32 %v1587, %v1805
        %v1878 = vadd.f32 %v1588, %v1810
        %v1879 = vadd.f32 %v1589, %v1813
        %v1880 = vadd.f32 %v1590, %v1818
        %v1881 = vadd.f32 %v1591, %v1821
        %v1882 = vadd.f32 %v1592, %v1826
        %v1883 = vadd.f32 %v1593, %v1829
        %v1884 = vadd.f32 %v1594, %v1834
        %v1885 = vadd.f32 %v1595, %v1837
        %v1886 = vadd.f32 %v1596, %v1842
        %v1887 = vadd.f32 %v1597, %v1845
        %v1888 = vadd.f32 %v1598, %v1850
        %v1889 = vadd.f32 %v1599, %v1853
        %v1890 = vadd.f32 %v1600, %v1858
        %v1891 = vadd.f32 %v1601, %v1861
        %1892 = vst [vmem:[#allocation2] sm:$0xff] %v1864
        %1893 = vst [vmem:[#allocation2 + $0x8] sm:$0xff] %v1865
        %1894 = vst [vmem:[#allocation2 + $0x10] sm:$0xff] %v1866
        %1895 = vst [vmem:[#allocation2 + $0x18] sm:$0xff] %v1867
        %1896 = vst [vmem:[#allocation2 + $0x20] sm:$0xff] %v1868
        %1897 = vst [vmem:[#allocation2 + $0x28] sm:$0xff] %v1869
        %1898 = vst [vmem:[#allocation2 + $0x30] sm:$0xff] %v1870
        %1899 = vst [vmem:[#allocation2 + $0x38] sm:$0xff] %v1871
        %1900 = vst [vmem:[#allocation2 + $0x40] sm:$0xff] %v1872
        %1901 = vst [vmem:[#allocation2 + $0x48] sm:$0xff] %v1873
        %1902 = vst [vmem:[#allocation2 + $0x50] sm:$0xff] %v1874
        %1903 = vst [vmem:[#allocation2 + $0x58] sm:$0xff] %v1875
        %1904 = vst [vmem:[#allocation2 + $0x60] sm:$0xff] %v1876
        %1905 = vst [vmem:[#allocation2 + $0x68] sm:$0xff] %v1877
        %1906 = vst [vmem:[#allocation2 + $0x70] sm:$0xff] %v1878
        %1907 = vst [vmem:[#allocation2 + $0x78] sm:$0xff] %v1879
        %1908 = vst [vmem:[#allocation2 + $0x80] sm:$0xff] %v1880
        %1909 = vst [vmem:[#allocation2 + $0x88] sm:$0xff] %v1881
        %1910 = vst [vmem:[#allocation2 + $0x90] sm:$0xff] %v1882
        %1911 = vst [vmem:[#allocation2 + $0x98] sm:$0xff] %v1883
        %1912 = vst [vmem:[#allocation2 + $0xa0] sm:$0xff] %v1884
        %1913 = vst [vmem:[#allocation2 + $0xa8] sm:$0xff] %v1885
        %1914 = vst [vmem:[#allocation2 + $0xb0] sm:$0xff] %v1886
        %1915 = vst [vmem:[#allocation2 + $0xb8] sm:$0xff] %v1887
        %1916 = vst [vmem:[#allocation2 + $0xc0] sm:$0xff] %v1888
        %1917 = vst [vmem:[#allocation2 + $0xc8] sm:$0xff] %v1889
        %1918 = vst [vmem:[#allocation2 + $0xd0] sm:$0xff] %v1890
        %1919 = vst [vmem:[#allocation2 + $0xd8] sm:$0xff] %v1891
        %v1920 = vld [vmem:[%s238 + $0x8] sm:$0xf]
        %v1921 = vld [vmem:[%s238 + $0xc] sm:$0xf]
        %v1922 = vld [vmem:[%s238 + $0x10] sm:$0xf]
        %v1923 = vld [vmem:[%s238 + $0x14] sm:$0xf]
        %v1924 = vld [vmem:[%s238 + $0x18] sm:$0xf]
        %v1925 = vld [vmem:[%s238 + $0x1c] sm:$0xf]
        %v1926 = vld [vmem:[%s238 + $0x20] sm:$0xf]
        %v1927 = vld [vmem:[%s238 + $0x24] sm:$0xf]
        %v1928 = vld [vmem:[%s238 + $0x28] sm:$0xf]
        %v1929 = vld [vmem:[%s238 + $0x2c] sm:$0xf]
        %v1930 = vld [vmem:[%s238 + $0x30] sm:$0xf]
        %v1931 = vld [vmem:[%s238 + $0x34] sm:$0xf]
        %v1932 = vld [vmem:[%s238 + $0x38] sm:$0xf]
        %v1933 = vld [vmem:[%s238 + $0x3c] sm:$0xf]
        %v1934 = vld [vmem:[%s238 + $0x40] sm:$0xf]
        %v1935 = vld [vmem:[%s238 + $0x44] sm:$0xf]
        %v1936 = vld [vmem:[%s238 + $0x48] sm:$0xf]
        %v1937 = vld [vmem:[%s238 + $0x4c] sm:$0xf]
        %v1938 = vld [vmem:[%s238 + $0x50] sm:$0xf]
        %v1939 = vld [vmem:[%s238 + $0x54] sm:$0xf]
        %v1940 = vld [vmem:[%s238 + $0x58] sm:$0xf]
        %v1941 = vld [vmem:[%s238 + $0x5c] sm:$0xf]
        %v1942 = vld [vmem:[%s238 + $0x60] sm:$0xf]
        %v1943 = vld [vmem:[%s238 + $0x64] sm:$0xf]
        %v1944 = vld [vmem:[%s238 + $0x68] sm:$0xf]
        %v1945 = vld [vmem:[%s238 + $0x6c] sm:$0xf]
        %v1946 = vld [vmem:[%s238 + $0x70] sm:$0xf]
        %v1947 = vld [vmem:[%s238 + $0x74] sm:$0xf]
        %v1948 = vld [vmem:[%s238 + $0x78] sm:$0x1]
        %v1949 = vld [vmem:[#allocation2] sm:$0xff]
        %v1950 = vld [vmem:[#allocation2 + $0x8] sm:$0xff]
        %v1951 = vld [vmem:[#allocation2 + $0x10] sm:$0xff]
        %v1952 = vld [vmem:[#allocation2 + $0x18] sm:$0xff]
        %v1953 = vld [vmem:[#allocation2 + $0x20] sm:$0xff]
        %v1954 = vld [vmem:[#allocation2 + $0x28] sm:$0xff]
        %v1955 = vld [vmem:[#allocation2 + $0x30] sm:$0xff]
        %v1956 = vld [vmem:[#allocation2 + $0x38] sm:$0xff]
        %v1957 = vld [vmem:[#allocation2 + $0x40] sm:$0xff]
        %v1958 = vld [vmem:[#allocation2 + $0x48] sm:$0xff]
        %v1959 = vld [vmem:[#allocation2 + $0x50] sm:$0xff]
        %v1960 = vld [vmem:[#allocation2 + $0x58] sm:$0xff]
        %v1961 = vld [vmem:[#allocation2 + $0x60] sm:$0xff]
        %v1962 = vld [vmem:[#allocation2 + $0x68] sm:$0xff]
        %v1963 = vld [vmem:[#allocation2 + $0x70] sm:$0xff]
        %v1964 = vld [vmem:[#allocation2 + $0x78] sm:$0xff]
        %v1965 = vld [vmem:[#allocation2 + $0x80] sm:$0xff]
        %v1966 = vld [vmem:[#allocation2 + $0x88] sm:$0xff]
        %v1967 = vld [vmem:[#allocation2 + $0x90] sm:$0xff]
        %v1968 = vld [vmem:[#allocation2 + $0x98] sm:$0xff]
        %v1969 = vld [vmem:[#allocation2 + $0xa0] sm:$0xff]
        %v1970 = vld [vmem:[#allocation2 + $0xa8] sm:$0xff]
        %v1971 = vld [vmem:[#allocation2 + $0xb0] sm:$0xff]
        %v1972 = vld [vmem:[#allocation2 + $0xb8] sm:$0xff]
        %v1973 = vld [vmem:[#allocation2 + $0xc0] sm:$0xff]
        %v1974 = vld [vmem:[#allocation2 + $0xc8] sm:$0xff]
        %v1975 = vld [vmem:[#allocation2 + $0xd0] sm:$0xff]
        %v1976 = vld [vmem:[#allocation2 + $0xd8] sm:$0xff]
        %s1977 = scalar_lea.vmem %s1, 8
        %v1978 = vld [vmem:[%s1977] sm:$0x3]
        %v2008 = vunpack.c.l.b16 %v1920
        %v2009 = vunpack.c.l.b16 %v1921
        %v2010 = vunpack.c.l.b16 %v1922
        %v2011 = vunpack.c.l.b16 %v1923
        %v2012 = vunpack.c.l.b16 %v1924
        %v2013 = vunpack.c.l.b16 %v1925
        %v2014 = vunpack.c.l.b16 %v1926
        %v2015 = vunpack.c.l.b16 %v1927
        %v2016 = vunpack.c.l.b16 %v1928
        %v2017 = vunpack.c.l.b16 %v1929
        %v2018 = vunpack.c.l.b16 %v1930
        %v2019 = vunpack.c.l.b16 %v1931
        %v2020 = vunpack.c.l.b16 %v1932
        %v2021 = vunpack.c.l.b16 %v1933
        %v2022 = vunpack.c.l.b16 %v1934
        %v2023 = vunpack.c.l.b16 %v1935
        %v2024 = vunpack.c.l.b16 %v1936
        %v2025 = vunpack.c.l.b16 %v1937
        %v2026 = vunpack.c.l.b16 %v1938
        %v2027 = vunpack.c.l.b16 %v1939
        %v2028 = vunpack.c.l.b16 %v1940
        %v2029 = vunpack.c.l.b16 %v1941
        %v2030 = vunpack.c.l.b16 %v1942
        %v2031 = vunpack.c.l.b16 %v1943
        %v2032 = vunpack.c.l.b16 %v1944
        %v2033 = vunpack.c.l.b16 %v1945
        %v2034 = vunpack.c.l.b16 %v1946
        %v2035 = vunpack.c.l.b16 %v1947
        %v2036 = vunpack.c.l.b16 %v1948
        %v2037 = vpack.c.b16 %v2009, %v2008
        %v2038 = vpack.c.b16 %v2011, %v2010
        %v2039 = vpack.c.b16 %v2013, %v2012
        %v2040 = vpack.c.b16 %v2015, %v2014
        %v2041 = vpack.c.b16 %v2017, %v2016
        %v2042 = vpack.c.b16 %v2019, %v2018
        %v2043 = vpack.c.b16 %v2021, %v2020
        %v2044 = vpack.c.b16 %v2023, %v2022
        %v2045 = vpack.c.b16 %v2025, %v2024
        %v2046 = vpack.c.b16 %v2027, %v2026
        %v2047 = vpack.c.b16 %v2029, %v2028
        %v2048 = vpack.c.b16 %v2031, %v2030
        %v2049 = vpack.c.b16 %v2033, %v2032
        %v2050 = vpack.c.b16 %v2035, %v2034
        %v2051 = vpack.c.b16 %v2036, %v2036
        %v2053 = vshrl.u32 %v2037, 16
        %v2055 = vshll.u32 %v2037, 16
        %v2057 = vrot.slane %v2055, 1
        %v2058 = vor.u32 %v2053, %v2057
        %v2060 = vshll.u32 %v2038, 16
        %v2062 = vrot.slane %v2060, 1
        %v2063 = vsel %vm775, %v2058, %v2062
        %v2064 = vshrl.u32 %v2038, 16
        %v2066 = vor.u32 %v2064, %v2062
        %v2068 = vshll.u32 %v2039, 16
        %v2070 = vrot.slane %v2068, 1
        %v2071 = vsel %vm775, %v2066, %v2070
        %v2072 = vshrl.u32 %v2039, 16
        %v2074 = vor.u32 %v2072, %v2070
        %v2076 = vshll.u32 %v2040, 16
        %v2078 = vrot.slane %v2076, 1
        %v2079 = vsel %vm775, %v2074, %v2078
        %v2080 = vshrl.u32 %v2040, 16
        %v2082 = vor.u32 %v2080, %v2078
        %v2084 = vshll.u32 %v2041, 16
        %v2086 = vrot.slane %v2084, 1
        %v2087 = vsel %vm775, %v2082, %v2086
        %v2088 = vshrl.u32 %v2041, 16
        %v2090 = vor.u32 %v2088, %v2086
        %v2092 = vshll.u32 %v2042, 16
        %v2094 = vrot.slane %v2092, 1
        %v2095 = vsel %vm775, %v2090, %v2094
        %v2096 = vshrl.u32 %v2042, 16
        %v2098 = vor.u32 %v2096, %v2094
        %v2100 = vshll.u32 %v2043, 16
        %v2102 = vrot.slane %v2100, 1
        %v2103 = vsel %vm775, %v2098, %v2102
        %v2104 = vshrl.u32 %v2043, 16
        %v2106 = vor.u32 %v2104, %v2102
        %v2108 = vshll.u32 %v2044, 16
        %v2110 = vrot.slane %v2108, 1
        %v2111 = vsel %vm775, %v2106, %v2110
        %v2112 = vshrl.u32 %v2044, 16
        %v2114 = vor.u32 %v2112, %v2110
        %v2116 = vshll.u32 %v2045, 16
        %v2118 = vrot.slane %v2116, 1
        %v2119 = vsel %vm775, %v2114, %v2118
        %v2120 = vshrl.u32 %v2045, 16
        %v2122 = vor.u32 %v2120, %v2118
        %v2124 = vshll.u32 %v2046, 16
        %v2126 = vrot.slane %v2124, 1
        %v2127 = vsel %vm775, %v2122, %v2126
        %v2128 = vshrl.u32 %v2046, 16
        %v2130 = vor.u32 %v2128, %v2126
        %v2132 = vshll.u32 %v2047, 16
        %v2134 = vrot.slane %v2132, 1
        %v2135 = vsel %vm775, %v2130, %v2134
        %v2136 = vshrl.u32 %v2047, 16
        %v2138 = vor.u32 %v2136, %v2134
        %v2140 = vshll.u32 %v2048, 16
        %v2142 = vrot.slane %v2140, 1
        %v2143 = vsel %vm775, %v2138, %v2142
        %v2144 = vshrl.u32 %v2048, 16
        %v2146 = vor.u32 %v2144, %v2142
        %v2148 = vshll.u32 %v2049, 16
        %v2150 = vrot.slane %v2148, 1
        %v2151 = vsel %vm775, %v2146, %v2150
        %v2152 = vshrl.u32 %v2049, 16
        %v2154 = vor.u32 %v2152, %v2150
        %v2156 = vshll.u32 %v2050, 16
        %v2158 = vrot.slane %v2156, 1
        %v2159 = vsel %vm775, %v2154, %v2158
        %v2160 = vshrl.u32 %v2050, 16
        %v2162 = vor.u32 %v2160, %v2158
        %v2164 = vshll.u32 %v2051, 16
        %v2166 = vrot.slane %v2164, 1
        %v2167 = vsel %vm775, %v2162, %v2166
        %v2169 = vsel %vm395, %v2063, 0
        %v2172 = vsel %vm395, %v2071, 0
        %v2175 = vsel %vm395, %v2079, 0
        %v2178 = vsel %vm395, %v2087, 0
        %v2181 = vsel %vm395, %v2095, 0
        %v2184 = vsel %vm395, %v2103, 0
        %v2187 = vsel %vm395, %v2111, 0
        %v2190 = vsel %vm395, %v2119, 0
        %v2193 = vsel %vm395, %v2127, 0
        %v2196 = vsel %vm395, %v2135, 0
        %v2199 = vsel %vm395, %v2143, 0
        %v2202 = vsel %vm395, %v2151, 0
        %v2205 = vsel %vm395, %v2159, 0
        %v2208 = vsel %vm395, %v2167, 0
        %v2211 = vsel %vm438, %v1978, 0
        %2213 = vmatprep.subr.bf16.mxu0 0
        %2214 = vmatpush1.bf16.msra.mxu0 %v2211
        %2215 = vmatprep.subr.bf16.mxu0 0
        %2216 = vmatpush1.bf16.msra.mxu0 0
        %2217 = vmatprep.subr.bf16.mxu0 0
        %2218 = vmatpush1.bf16.msra.mxu0 0
        %2219 = vmatprep.subr.bf16.mxu0 0
        %2220 = vmatpush1.bf16.msra.mxu0 0
        %2221 = vmatprep.subr.bf16.mxu0 0
        %2222 = vmatpush1.bf16.msra.mxu0 0
        %2223 = vmatprep.subr.bf16.mxu0 0
        %2224 = vmatpush1.bf16.msra.mxu0 0
        %2225 = vmatprep.subr.bf16.mxu0 0
        %2226 = vmatpush1.bf16.msra.mxu0 0
        %2227 = vmatprep.subr.bf16.mxu0 0
        %2228 = vmatpush1.bf16.msra.mxu0 0
        %2229 = vmatprep.subr.bf16.mxu0 0
        %2230 = vmatpush1.bf16.msra.mxu0 0
        %2231 = vmatprep.subr.bf16.mxu0 0
        %2232 = vmatpush1.bf16.msra.mxu0 0
        %2233 = vmatprep.subr.bf16.mxu0 0
        %2234 = vmatpush1.bf16.msra.mxu0 0
        %2235 = vmatprep.subr.bf16.mxu0 0
        %2236 = vmatpush1.bf16.msra.mxu0 0
        %2237 = vmatprep.subr.bf16.mxu0 0
        %2238 = vmatpush1.bf16.msra.mxu0 0
        %2239 = vmatprep.subr.bf16.mxu0 0
        %2240 = vmatpush1.bf16.msra.mxu0 0
        %2241 = vmatprep.subr.bf16.mxu0 0
        %2242 = vmatpush1.bf16.msra.mxu0 0
        %2243 = vmatprep.subr.bf16.mxu0 0
        %2244 = vmatpush1.bf16.msra.mxu0 0
        %2245 = vmatprep.mubr.bf16.mxu0 0
        %2246 = vmatmul.mubr.bf16.gmra.mrb[0].mxu0 %v2169
        %v2247 = vpop.f32.mrb[0].mxu0
        %v2248 = vadd.f32 0.0, %v2247
        %v2249 = vpop.f32.mrb[0].mxu0
        %v2250 = vpop.f32.mrb[0].mxu0
        %v2251 = vadd.f32 0.0, %v2250
        %v2252 = vpop.f32.mrb[0].mxu0
        %2253 = vmatprep.mubr.bf16.mxu0 0
        %2254 = vmatmul.mubr.bf16.gmra.mrb[0].mxu0 %v2172
        %v2255 = vpop.f32.mrb[0].mxu0
        %v2256 = vadd.f32 0.0, %v2255
        %v2257 = vpop.f32.mrb[0].mxu0
        %v2258 = vpop.f32.mrb[0].mxu0
        %v2259 = vadd.f32 0.0, %v2258
        %v2260 = vpop.f32.mrb[0].mxu0
        %2261 = vmatprep.mubr.bf16.mxu0 0
        %2262 = vmatmul.mubr.bf16.gmra.mrb[0].mxu0 %v2175
        %v2263 = vpop.f32.mrb[0].mxu0
        %v2264 = vadd.f32 0.0, %v2263
        %v2265 = vpop.f32.mrb[0].mxu0
        %v2266 = vpop.f32.mrb[0].mxu0
        %v2267 = vadd.f32 0.0, %v2266
        %v2268 = vpop.f32.mrb[0].mxu0
        %2269 = vmatprep.mubr.bf16.mxu0 0
        %2270 = vmatmul.mubr.bf16.gmra.mrb[0].mxu0 %v2178
        %v2271 = vpop.f32.mrb[0].mxu0
        %v2272 = vadd.f32 0.0, %v2271
        %v2273 = vpop.f32.mrb[0].mxu0
        %v2274 = vpop.f32.mrb[0].mxu0
        %v2275 = vadd.f32 0.0, %v2274
        %v2276 = vpop.f32.mrb[0].mxu0
        %2277 = vmatprep.mubr.bf16.mxu0 0
        %2278 = vmatmul.mubr.bf16.gmra.mrb[0].mxu0 %v2181
        %v2279 = vpop.f32.mrb[0].mxu0
        %v2280 = vadd.f32 0.0, %v2279
        %v2281 = vpop.f32.mrb[0].mxu0
        %v2282 = vpop.f32.mrb[0].mxu0
        %v2283 = vadd.f32 0.0, %v2282
        %v2284 = vpop.f32.mrb[0].mxu0
        %2285 = vmatprep.mubr.bf16.mxu0 0
        %2286 = vmatmul.mubr.bf16.gmra.mrb[0].mxu0 %v2184
        %v2287 = vpop.f32.mrb[0].mxu0
        %v2288 = vadd.f32 0.0, %v2287
        %v2289 = vpop.f32.mrb[0].mxu0
        %v2290 = vpop.f32.mrb[0].mxu0
        %v2291 = vadd.f32 0.0, %v2290
        %v2292 = vpop.f32.mrb[0].mxu0
        %2293 = vmatprep.mubr.bf16.mxu0 0
        %2294 = vmatmul.mubr.bf16.gmra.mrb[0].mxu0 %v2187
        %v2295 = vpop.f32.mrb[0].mxu0
        %v2296 = vadd.f32 0.0, %v2295
        %v2297 = vpop.f32.mrb[0].mxu0
        %v2298 = vpop.f32.mrb[0].mxu0
        %v2299 = vadd.f32 0.0, %v2298
        %v2300 = vpop.f32.mrb[0].mxu0
        %2301 = vmatprep.mubr.bf16.mxu0 0
        %2302 = vmatmul.mubr.bf16.gmra.mrb[0].mxu0 %v2190
        %v2303 = vpop.f32.mrb[0].mxu0
        %v2304 = vadd.f32 0.0, %v2303
        %v2305 = vpop.f32.mrb[0].mxu0
        %v2306 = vpop.f32.mrb[0].mxu0
        %v2307 = vadd.f32 0.0, %v2306
        %v2308 = vpop.f32.mrb[0].mxu0
        %2309 = vmatprep.mubr.bf16.mxu0 0
        %2310 = vmatmul.mubr.bf16.gmra.mrb[0].mxu0 %v2193
        %v2311 = vpop.f32.mrb[0].mxu0
        %v2312 = vadd.f32 0.0, %v2311
        %v2313 = vpop.f32.mrb[0].mxu0
        %v2314 = vpop.f32.mrb[0].mxu0
        %v2315 = vadd.f32 0.0, %v2314
        %v2316 = vpop.f32.mrb[0].mxu0
        %2317 = vmatprep.mubr.bf16.mxu0 0
        %2318 = vmatmul.mubr.bf16.gmra.mrb[0].mxu0 %v2196
        %v2319 = vpop.f32.mrb[0].mxu0
        %v2320 = vadd.f32 0.0, %v2319
        %v2321 = vpop.f32.mrb[0].mxu0
        %v2322 = vpop.f32.mrb[0].mxu0
        %v2323 = vadd.f32 0.0, %v2322
        %v2324 = vpop.f32.mrb[0].mxu0
        %2325 = vmatprep.mubr.bf16.mxu0 0
        %2326 = vmatmul.mubr.bf16.gmra.mrb[0].mxu0 %v2199
        %v2327 = vpop.f32.mrb[0].mxu0
        %v2328 = vadd.f32 0.0, %v2327
        %v2329 = vpop.f32.mrb[0].mxu0
        %v2330 = vpop.f32.mrb[0].mxu0
        %v2331 = vadd.f32 0.0, %v2330
        %v2332 = vpop.f32.mrb[0].mxu0
        %2333 = vmatprep.mubr.bf16.mxu0 0
        %2334 = vmatmul.mubr.bf16.gmra.mrb[0].mxu0 %v2202
        %v2335 = vpop.f32.mrb[0].mxu0
        %v2336 = vadd.f32 0.0, %v2335
        %v2337 = vpop.f32.mrb[0].mxu0
        %v2338 = vpop.f32.mrb[0].mxu0
        %v2339 = vadd.f32 0.0, %v2338
        %v2340 = vpop.f32.mrb[0].mxu0
        %2341 = vmatprep.mubr.bf16.mxu0 0
        %2342 = vmatmul.mubr.bf16.gmra.mrb[0].mxu0 %v2205
        %v2343 = vpop.f32.mrb[0].mxu0
        %v2344 = vadd.f32 0.0, %v2343
        %v2345 = vpop.f32.mrb[0].mxu0
        %v2346 = vpop.f32.mrb[0].mxu0
        %v2347 = vadd.f32 0.0, %v2346
        %v2348 = vpop.f32.mrb[0].mxu0
        %2349 = vmatprep.mubr.bf16.mxu0 0
        %2350 = vmatmul.mubr.bf16.gmra.mrb[0].mxu0 %v2208
        %v2351 = vpop.f32.mrb[0].mxu0
        %v2352 = vadd.f32 0.0, %v2351
        %v2353 = vpop.f32.mrb[0].mxu0
        %v2354 = vpop.f32.mrb[0].mxu0
        %v2355 = vadd.f32 0.0, %v2354
        %v2356 = vpop.f32.mrb[0].mxu0
        %2357 = vdwg.mxu0
        %v2358 = vadd.f32 %v1949, %v2248
        %v2359 = vadd.f32 %v1950, %v2251
        %v2360 = vadd.f32 %v1951, %v2256
        %v2361 = vadd.f32 %v1952, %v2259
        %v2362 = vadd.f32 %v1953, %v2264
        %v2363 = vadd.f32 %v1954, %v2267
        %v2364 = vadd.f32 %v1955, %v2272
        %v2365 = vadd.f32 %v1956, %v2275
        %v2366 = vadd.f32 %v1957, %v2280
        %v2367 = vadd.f32 %v1958, %v2283
        %v2368 = vadd.f32 %v1959, %v2288
        %v2369 = vadd.f32 %v1960, %v2291
        %v2370 = vadd.f32 %v1961, %v2296
        %v2371 = vadd.f32 %v1962, %v2299
        %v2372 = vadd.f32 %v1963, %v2304
        %v2373 = vadd.f32 %v1964, %v2307
        %v2374 = vadd.f32 %v1965, %v2312
        %v2375 = vadd.f32 %v1966, %v2315
        %v2376 = vadd.f32 %v1967, %v2320
        %v2377 = vadd.f32 %v1968, %v2323
        %v2378 = vadd.f32 %v1969, %v2328
        %v2379 = vadd.f32 %v1970, %v2331
        %v2380 = vadd.f32 %v1971, %v2336
        %v2381 = vadd.f32 %v1972, %v2339
        %v2382 = vadd.f32 %v1973, %v2344
        %v2383 = vadd.f32 %v1974, %v2347
        %v2384 = vadd.f32 %v1975, %v2352
        %v2385 = vadd.f32 %v1976, %v2355
        %2386 = vst [vmem:[#allocation2] sm:$0xff] %v2358
        %2387 = vst [vmem:[#allocation2 + $0x8] sm:$0xff] %v2359
        %2388 = vst [vmem:[#allocation2 + $0x10] sm:$0xff] %v2360
        %2389 = vst [vmem:[#allocation2 + $0x18] sm:$0xff] %v2361
        %2390 = vst [vmem:[#allocation2 + $0x20] sm:$0xff] %v2362
        %2391 = vst [vmem:[#allocation2 + $0x28] sm:$0xff] %v2363
        %2392 = vst [vmem:[#allocation2 + $0x30] sm:$0xff] %v2364
        %2393 = vst [vmem:[#allocation2 + $0x38] sm:$0xff] %v2365
        %2394 = vst [vmem:[#allocation2 + $0x40] sm:$0xff] %v2366
        %2395 = vst [vmem:[#allocation2 + $0x48] sm:$0xff] %v2367
        %2396 = vst [vmem:[#allocation2 + $0x50] sm:$0xff] %v2368
        %2397 = vst [vmem:[#allocation2 + $0x58] sm:$0xff] %v2369
        %2398 = vst [vmem:[#allocation2 + $0x60] sm:$0xff] %v2370
        %2399 = vst [vmem:[#allocation2 + $0x68] sm:$0xff] %v2371
        %2400 = vst [vmem:[#allocation2 + $0x70] sm:$0xff] %v2372
        %2401 = vst [vmem:[#allocation2 + $0x78] sm:$0xff] %v2373
        %2402 = vst [vmem:[#allocation2 + $0x80] sm:$0xff] %v2374
        %2403 = vst [vmem:[#allocation2 + $0x88] sm:$0xff] %v2375
        %2404 = vst [vmem:[#allocation2 + $0x90] sm:$0xff] %v2376
        %2405 = vst [vmem:[#allocation2 + $0x98] sm:$0xff] %v2377
        %2406 = vst [vmem:[#allocation2 + $0xa0] sm:$0xff] %v2378
        %2407 = vst [vmem:[#allocation2 + $0xa8] sm:$0xff] %v2379
        %2408 = vst [vmem:[#allocation2 + $0xb0] sm:$0xff] %v2380
        %2409 = vst [vmem:[#allocation2 + $0xb8] sm:$0xff] %v2381
        %2410 = vst [vmem:[#allocation2 + $0xc0] sm:$0xff] %v2382
        %2411 = vst [vmem:[#allocation2 + $0xc8] sm:$0xff] %v2383
        %2412 = vst [vmem:[#allocation2 + $0xd0] sm:$0xff] %v2384
        %2413 = vst [vmem:[#allocation2 + $0xd8] sm:$0xff] %v2385
        %v2414 = vld [vmem:[%s238 + $0x8] sm:$0xe]
        %v2415 = vld [vmem:[%s238 + $0xc] sm:$0xf]
        %v2416 = vld [vmem:[%s238 + $0x10] sm:$0xf]
        %v2417 = vld [vmem:[%s238 + $0x14] sm:$0xf]
        %v2418 = vld [vmem:[%s238 + $0x18] sm:$0xf]
        %v2419 = vld [vmem:[%s238 + $0x1c] sm:$0xf]
        %v2420 = vld [vmem:[%s238 + $0x20] sm:$0xf]
        %v2421 = vld [vmem:[%s238 + $0x24] sm:$0xf]
        %v2422 = vld [vmem:[%s238 + $0x28] sm:$0xf]
        %v2423 = vld [vmem:[%s238 + $0x2c] sm:$0xf]
        %v2424 = vld [vmem:[%s238 + $0x30] sm:$0xf]
        %v2425 = vld [vmem:[%s238 + $0x34] sm:$0xf]
        %v2426 = vld [vmem:[%s238 + $0x38] sm:$0xf]
        %v2427 = vld [vmem:[%s238 + $0x3c] sm:$0xf]
        %v2428 = vld [vmem:[%s238 + $0x40] sm:$0xf]
        %v2429 = vld [vmem:[%s238 + $0x44] sm:$0xf]
        %v2430 = vld [vmem:[%s238 + $0x48] sm:$0xf]
        %v2431 = vld [vmem:[%s238 + $0x4c] sm:$0xf]
        %v2432 = vld [vmem:[%s238 + $0x50] sm:$0xf]
        %v2433 = vld [vmem:[%s238 + $0x54] sm:$0xf]
        %v2434 = vld [vmem:[%s238 + $0x58] sm:$0xf]
        %v2435 = vld [vmem:[%s238 + $0x5c] sm:$0xf]
        %v2436 = vld [vmem:[%s238 + $0x60] sm:$0xf]
        %v2437 = vld [vmem:[%s238 + $0x64] sm:$0xf]
        %v2438 = vld [vmem:[%s238 + $0x68] sm:$0xf]
        %v2439 = vld [vmem:[%s238 + $0x6c] sm:$0xf]
        %v2440 = vld [vmem:[%s238 + $0x70] sm:$0xf]
        %v2441 = vld [vmem:[%s238 + $0x74] sm:$0xf]
        %v2442 = vld [vmem:[%s238 + $0x78] sm:$0x1]
        %v2443 = vld [vmem:[#allocation2] sm:$0xff]
        %v2444 = vld [vmem:[#allocation2 + $0x8] sm:$0xff]
        %v2445 = vld [vmem:[#allocation2 + $0x10] sm:$0xff]
        %v2446 = vld [vmem:[#allocation2 + $0x18] sm:$0xff]
        %v2447 = vld [vmem:[#allocation2 + $0x20] sm:$0xff]
        %v2448 = vld [vmem:[#allocation2 + $0x28] sm:$0xff]
        %v2449 = vld [vmem:[#allocation2 + $0x30] sm:$0xff]
        %v2450 = vld [vmem:[#allocation2 + $0x38] sm:$0xff]
        %v2451 = vld [vmem:[#allocation2 + $0x40] sm:$0xff]
        %v2452 = vld [vmem:[#allocation2 + $0x48] sm:$0xff]
        %v2453 = vld [vmem:[#allocation2 + $0x50] sm:$0xff]
        %v2454 = vld [vmem:[#allocation2 + $0x58] sm:$0xff]
        %v2455 = vld [vmem:[#allocation2 + $0x60] sm:$0xff]
        %v2456 = vld [vmem:[#allocation2 + $0x68] sm:$0xff]
        %v2457 = vld [vmem:[#allocation2 + $0x70] sm:$0xff]
        %v2458 = vld [vmem:[#allocation2 + $0x78] sm:$0xff]
        %v2459 = vld [vmem:[#allocation2 + $0x80] sm:$0xff]
        %v2460 = vld [vmem:[#allocation2 + $0x88] sm:$0xff]
        %v2461 = vld [vmem:[#allocation2 + $0x90] sm:$0xff]
        %v2462 = vld [vmem:[#allocation2 + $0x98] sm:$0xff]
        %v2463 = vld [vmem:[#allocation2 + $0xa0] sm:$0xff]
        %v2464 = vld [vmem:[#allocation2 + $0xa8] sm:$0xff]
        %v2465 = vld [vmem:[#allocation2 + $0xb0] sm:$0xff]
        %v2466 = vld [vmem:[#allocation2 + $0xb8] sm:$0xff]
        %v2467 = vld [vmem:[#allocation2 + $0xc0] sm:$0xff]
        %v2468 = vld [vmem:[#allocation2 + $0xc8] sm:$0xff]
        %v2469 = vld [vmem:[#allocation2 + $0xd0] sm:$0xff]
        %v2470 = vld [vmem:[#allocation2 + $0xd8] sm:$0xff]
        %s2471 = scalar_lea.vmem %s1, 10
        %v2472 = vld [vmem:[%s2471] sm:$0x3]
        %v2502 = vunpack.c.l.b16 %v2414
        %v2503 = vunpack.c.l.b16 %v2415
        %v2504 = vunpack.c.l.b16 %v2416
        %v2505 = vunpack.c.l.b16 %v2417
        %v2506 = vunpack.c.l.b16 %v2418
        %v2507 = vunpack.c.l.b16 %v2419
        %v2508 = vunpack.c.l.b16 %v2420
        %v2509 = vunpack.c.l.b16 %v2421
        %v2510 = vunpack.c.l.b16 %v2422
        %v2511 = vunpack.c.l.b16 %v2423
        %v2512 = vunpack.c.l.b16 %v2424
        %v2513 = vunpack.c.l.b16 %v2425
        %v2514 = vunpack.c.l.b16 %v2426
        %v2515 = vunpack.c.l.b16 %v2427
        %v2516 = vunpack.c.l.b16 %v2428
        %v2517 = vunpack.c.l.b16 %v2429
        %v2518 = vunpack.c.l.b16 %v2430
        %v2519 = vunpack.c.l.b16 %v2431
        %v2520 = vunpack.c.l.b16 %v2432
        %v2521 = vunpack.c.l.b16 %v2433
        %v2522 = vunpack.c.l.b16 %v2434
        %v2523 = vunpack.c.l.b16 %v2435
        %v2524 = vunpack.c.l.b16 %v2436
        %v2525 = vunpack.c.l.b16 %v2437
        %v2526 = vunpack.c.l.b16 %v2438
        %v2527 = vunpack.c.l.b16 %v2439
        %v2528 = vunpack.c.l.b16 %v2440
        %v2529 = vunpack.c.l.b16 %v2441
        %v2530 = vunpack.c.l.b16 %v2442
        %v2531 = vpack.c.b16 %v2503, %v2502
        %v2532 = vpack.c.b16 %v2505, %v2504
        %v2533 = vpack.c.b16 %v2507, %v2506
        %v2534 = vpack.c.b16 %v2509, %v2508
        %v2535 = vpack.c.b16 %v2511, %v2510
        %v2536 = vpack.c.b16 %v2513, %v2512
        %v2537 = vpack.c.b16 %v2515, %v2514
        %v2538 = vpack.c.b16 %v2517, %v2516
        %v2539 = vpack.c.b16 %v2519, %v2518
        %v2540 = vpack.c.b16 %v2521, %v2520
        %v2541 = vpack.c.b16 %v2523, %v2522
        %v2542 = vpack.c.b16 %v2525, %v2524
        %v2543 = vpack.c.b16 %v2527, %v2526
        %v2544 = vpack.c.b16 %v2529, %v2528
        %v2545 = vpack.c.b16 %v2530, %v2530
        %v2546 = vrot.slane %v2531, 1
        %v2547 = vrot.slane %v2532, 1
        %v2548 = vsel %vm1270, %v2546, %v2547
        %v2549 = vrot.slane %v2533, 1
        %v2550 = vsel %vm1270, %v2547, %v2549
        %v2551 = vrot.slane %v2534, 1
        %v2552 = vsel %vm1270, %v2549, %v2551
        %v2553 = vrot.slane %v2535, 1
        %v2554 = vsel %vm1270, %v2551, %v2553
        %v2555 = vrot.slane %v2536, 1
        %v2556 = vsel %vm1270, %v2553, %v2555
        %v2557 = vrot.slane %v2537, 1
        %v2558 = vsel %vm1270, %v2555, %v2557
        %v2559 = vrot.slane %v2538, 1
        %v2560 = vsel %vm1270, %v2557, %v2559
        %v2561 = vrot.slane %v2539, 1
        %v2562 = vsel %vm1270, %v2559, %v2561
        %v2563 = vrot.slane %v2540, 1
        %v2564 = vsel %vm1270, %v2561, %v2563
        %v2565 = vrot.slane %v2541, 1
        %v2566 = vsel %vm1270, %v2563, %v2565
        %v2567 = vrot.slane %v2542, 1
        %v2568 = vsel %vm1270, %v2565, %v2567
        %v2569 = vrot.slane %v2543, 1
        %v2570 = vsel %vm1270, %v2567, %v2569
        %v2571 = vrot.slane %v2544, 1
        %v2572 = vsel %vm1270, %v2569, %v2571
        %v2573 = vrot.slane %v2545, 1
        %v2574 = vsel %vm1270, %v2571, %v2573
        %v2576 = vsel %vm395, %v2548, 0
        %v2579 = vsel %vm395, %v2550, 0
        %v2582 = vsel %vm395, %v2552, 0
        %v2585 = vsel %vm395, %v2554, 0
        %v2588 = vsel %vm395, %v2556, 0
        %v2591 = vsel %vm395, %v2558, 0
        %v2594 = vsel %vm395, %v2560, 0
        %v2597 = vsel %vm395, %v2562, 0
        %v2600 = vsel %vm395, %v2564, 0
        %v2603 = vsel %vm395, %v2566, 0
        %v2606 = vsel %vm395, %v2568, 0
        %v2609 = vsel %vm395, %v2570, 0
        %v2612 = vsel %vm395, %v2572, 0
        %v2615 = vsel %vm395, %v2574, 0
        %v2618 = vsel %vm438, %v2472, 0
        %2620 = vmatprep.subr.bf16.mxu0 0
        %2621 = vmatpush1.bf16.msra.mxu0 %v2618
        %2622 = vmatprep.subr.bf16.mxu0 0
        %2623 = vmatpush1.bf16.msra.mxu0 0
        %2624 = vmatprep.subr.bf16.mxu0 0
        %2625 = vmatpush1.bf16.msra.mxu0 0
        %2626 = vmatprep.subr.bf16.mxu0 0
        %2627 = vmatpush1.bf16.msra.mxu0 0
        %2628 = vmatprep.subr.bf16.mxu0 0
        %2629 = vmatpush1.bf16.msra.mxu0 0
        %2630 = vmatprep.subr.bf16.mxu0 0
        %2631 = vmatpush1.bf16.msra.mxu0 0
        %2632 = vmatprep.subr.bf16.mxu0 0
        %2633 = vmatpush1.bf16.msra.mxu0 0
        %2634 = vmatprep.subr.bf16.mxu0 0
        %2635 = vmatpush1.bf16.msra.mxu0 0
        %2636 = vmatprep.subr.bf16.mxu0 0
        %2637 = vmatpush1.bf16.msra.mxu0 0
        %2638 = vmatprep.subr.bf16.mxu0 0
        %2639 = vmatpush1.bf16.msra.mxu0 0
        %2640 = vmatprep.subr.bf16.mxu0 0
        %2641 = vmatpush1.bf16.msra.mxu0 0
        %2642 = vmatprep.subr.bf16.mxu0 0
        %2643 = vmatpush1.bf16.msra.mxu0 0
        %2644 = vmatprep.subr.bf16.mxu0 0
        %2645 = vmatpush1.bf16.msra.mxu0 0
        %2646 = vmatprep.subr.bf16.mxu0 0
        %2647 = vmatpush1.bf16.msra.mxu0 0
        %2648 = vmatprep.subr.bf16.mxu0 0
        %2649 = vmatpush1.bf16.msra.mxu0 0
        %2650 = vmatprep.subr.bf16.mxu0 0
        %2651 = vmatpush1.bf16.msra.mxu0 0
        %2652 = vmatprep.mubr.bf16.mxu0 0
        %2653 = vmatmul.mubr.bf16.gmra.mrb[0].mxu0 %v2576
        %v2654 = vpop.f32.mrb[0].mxu0
        %v2655 = vadd.f32 0.0, %v2654
        %v2656 = vpop.f32.mrb[0].mxu0
        %v2657 = vpop.f32.mrb[0].mxu0
        %v2658 = vadd.f32 0.0, %v2657
        %v2659 = vpop.f32.mrb[0].mxu0
        %2660 = vmatprep.mubr.bf16.mxu0 0
        %2661 = vmatmul.mubr.bf16.gmra.mrb[0].mxu0 %v2579
        %v2662 = vpop.f32.mrb[0].mxu0
        %v2663 = vadd.f32 0.0, %v2662
        %v2664 = vpop.f32.mrb[0].mxu0
        %v2665 = vpop.f32.mrb[0].mxu0
        %v2666 = vadd.f32 0.0, %v2665
        %v2667 = vpop.f32.mrb[0].mxu0
        %2668 = vmatprep.mubr.bf16.mxu0 0
        %2669 = vmatmul.mubr.bf16.gmra.mrb[0].mxu0 %v2582
        %v2670 = vpop.f32.mrb[0].mxu0
        %v2671 = vadd.f32 0.0, %v2670
        %v2672 = vpop.f32.mrb[0].mxu0
        %v2673 = vpop.f32.mrb[0].mxu0
        %v2674 = vadd.f32 0.0, %v2673
        %v2675 = vpop.f32.mrb[0].mxu0
        %2676 = vmatprep.mubr.bf16.mxu0 0
        %2677 = vmatmul.mubr.bf16.gmra.mrb[0].mxu0 %v2585
        %v2678 = vpop.f32.mrb[0].mxu0
        %v2679 = vadd.f32 0.0, %v2678
        %v2680 = vpop.f32.mrb[0].mxu0
        %v2681 = vpop.f32.mrb[0].mxu0
        %v2682 = vadd.f32 0.0, %v2681
        %v2683 = vpop.f32.mrb[0].mxu0
        %2684 = vmatprep.mubr.bf16.mxu0 0
        %2685 = vmatmul.mubr.bf16.gmra.mrb[0].mxu0 %v2588
        %v2686 = vpop.f32.mrb[0].mxu0
        %v2687 = vadd.f32 0.0, %v2686
        %v2688 = vpop.f32.mrb[0].mxu0
        %v2689 = vpop.f32.mrb[0].mxu0
        %v2690 = vadd.f32 0.0, %v2689
        %v2691 = vpop.f32.mrb[0].mxu0
        %2692 = vmatprep.mubr.bf16.mxu0 0
        %2693 = vmatmul.mubr.bf16.gmra.mrb[0].mxu0 %v2591
        %v2694 = vpop.f32.mrb[0].mxu0
        %v2695 = vadd.f32 0.0, %v2694
        %v2696 = vpop.f32.mrb[0].mxu0
        %v2697 = vpop.f32.mrb[0].mxu0
        %v2698 = vadd.f32 0.0, %v2697
        %v2699 = vpop.f32.mrb[0].mxu0
        %2700 = vmatprep.mubr.bf16.mxu0 0
        %2701 = vmatmul.mubr.bf16.gmra.mrb[0].mxu0 %v2594
        %v2702 = vpop.f32.mrb[0].mxu0
        %v2703 = vadd.f32 0.0, %v2702
        %v2704 = vpop.f32.mrb[0].mxu0
        %v2705 = vpop.f32.mrb[0].mxu0
        %v2706 = vadd.f32 0.0, %v2705
        %v2707 = vpop.f32.mrb[0].mxu0
        %2708 = vmatprep.mubr.bf16.mxu0 0
        %2709 = vmatmul.mubr.bf16.gmra.mrb[0].mxu0 %v2597
        %v2710 = vpop.f32.mrb[0].mxu0
        %v2711 = vadd.f32 0.0, %v2710
        %v2712 = vpop.f32.mrb[0].mxu0
        %v2713 = vpop.f32.mrb[0].mxu0
        %v2714 = vadd.f32 0.0, %v2713
        %v2715 = vpop.f32.mrb[0].mxu0
        %2716 = vmatprep.mubr.bf16.mxu0 0
        %2717 = vmatmul.mubr.bf16.gmra.mrb[0].mxu0 %v2600
        %v2718 = vpop.f32.mrb[0].mxu0
        %v2719 = vadd.f32 0.0, %v2718
        %v2720 = vpop.f32.mrb[0].mxu0
        %v2721 = vpop.f32.mrb[0].mxu0
        %v2722 = vadd.f32 0.0, %v2721
        %v2723 = vpop.f32.mrb[0].mxu0
        %2724 = vmatprep.mubr.bf16.mxu0 0
        %2725 = vmatmul.mubr.bf16.gmra.mrb[0].mxu0 %v2603
        %v2726 = vpop.f32.mrb[0].mxu0
        %v2727 = vadd.f32 0.0, %v2726
        %v2728 = vpop.f32.mrb[0].mxu0
        %v2729 = vpop.f32.mrb[0].mxu0
        %v2730 = vadd.f32 0.0, %v2729
        %v2731 = vpop.f32.mrb[0].mxu0
        %2732 = vmatprep.mubr.bf16.mxu0 0
        %2733 = vmatmul.mubr.bf16.gmra.mrb[0].mxu0 %v2606
        %v2734 = vpop.f32.mrb[0].mxu0
        %v2735 = vadd.f32 0.0, %v2734
        %v2736 = vpop.f32.mrb[0].mxu0
        %v2737 = vpop.f32.mrb[0].mxu0
        %v2738 = vadd.f32 0.0, %v2737
        %v2739 = vpop.f32.mrb[0].mxu0
        %2740 = vmatprep.mubr.bf16.mxu0 0
        %2741 = vmatmul.mubr.bf16.gmra.mrb[0].mxu0 %v2609
        %v2742 = vpop.f32.mrb[0].mxu0
        %v2743 = vadd.f32 0.0, %v2742
        %v2744 = vpop.f32.mrb[0].mxu0
        %v2745 = vpop.f32.mrb[0].mxu0
        %v2746 = vadd.f32 0.0, %v2745
        %v2747 = vpop.f32.mrb[0].mxu0
        %2748 = vmatprep.mubr.bf16.mxu0 0
        %2749 = vmatmul.mubr.bf16.gmra.mrb[0].mxu0 %v2612
        %v2750 = vpop.f32.mrb[0].mxu0
        %v2751 = vadd.f32 0.0, %v2750
        %v2752 = vpop.f32.mrb[0].mxu0
        %v2753 = vpop.f32.mrb[0].mxu0
        %v2754 = vadd.f32 0.0, %v2753
        %v2755 = vpop.f32.mrb[0].mxu0
        %2756 = vmatprep.mubr.bf16.mxu0 0
        %2757 = vmatmul.mubr.bf16.gmra.mrb[0].mxu0 %v2615
        %v2758 = vpop.f32.mrb[0].mxu0
        %v2759 = vadd.f32 0.0, %v2758
        %v2760 = vpop.f32.mrb[0].mxu0
        %v2761 = vpop.f32.mrb[0].mxu0
        %v2762 = vadd.f32 0.0, %v2761
        %v2763 = vpop.f32.mrb[0].mxu0
        %2764 = vdwg.mxu0
        %v2765 = vadd.f32 %v2443, %v2655
        %v2766 = vadd.f32 %v2444, %v2658
        %v2767 = vadd.f32 %v2445, %v2663
        %v2768 = vadd.f32 %v2446, %v2666
        %v2769 = vadd.f32 %v2447, %v2671
        %v2770 = vadd.f32 %v2448, %v2674
        %v2771 = vadd.f32 %v2449, %v2679
        %v2772 = vadd.f32 %v2450, %v2682
        %v2773 = vadd.f32 %v2451, %v2687
        %v2774 = vadd.f32 %v2452, %v2690
        %v2775 = vadd.f32 %v2453, %v2695
        %v2776 = vadd.f32 %v2454, %v2698
        %v2777 = vadd.f32 %v2455, %v2703
        %v2778 = vadd.f32 %v2456, %v2706
        %v2779 = vadd.f32 %v2457, %v2711
        %v2780 = vadd.f32 %v2458, %v2714
        %v2781 = vadd.f32 %v2459, %v2719
        %v2782 = vadd.f32 %v2460, %v2722
        %v2783 = vadd.f32 %v2461, %v2727
        %v2784 = vadd.f32 %v2462, %v2730
        %v2785 = vadd.f32 %v2463, %v2735
        %v2786 = vadd.f32 %v2464, %v2738
        %v2787 = vadd.f32 %v2465, %v2743
        %v2788 = vadd.f32 %v2466, %v2746
        %v2789 = vadd.f32 %v2467, %v2751
        %v2790 = vadd.f32 %v2468, %v2754
        %v2791 = vadd.f32 %v2469, %v2759
        %v2792 = vadd.f32 %v2470, %v2762
        %2793 = vst [vmem:[#allocation2] sm:$0xff] %v2765
        %2794 = vst [vmem:[#allocation2 + $0x8] sm:$0xff] %v2766
        %2795 = vst [vmem:[#allocation2 + $0x10] sm:$0xff] %v2767
        %2796 = vst [vmem:[#allocation2 + $0x18] sm:$0xff] %v2768
        %2797 = vst [vmem:[#allocation2 + $0x20] sm:$0xff] %v2769
        %2798 = vst [vmem:[#allocation2 + $0x28] sm:$0xff] %v2770
        %2799 = vst [vmem:[#allocation2 + $0x30] sm:$0xff] %v2771
        %2800 = vst [vmem:[#allocation2 + $0x38] sm:$0xff] %v2772
        %2801 = vst [vmem:[#allocation2 + $0x40] sm:$0xff] %v2773
        %2802 = vst [vmem:[#allocation2 + $0x48] sm:$0xff] %v2774
        %2803 = vst [vmem:[#allocation2 + $0x50] sm:$0xff] %v2775
        %2804 = vst [vmem:[#allocation2 + $0x58] sm:$0xff] %v2776
        %2805 = vst [vmem:[#allocation2 + $0x60] sm:$0xff] %v2777
        %2806 = vst [vmem:[#allocation2 + $0x68] sm:$0xff] %v2778
        %2807 = vst [vmem:[#allocation2 + $0x70] sm:$0xff] %v2779
        %2808 = vst [vmem:[#allocation2 + $0x78] sm:$0xff] %v2780
        %2809 = vst [vmem:[#allocation2 + $0x80] sm:$0xff] %v2781
        %2810 = vst [vmem:[#allocation2 + $0x88] sm:$0xff] %v2782
        %2811 = vst [vmem:[#allocation2 + $0x90] sm:$0xff] %v2783
        %2812 = vst [vmem:[#allocation2 + $0x98] sm:$0xff] %v2784
        %2813 = vst [vmem:[#allocation2 + $0xa0] sm:$0xff] %v2785
        %2814 = vst [vmem:[#allocation2 + $0xa8] sm:$0xff] %v2786
        %2815 = vst [vmem:[#allocation2 + $0xb0] sm:$0xff] %v2787
        %2816 = vst [vmem:[#allocation2 + $0xb8] sm:$0xff] %v2788
        %2817 = vst [vmem:[#allocation2 + $0xc0] sm:$0xff] %v2789
        %2818 = vst [vmem:[#allocation2 + $0xc8] sm:$0xff] %v2790
        %2819 = vst [vmem:[#allocation2 + $0xd0] sm:$0xff] %v2791
        %2820 = vst [vmem:[#allocation2 + $0xd8] sm:$0xff] %v2792
        %v2821 = vld [vmem:[%s238 + $0x10] sm:$0xf]
        %v2822 = vld [vmem:[%s238 + $0x14] sm:$0xf]
        %v2823 = vld [vmem:[%s238 + $0x18] sm:$0xf]
        %v2824 = vld [vmem:[%s238 + $0x1c] sm:$0xf]
        %v2825 = vld [vmem:[%s238 + $0x20] sm:$0xf]
        %v2826 = vld [vmem:[%s238 + $0x24] sm:$0xf]
        %v2827 = vld [vmem:[%s238 + $0x28] sm:$0xf]
        %v2828 = vld [vmem:[%s238 + $0x2c] sm:$0xf]
        %v2829 = vld [vmem:[%s238 + $0x30] sm:$0xf]
        %v2830 = vld [vmem:[%s238 + $0x34] sm:$0xf]
        %v2831 = vld [vmem:[%s238 + $0x38] sm:$0xf]
        %v2832 = vld [vmem:[%s238 + $0x3c] sm:$0xf]
        %v2833 = vld [vmem:[%s238 + $0x40] sm:$0xf]
        %v2834 = vld [vmem:[%s238 + $0x44] sm:$0xf]
        %v2835 = vld [vmem:[%s238 + $0x48] sm:$0xf]
        %v2836 = vld [vmem:[%s238 + $0x4c] sm:$0xf]
        %v2837 = vld [vmem:[%s238 + $0x50] sm:$0xf]
        %v2838 = vld [vmem:[%s238 + $0x54] sm:$0xf]
        %v2839 = vld [vmem:[%s238 + $0x58] sm:$0xf]
        %v2840 = vld [vmem:[%s238 + $0x5c] sm:$0xf]
        %v2841 = vld [vmem:[%s238 + $0x60] sm:$0xf]
        %v2842 = vld [vmem:[%s238 + $0x64] sm:$0xf]
        %v2843 = vld [vmem:[%s238 + $0x68] sm:$0xf]
        %v2844 = vld [vmem:[%s238 + $0x6c] sm:$0xf]
        %v2845 = vld [vmem:[%s238 + $0x70] sm:$0xf]
        %v2846 = vld [vmem:[%s238 + $0x74] sm:$0xf]
        %v2847 = vld [vmem:[%s238 + $0x78] sm:$0xf]
        %v2848 = vld [vmem:[%s238 + $0x7c] sm:$0xf]
        %v2849 = vld [vmem:[#allocation2] sm:$0xff]
        %v2850 = vld [vmem:[#allocation2 + $0x8] sm:$0xff]
        %v2851 = vld [vmem:[#allocation2 + $0x10] sm:$0xff]
        %v2852 = vld [vmem:[#allocation2 + $0x18] sm:$0xff]
        %v2853 = vld [vmem:[#allocation2 + $0x20] sm:$0xff]
        %v2854 = vld [vmem:[#allocation2 + $0x28] sm:$0xff]
        %v2855 = vld [vmem:[#allocation2 + $0x30] sm:$0xff]
        %v2856 = vld [vmem:[#allocation2 + $0x38] sm:$0xff]
        %v2857 = vld [vmem:[#allocation2 + $0x40] sm:$0xff]
        %v2858 = vld [vmem:[#allocation2 + $0x48] sm:$0xff]
        %v2859 = vld [vmem:[#allocation2 + $0x50] sm:$0xff]
        %v2860 = vld [vmem:[#allocation2 + $0x58] sm:$0xff]
        %v2861 = vld [vmem:[#allocation2 + $0x60] sm:$0xff]
        %v2862 = vld [vmem:[#allocation2 + $0x68] sm:$0xff]
        %v2863 = vld [vmem:[#allocation2 + $0x70] sm:$0xff]
        %v2864 = vld [vmem:[#allocation2 + $0x78] sm:$0xff]
        %v2865 = vld [vmem:[#allocation2 + $0x80] sm:$0xff]
        %v2866 = vld [vmem:[#allocation2 + $0x88] sm:$0xff]
        %v2867 = vld [vmem:[#allocation2 + $0x90] sm:$0xff]
        %v2868 = vld [vmem:[#allocation2 + $0x98] sm:$0xff]
        %v2869 = vld [vmem:[#allocation2 + $0xa0] sm:$0xff]
        %v2870 = vld [vmem:[#allocation2 + $0xa8] sm:$0xff]
        %v2871 = vld [vmem:[#allocation2 + $0xb0] sm:$0xff]
        %v2872 = vld [vmem:[#allocation2 + $0xb8] sm:$0xff]
        %v2873 = vld [vmem:[#allocation2 + $0xc0] sm:$0xff]
        %v2874 = vld [vmem:[#allocation2 + $0xc8] sm:$0xff]
        %v2875 = vld [vmem:[#allocation2 + $0xd0] sm:$0xff]
        %v2876 = vld [vmem:[#allocation2 + $0xd8] sm:$0xff]
        %s2877 = scalar_lea.vmem %s1, 12
        %v2878 = vld [vmem:[%s2877] sm:$0x3]
        %v2907 = vunpack.c.l.b16 %v2821
        %v2908 = vunpack.c.l.b16 %v2822
        %v2909 = vunpack.c.l.b16 %v2823
        %v2910 = vunpack.c.l.b16 %v2824
        %v2911 = vunpack.c.l.b16 %v2825
        %v2912 = vunpack.c.l.b16 %v2826
        %v2913 = vunpack.c.l.b16 %v2827
        %v2914 = vunpack.c.l.b16 %v2828
        %v2915 = vunpack.c.l.b16 %v2829
        %v2916 = vunpack.c.l.b16 %v2830
        %v2917 = vunpack.c.l.b16 %v2831
        %v2918 = vunpack.c.l.b16 %v2832
        %v2919 = vunpack.c.l.b16 %v2833
        %v2920 = vunpack.c.l.b16 %v2834
        %v2921 = vunpack.c.l.b16 %v2835
        %v2922 = vunpack.c.l.b16 %v2836
        %v2923 = vunpack.c.l.b16 %v2837
        %v2924 = vunpack.c.l.b16 %v2838
        %v2925 = vunpack.c.l.b16 %v2839
        %v2926 = vunpack.c.l.b16 %v2840
        %v2927 = vunpack.c.l.b16 %v2841
        %v2928 = vunpack.c.l.b16 %v2842
        %v2929 = vunpack.c.l.b16 %v2843
        %v2930 = vunpack.c.l.b16 %v2844
        %v2931 = vunpack.c.l.b16 %v2845
        %v2932 = vunpack.c.l.b16 %v2846
        %v2933 = vunpack.c.l.b16 %v2847
        %v2934 = vunpack.c.l.b16 %v2848
        %v2935 = vpack.c.b16 %v2908, %v2907
        %v2936 = vpack.c.b16 %v2910, %v2909
        %v2937 = vpack.c.b16 %v2912, %v2911
        %v2938 = vpack.c.b16 %v2914, %v2913
        %v2939 = vpack.c.b16 %v2916, %v2915
        %v2940 = vpack.c.b16 %v2918, %v2917
        %v2941 = vpack.c.b16 %v2920, %v2919
        %v2942 = vpack.c.b16 %v2922, %v2921
        %v2943 = vpack.c.b16 %v2924, %v2923
        %v2944 = vpack.c.b16 %v2926, %v2925
        %v2945 = vpack.c.b16 %v2928, %v2927
        %v2946 = vpack.c.b16 %v2930, %v2929
        %v2947 = vpack.c.b16 %v2932, %v2931
        %v2948 = vpack.c.b16 %v2934, %v2933
        %v2950 = vsel %vm395, %v2935, 0
        %v2953 = vsel %vm395, %v2936, 0
        %v2956 = vsel %vm395, %v2937, 0
        %v2959 = vsel %vm395, %v2938, 0
        %v2962 = vsel %vm395, %v2939, 0
        %v2965 = vsel %vm395, %v2940, 0
        %v2968 = vsel %vm395, %v2941, 0
        %v2971 = vsel %vm395, %v2942, 0
        %v2974 = vsel %vm395, %v2943, 0
        %v2977 = vsel %vm395, %v2944, 0
        %v2980 = vsel %vm395, %v2945, 0
        %v2983 = vsel %vm395, %v2946, 0
        %v2986 = vsel %vm395, %v2947, 0
        %v2989 = vsel %vm395, %v2948, 0
        %v2992 = vsel %vm438, %v2878, 0
        %2994 = vmatprep.subr.bf16.mxu0 0
        %2995 = vmatpush1.bf16.msra.mxu0 %v2992
        %2996 = vmatprep.subr.bf16.mxu0 0
        %2997 = vmatpush1.bf16.msra.mxu0 0
        %2998 = vmatprep.subr.bf16.mxu0 0
        %2999 = vmatpush1.bf16.msra.mxu0 0
        %3000 = vmatprep.subr.bf16.mxu0 0
        %3001 = vmatpush1.bf16.msra.mxu0 0
        %3002 = vmatprep.subr.bf16.mxu0 0
        %3003 = vmatpush1.bf16.msra.mxu0 0
        %3004 = vmatprep.subr.bf16.mxu0 0
        %3005 = vmatpush1.bf16.msra.mxu0 0
        %3006 = vmatprep.subr.bf16.mxu0 0
        %3007 = vmatpush1.bf16.msra.mxu0 0
        %3008 = vmatprep.subr.bf16.mxu0 0
        %3009 = vmatpush1.bf16.msra.mxu0 0
        %3010 = vmatprep.subr.bf16.mxu0 0
        %3011 = vmatpush1.bf16.msra.mxu0 0
        %3012 = vmatprep.subr.bf16.mxu0 0
        %3013 = vmatpush1.bf16.msra.mxu0 0
        %3014 = vmatprep.subr.bf16.mxu0 0
        %3015 = vmatpush1.bf16.msra.mxu0 0
        %3016 = vmatprep.subr.bf16.mxu0 0
        %3017 = vmatpush1.bf16.msra.mxu0 0
        %3018 = vmatprep.subr.bf16.mxu0 0
        %3019 = vmatpush1.bf16.msra.mxu0 0
        %3020 = vmatprep.subr.bf16.mxu0 0
        %3021 = vmatpush1.bf16.msra.mxu0 0
        %3022 = vmatprep.subr.bf16.mxu0 0
        %3023 = vmatpush1.bf16.msra.mxu0 0
        %3024 = vmatprep.subr.bf16.mxu0 0
        %3025 = vmatpush1.bf16.msra.mxu0 0
        %3026 = vmatprep.mubr.bf16.mxu0 0
        %3027 = vmatmul.mubr.bf16.gmra.mrb[0].mxu0 %v2950
        %v3028 = vpop.f32.mrb[0].mxu0
        %v3029 = vadd.f32 0.0, %v3028
        %v3030 = vpop.f32.mrb[0].mxu0
        %v3031 = vpop.f32.mrb[0].mxu0
        %v3032 = vadd.f32 0.0, %v3031
        %v3033 = vpop.f32.mrb[0].mxu0
        %3034 = vmatprep.mubr.bf16.mxu0 0
        %3035 = vmatmul.mubr.bf16.gmra.mrb[0].mxu0 %v2953
        %v3036 = vpop.f32.mrb[0].mxu0
        %v3037 = vadd.f32 0.0, %v3036
        %v3038 = vpop.f32.mrb[0].mxu0
        %v3039 = vpop.f32.mrb[0].mxu0
        %v3040 = vadd.f32 0.0, %v3039
        %v3041 = vpop.f32.mrb[0].mxu0
        %3042 = vmatprep.mubr.bf16.mxu0 0
        %3043 = vmatmul.mubr.bf16.gmra.mrb[0].mxu0 %v2956
        %v3044 = vpop.f32.mrb[0].mxu0
        %v3045 = vadd.f32 0.0, %v3044
        %v3046 = vpop.f32.mrb[0].mxu0
        %v3047 = vpop.f32.mrb[0].mxu0
        %v3048 = vadd.f32 0.0, %v3047
        %v3049 = vpop.f32.mrb[0].mxu0
        %3050 = vmatprep.mubr.bf16.mxu0 0
        %3051 = vmatmul.mubr.bf16.gmra.mrb[0].mxu0 %v2959
        %v3052 = vpop.f32.mrb[0].mxu0
        %v3053 = vadd.f32 0.0, %v3052
        %v3054 = vpop.f32.mrb[0].mxu0
        %v3055 = vpop.f32.mrb[0].mxu0
        %v3056 = vadd.f32 0.0, %v3055
        %v3057 = vpop.f32.mrb[0].mxu0
        %3058 = vmatprep.mubr.bf16.mxu0 0
        %3059 = vmatmul.mubr.bf16.gmra.mrb[0].mxu0 %v2962
        %v3060 = vpop.f32.mrb[0].mxu0
        %v3061 = vadd.f32 0.0, %v3060
        %v3062 = vpop.f32.mrb[0].mxu0
        %v3063 = vpop.f32.mrb[0].mxu0
        %v3064 = vadd.f32 0.0, %v3063
        %v3065 = vpop.f32.mrb[0].mxu0
        %3066 = vmatprep.mubr.bf16.mxu0 0
        %3067 = vmatmul.mubr.bf16.gmra.mrb[0].mxu0 %v2965
        %v3068 = vpop.f32.mrb[0].mxu0
        %v3069 = vadd.f32 0.0, %v3068
        %v3070 = vpop.f32.mrb[0].mxu0
        %v3071 = vpop.f32.mrb[0].mxu0
        %v3072 = vadd.f32 0.0, %v3071
        %v3073 = vpop.f32.mrb[0].mxu0
        %3074 = vmatprep.mubr.bf16.mxu0 0
        %3075 = vmatmul.mubr.bf16.gmra.mrb[0].mxu0 %v2968
        %v3076 = vpop.f32.mrb[0].mxu0
        %v3077 = vadd.f32 0.0, %v3076
        %v3078 = vpop.f32.mrb[0].mxu0
        %v3079 = vpop.f32.mrb[0].mxu0
        %v3080 = vadd.f32 0.0, %v3079
        %v3081 = vpop.f32.mrb[0].mxu0
        %3082 = vmatprep.mubr.bf16.mxu0 0
        %3083 = vmatmul.mubr.bf16.gmra.mrb[0].mxu0 %v2971
        %v3084 = vpop.f32.mrb[0].mxu0
        %v3085 = vadd.f32 0.0, %v3084
        %v3086 = vpop.f32.mrb[0].mxu0
        %v3087 = vpop.f32.mrb[0].mxu0
        %v3088 = vadd.f32 0.0, %v3087
        %v3089 = vpop.f32.mrb[0].mxu0
        %3090 = vmatprep.mubr.bf16.mxu0 0
        %3091 = vmatmul.mubr.bf16.gmra.mrb[0].mxu0 %v2974
        %v3092 = vpop.f32.mrb[0].mxu0
        %v3093 = vadd.f32 0.0, %v3092
        %v3094 = vpop.f32.mrb[0].mxu0
        %v3095 = vpop.f32.mrb[0].mxu0
        %v3096 = vadd.f32 0.0, %v3095
        %v3097 = vpop.f32.mrb[0].mxu0
        %3098 = vmatprep.mubr.bf16.mxu0 0
        %3099 = vmatmul.mubr.bf16.gmra.mrb[0].mxu0 %v2977
        %v3100 = vpop.f32.mrb[0].mxu0
        %v3101 = vadd.f32 0.0, %v3100
        %v3102 = vpop.f32.mrb[0].mxu0
        %v3103 = vpop.f32.mrb[0].mxu0
        %v3104 = vadd.f32 0.0, %v3103
        %v3105 = vpop.f32.mrb[0].mxu0
        %3106 = vmatprep.mubr.bf16.mxu0 0
        %3107 = vmatmul.mubr.bf16.gmra.mrb[0].mxu0 %v2980
        %v3108 = vpop.f32.mrb[0].mxu0
        %v3109 = vadd.f32 0.0, %v3108
        %v3110 = vpop.f32.mrb[0].mxu0
        %v3111 = vpop.f32.mrb[0].mxu0
        %v3112 = vadd.f32 0.0, %v3111
        %v3113 = vpop.f32.mrb[0].mxu0
        %3114 = vmatprep.mubr.bf16.mxu0 0
        %3115 = vmatmul.mubr.bf16.gmra.mrb[0].mxu0 %v2983
        %v3116 = vpop.f32.mrb[0].mxu0
        %v3117 = vadd.f32 0.0, %v3116
        %v3118 = vpop.f32.mrb[0].mxu0
        %v3119 = vpop.f32.mrb[0].mxu0
        %v3120 = vadd.f32 0.0, %v3119
        %v3121 = vpop.f32.mrb[0].mxu0
        %3122 = vmatprep.mubr.bf16.mxu0 0
        %3123 = vmatmul.mubr.bf16.gmra.mrb[0].mxu0 %v2986
        %v3124 = vpop.f32.mrb[0].mxu0
        %v3125 = vadd.f32 0.0, %v3124
        %v3126 = vpop.f32.mrb[0].mxu0
        %v3127 = vpop.f32.mrb[0].mxu0
        %v3128 = vadd.f32 0.0, %v3127
        %v3129 = vpop.f32.mrb[0].mxu0
        %3130 = vmatprep.mubr.bf16.mxu0 0
        %3131 = vmatmul.mubr.bf16.gmra.mrb[0].mxu0 %v2989
        %v3132 = vpop.f32.mrb[0].mxu0
        %v3133 = vadd.f32 0.0, %v3132
        %v3134 = vpop.f32.mrb[0].mxu0
        %v3135 = vpop.f32.mrb[0].mxu0
        %v3136 = vadd.f32 0.0, %v3135
        %v3137 = vpop.f32.mrb[0].mxu0
        %3138 = vdwg.mxu0
        %v3139 = vadd.f32 %v2849, %v3029
        %v3140 = vadd.f32 %v2850, %v3032
        %v3141 = vadd.f32 %v2851, %v3037
        %v3142 = vadd.f32 %v2852, %v3040
        %v3143 = vadd.f32 %v2853, %v3045
        %v3144 = vadd.f32 %v2854, %v3048
        %v3145 = vadd.f32 %v2855, %v3053
        %v3146 = vadd.f32 %v2856, %v3056
        %v3147 = vadd.f32 %v2857, %v3061
        %v3148 = vadd.f32 %v2858, %v3064
        %v3149 = vadd.f32 %v2859, %v3069
        %v3150 = vadd.f32 %v2860, %v3072
        %v3151 = vadd.f32 %v2861, %v3077
        %v3152 = vadd.f32 %v2862, %v3080
        %v3153 = vadd.f32 %v2863, %v3085
        %v3154 = vadd.f32 %v2864, %v3088
        %v3155 = vadd.f32 %v2865, %v3093
        %v3156 = vadd.f32 %v2866, %v3096
        %v3157 = vadd.f32 %v2867, %v3101
        %v3158 = vadd.f32 %v2868, %v3104
        %v3159 = vadd.f32 %v2869, %v3109
        %v3160 = vadd.f32 %v2870, %v3112
        %v3161 = vadd.f32 %v2871, %v3117
        %v3162 = vadd.f32 %v2872, %v3120
        %v3163 = vadd.f32 %v2873, %v3125
        %v3164 = vadd.f32 %v2874, %v3128
        %v3165 = vadd.f32 %v2875, %v3133
        %v3166 = vadd.f32 %v2876, %v3136
        %3167 = vst [vmem:[#allocation2] sm:$0xff] %v3139
        %3168 = vst [vmem:[#allocation2 + $0x8] sm:$0xff] %v3140
        %3169 = vst [vmem:[#allocation2 + $0x10] sm:$0xff] %v3141
        %3170 = vst [vmem:[#allocation2 + $0x18] sm:$0xff] %v3142
        %3171 = vst [vmem:[#allocation2 + $0x20] sm:$0xff] %v3143
        %3172 = vst [vmem:[#allocation2 + $0x28] sm:$0xff] %v3144
        %3173 = vst [vmem:[#allocation2 + $0x30] sm:$0xff] %v3145
        %3174 = vst [vmem:[#allocation2 + $0x38] sm:$0xff] %v3146
        %3175 = vst [vmem:[#allocation2 + $0x40] sm:$0xff] %v3147
        %3176 = vst [vmem:[#allocation2 + $0x48] sm:$0xff] %v3148
        %3177 = vst [vmem:[#allocation2 + $0x50] sm:$0xff] %v3149
        %3178 = vst [vmem:[#allocation2 + $0x58] sm:$0xff] %v3150
        %3179 = vst [vmem:[#allocation2 + $0x60] sm:$0xff] %v3151
        %3180 = vst [vmem:[#allocation2 + $0x68] sm:$0xff] %v3152
        %3181 = vst [vmem:[#allocation2 + $0x70] sm:$0xff] %v3153
        %3182 = vst [vmem:[#allocation2 + $0x78] sm:$0xff] %v3154
        %3183 = vst [vmem:[#allocation2 + $0x80] sm:$0xff] %v3155
        %3184 = vst [vmem:[#allocation2 + $0x88] sm:$0xff] %v3156
        %3185 = vst [vmem:[#allocation2 + $0x90] sm:$0xff] %v3157
        %3186 = vst [vmem:[#allocation2 + $0x98] sm:$0xff] %v3158
        %3187 = vst [vmem:[#allocation2 + $0xa0] sm:$0xff] %v3159
        %3188 = vst [vmem:[#allocation2 + $0xa8] sm:$0xff] %v3160
        %3189 = vst [vmem:[#allocation2 + $0xb0] sm:$0xff] %v3161
        %3190 = vst [vmem:[#allocation2 + $0xb8] sm:$0xff] %v3162
        %3191 = vst [vmem:[#allocation2 + $0xc0] sm:$0xff] %v3163
        %3192 = vst [vmem:[#allocation2 + $0xc8] sm:$0xff] %v3164
        %3193 = vst [vmem:[#allocation2 + $0xd0] sm:$0xff] %v3165
        %3194 = vst [vmem:[#allocation2 + $0xd8] sm:$0xff] %v3166
        %v3195 = vld [vmem:[%s238 + $0x10] sm:$0xf]
        %v3196 = vld [vmem:[%s238 + $0x14] sm:$0xf]
        %v3197 = vld [vmem:[%s238 + $0x18] sm:$0xf]
        %v3198 = vld [vmem:[%s238 + $0x1c] sm:$0xf]
        %v3199 = vld [vmem:[%s238 + $0x20] sm:$0xf]
        %v3200 = vld [vmem:[%s238 + $0x24] sm:$0xf]
        %v3201 = vld [vmem:[%s238 + $0x28] sm:$0xf]
        %v3202 = vld [vmem:[%s238 + $0x2c] sm:$0xf]
        %v3203 = vld [vmem:[%s238 + $0x30] sm:$0xf]
        %v3204 = vld [vmem:[%s238 + $0x34] sm:$0xf]
        %v3205 = vld [vmem:[%s238 + $0x38] sm:$0xf]
        %v3206 = vld [vmem:[%s238 + $0x3c] sm:$0xf]
        %v3207 = vld [vmem:[%s238 + $0x40] sm:$0xf]
        %v3208 = vld [vmem:[%s238 + $0x44] sm:$0xf]
        %v3209 = vld [vmem:[%s238 + $0x48] sm:$0xf]
        %v3210 = vld [vmem:[%s238 + $0x4c] sm:$0xf]
        %v3211 = vld [vmem:[%s238 + $0x50] sm:$0xf]
        %v3212 = vld [vmem:[%s238 + $0x54] sm:$0xf]
        %v3213 = vld [vmem:[%s238 + $0x58] sm:$0xf]
        %v3214 = vld [vmem:[%s238 + $0x5c] sm:$0xf]
        %v3215 = vld [vmem:[%s238 + $0x60] sm:$0xf]
        %v3216 = vld [vmem:[%s238 + $0x64] sm:$0xf]
        %v3217 = vld [vmem:[%s238 + $0x68] sm:$0xf]
        %v3218 = vld [vmem:[%s238 + $0x6c] sm:$0xf]
        %v3219 = vld [vmem:[%s238 + $0x70] sm:$0xf]
        %v3220 = vld [vmem:[%s238 + $0x74] sm:$0xf]
        %v3221 = vld [vmem:[%s238 + $0x78] sm:$0xf]
        %v3222 = vld [vmem:[%s238 + $0x7c] sm:$0xf]
        %v3223 = vld [vmem:[%s238 + $0x80] sm:$0x1]
        %v3224 = vld [vmem:[#allocation2] sm:$0xff]
        %v3225 = vld [vmem:[#allocation2 + $0x8] sm:$0xff]
        %v3226 = vld [vmem:[#allocation2 + $0x10] sm:$0xff]
        %v3227 = vld [vmem:[#allocation2 + $0x18] sm:$0xff]
        %v3228 = vld [vmem:[#allocation2 + $0x20] sm:$0xff]
        %v3229 = vld [vmem:[#allocation2 + $0x28] sm:$0xff]
        %v3230 = vld [vmem:[#allocation2 + $0x30] sm:$0xff]
        %v3231 = vld [vmem:[#allocation2 + $0x38] sm:$0xff]
        %v3232 = vld [vmem:[#allocation2 + $0x40] sm:$0xff]
        %v3233 = vld [vmem:[#allocation2 + $0x48] sm:$0xff]
        %v3234 = vld [vmem:[#allocation2 + $0x50] sm:$0xff]
        %v3235 = vld [vmem:[#allocation2 + $0x58] sm:$0xff]
        %v3236 = vld [vmem:[#allocation2 + $0x60] sm:$0xff]
        %v3237 = vld [vmem:[#allocation2 + $0x68] sm:$0xff]
        %v3238 = vld [vmem:[#allocation2 + $0x70] sm:$0xff]
        %v3239 = vld [vmem:[#allocation2 + $0x78] sm:$0xff]
        %v3240 = vld [vmem:[#allocation2 + $0x80] sm:$0xff]
        %v3241 = vld [vmem:[#allocation2 + $0x88] sm:$0xff]
        %v3242 = vld [vmem:[#allocation2 + $0x90] sm:$0xff]
        %v3243 = vld [vmem:[#allocation2 + $0x98] sm:$0xff]
        %v3244 = vld [vmem:[#allocation2 + $0xa0] sm:$0xff]
        %v3245 = vld [vmem:[#allocation2 + $0xa8] sm:$0xff]
        %v3246 = vld [vmem:[#allocation2 + $0xb0] sm:$0xff]
        %v3247 = vld [vmem:[#allocation2 + $0xb8] sm:$0xff]
        %v3248 = vld [vmem:[#allocation2 + $0xc0] sm:$0xff]
        %v3249 = vld [vmem:[#allocation2 + $0xc8] sm:$0xff]
        %v3250 = vld [vmem:[#allocation2 + $0xd0] sm:$0xff]
        %v3251 = vld [vmem:[#allocation2 + $0xd8] sm:$0xff]
        %s3252 = scalar_lea.vmem %s1, 14
        %v3253 = vld [vmem:[%s3252] sm:$0x3]
        %v3283 = vunpack.c.l.b16 %v3195
        %v3284 = vunpack.c.l.b16 %v3196
        %v3285 = vunpack.c.l.b16 %v3197
        %v3286 = vunpack.c.l.b16 %v3198
        %v3287 = vunpack.c.l.b16 %v3199
        %v3288 = vunpack.c.l.b16 %v3200
        %v3289 = vunpack.c.l.b16 %v3201
        %v3290 = vunpack.c.l.b16 %v3202
        %v3291 = vunpack.c.l.b16 %v3203
        %v3292 = vunpack.c.l.b16 %v3204
        %v3293 = vunpack.c.l.b16 %v3205
        %v3294 = vunpack.c.l.b16 %v3206
        %v3295 = vunpack.c.l.b16 %v3207
        %v3296 = vunpack.c.l.b16 %v3208
        %v3297 = vunpack.c.l.b16 %v3209
        %v3298 = vunpack.c.l.b16 %v3210
        %v3299 = vunpack.c.l.b16 %v3211
        %v3300 = vunpack.c.l.b16 %v3212
        %v3301 = vunpack.c.l.b16 %v3213
        %v3302 = vunpack.c.l.b16 %v3214
        %v3303 = vunpack.c.l.b16 %v3215
        %v3304 = vunpack.c.l.b16 %v3216
        %v3305 = vunpack.c.l.b16 %v3217
        %v3306 = vunpack.c.l.b16 %v3218
        %v3307 = vunpack.c.l.b16 %v3219
        %v3308 = vunpack.c.l.b16 %v3220
        %v3309 = vunpack.c.l.b16 %v3221
        %v3310 = vunpack.c.l.b16 %v3222
        %v3311 = vunpack.c.l.b16 %v3223
        %v3312 = vpack.c.b16 %v3284, %v3283
        %v3313 = vpack.c.b16 %v3286, %v3285
        %v3314 = vpack.c.b16 %v3288, %v3287
        %v3315 = vpack.c.b16 %v3290, %v3289
        %v3316 = vpack.c.b16 %v3292, %v3291
        %v3317 = vpack.c.b16 %v3294, %v3293
        %v3318 = vpack.c.b16 %v3296, %v3295
        %v3319 = vpack.c.b16 %v3298, %v3297
        %v3320 = vpack.c.b16 %v3300, %v3299
        %v3321 = vpack.c.b16 %v3302, %v3301
        %v3322 = vpack.c.b16 %v3304, %v3303
        %v3323 = vpack.c.b16 %v3306, %v3305
        %v3324 = vpack.c.b16 %v3308, %v3307
        %v3325 = vpack.c.b16 %v3310, %v3309
        %v3326 = vpack.c.b16 %v3311, %v3311
        %v3328 = vshrl.u32 %v3312, 16
        %v3330 = vshll.u32 %v3312, 16
        %v3332 = vrot.slane %v3330, 1
        %v3333 = vor.u32 %v3328, %v3332
        %v3335 = vshll.u32 %v3313, 16
        %v3337 = vrot.slane %v3335, 1
        %v3338 = vsel %vm775, %v3333, %v3337
        %v3339 = vshrl.u32 %v3313, 16
        %v3341 = vor.u32 %v3339, %v3337
        %v3343 = vshll.u32 %v3314, 16
        %v3345 = vrot.slane %v3343, 1
        %v3346 = vsel %vm775, %v3341, %v3345
        %v3347 = vshrl.u32 %v3314, 16
        %v3349 = vor.u32 %v3347, %v3345
        %v3351 = vshll.u32 %v3315, 16
        %v3353 = vrot.slane %v3351, 1
        %v3354 = vsel %vm775, %v3349, %v3353
        %v3355 = vshrl.u32 %v3315, 16
        %v3357 = vor.u32 %v3355, %v3353
        %v3359 = vshll.u32 %v3316, 16
        %v3361 = vrot.slane %v3359, 1
        %v3362 = vsel %vm775, %v3357, %v3361
        %v3363 = vshrl.u32 %v3316, 16
        %v3365 = vor.u32 %v3363, %v3361
        %v3367 = vshll.u32 %v3317, 16
        %v3369 = vrot.slane %v3367, 1
        %v3370 = vsel %vm775, %v3365, %v3369
        %v3371 = vshrl.u32 %v3317, 16
        %v3373 = vor.u32 %v3371, %v3369
        %v3375 = vshll.u32 %v3318, 16
        %v3377 = vrot.slane %v3375, 1
        %v3378 = vsel %vm775, %v3373, %v3377
        %v3379 = vshrl.u32 %v3318, 16
        %v3381 = vor.u32 %v3379, %v3377
        %v3383 = vshll.u32 %v3319, 16
        %v3385 = vrot.slane %v3383, 1
        %v3386 = vsel %vm775, %v3381, %v3385
        %v3387 = vshrl.u32 %v3319, 16
        %v3389 = vor.u32 %v3387, %v3385
        %v3391 = vshll.u32 %v3320, 16
        %v3393 = vrot.slane %v3391, 1
        %v3394 = vsel %vm775, %v3389, %v3393
        %v3395 = vshrl.u32 %v3320, 16
        %v3397 = vor.u32 %v3395, %v3393
        %v3399 = vshll.u32 %v3321, 16
        %v3401 = vrot.slane %v3399, 1
        %v3402 = vsel %vm775, %v3397, %v3401
        %v3403 = vshrl.u32 %v3321, 16
        %v3405 = vor.u32 %v3403, %v3401
        %v3407 = vshll.u32 %v3322, 16
        %v3409 = vrot.slane %v3407, 1
        %v3410 = vsel %vm775, %v3405, %v3409
        %v3411 = vshrl.u32 %v3322, 16
        %v3413 = vor.u32 %v3411, %v3409
        %v3415 = vshll.u32 %v3323, 16
        %v3417 = vrot.slane %v3415, 1
        %v3418 = vsel %vm775, %v3413, %v3417
        %v3419 = vshrl.u32 %v3323, 16
        %v3421 = vor.u32 %v3419, %v3417
        %v3423 = vshll.u32 %v3324, 16
        %v3425 = vrot.slane %v3423, 1
        %v3426 = vsel %vm775, %v3421, %v3425
        %v3427 = vshrl.u32 %v3324, 16
        %v3429 = vor.u32 %v3427, %v3425
        %v3431 = vshll.u32 %v3325, 16
        %v3433 = vrot.slane %v3431, 1
        %v3434 = vsel %vm775, %v3429, %v3433
        %v3435 = vshrl.u32 %v3325, 16
        %v3437 = vor.u32 %v3435, %v3433
        %v3439 = vshll.u32 %v3326, 16
        %v3441 = vrot.slane %v3439, 1
        %v3442 = vsel %vm775, %v3437, %v3441
        %v3444 = vsel %vm395, %v3338, 0
        %v3447 = vsel %vm395, %v3346, 0
        %v3450 = vsel %vm395, %v3354, 0
        %v3453 = vsel %vm395, %v3362, 0
        %v3456 = vsel %vm395, %v3370, 0
        %v3459 = vsel %vm395, %v3378, 0
        %v3462 = vsel %vm395, %v3386, 0
        %v3465 = vsel %vm395, %v3394, 0
        %v3468 = vsel %vm395, %v3402, 0
        %v3471 = vsel %vm395, %v3410, 0
        %v3474 = vsel %vm395, %v3418, 0
        %v3477 = vsel %vm395, %v3426, 0
        %v3480 = vsel %vm395, %v3434, 0
        %v3483 = vsel %vm395, %v3442, 0
        %v3486 = vsel %vm438, %v3253, 0
        %3488 = vmatprep.subr.bf16.mxu0 0
        %3489 = vmatpush1.bf16.msra.mxu0 %v3486
        %3490 = vmatprep.subr.bf16.mxu0 0
        %3491 = vmatpush1.bf16.msra.mxu0 0
        %3492 = vmatprep.subr.bf16.mxu0 0
        %3493 = vmatpush1.bf16.msra.mxu0 0
        %3494 = vmatprep.subr.bf16.mxu0 0
        %3495 = vmatpush1.bf16.msra.mxu0 0
        %3496 = vmatprep.subr.bf16.mxu0 0
        %3497 = vmatpush1.bf16.msra.mxu0 0
        %3498 = vmatprep.subr.bf16.mxu0 0
        %3499 = vmatpush1.bf16.msra.mxu0 0
        %3500 = vmatprep.subr.bf16.mxu0 0
        %3501 = vmatpush1.bf16.msra.mxu0 0
        %3502 = vmatprep.subr.bf16.mxu0 0
        %3503 = vmatpush1.bf16.msra.mxu0 0
        %3504 = vmatprep.subr.bf16.mxu0 0
        %3505 = vmatpush1.bf16.msra.mxu0 0
        %3506 = vmatprep.subr.bf16.mxu0 0
        %3507 = vmatpush1.bf16.msra.mxu0 0
        %3508 = vmatprep.subr.bf16.mxu0 0
        %3509 = vmatpush1.bf16.msra.mxu0 0
        %3510 = vmatprep.subr.bf16.mxu0 0
        %3511 = vmatpush1.bf16.msra.mxu0 0
        %3512 = vmatprep.subr.bf16.mxu0 0
        %3513 = vmatpush1.bf16.msra.mxu0 0
        %3514 = vmatprep.subr.bf16.mxu0 0
        %3515 = vmatpush1.bf16.msra.mxu0 0
        %3516 = vmatprep.subr.bf16.mxu0 0
        %3517 = vmatpush1.bf16.msra.mxu0 0
        %3518 = vmatprep.subr.bf16.mxu0 0
        %3519 = vmatpush1.bf16.msra.mxu0 0
        %3520 = vmatprep.mubr.bf16.mxu0 0
        %3521 = vmatmul.mubr.bf16.gmra.mrb[0].mxu0 %v3444
        %v3522 = vpop.f32.mrb[0].mxu0
        %v3523 = vadd.f32 0.0, %v3522
        %v3524 = vpop.f32.mrb[0].mxu0
        %v3525 = vpop.f32.mrb[0].mxu0
        %v3526 = vadd.f32 0.0, %v3525
        %v3527 = vpop.f32.mrb[0].mxu0
        %3528 = vmatprep.mubr.bf16.mxu0 0
        %3529 = vmatmul.mubr.bf16.gmra.mrb[0].mxu0 %v3447
        %v3530 = vpop.f32.mrb[0].mxu0
        %v3531 = vadd.f32 0.0, %v3530
        %v3532 = vpop.f32.mrb[0].mxu0
        %v3533 = vpop.f32.mrb[0].mxu0
        %v3534 = vadd.f32 0.0, %v3533
        %v3535 = vpop.f32.mrb[0].mxu0
        %3536 = vmatprep.mubr.bf16.mxu0 0
        %3537 = vmatmul.mubr.bf16.gmra.mrb[0].mxu0 %v3450
        %v3538 = vpop.f32.mrb[0].mxu0
        %v3539 = vadd.f32 0.0, %v3538
        %v3540 = vpop.f32.mrb[0].mxu0
        %v3541 = vpop.f32.mrb[0].mxu0
        %v3542 = vadd.f32 0.0, %v3541
        %v3543 = vpop.f32.mrb[0].mxu0
        %3544 = vmatprep.mubr.bf16.mxu0 0
        %3545 = vmatmul.mubr.bf16.gmra.mrb[0].mxu0 %v3453
        %v3546 = vpop.f32.mrb[0].mxu0
        %v3547 = vadd.f32 0.0, %v3546
        %v3548 = vpop.f32.mrb[0].mxu0
        %v3549 = vpop.f32.mrb[0].mxu0
        %v3550 = vadd.f32 0.0, %v3549
        %v3551 = vpop.f32.mrb[0].mxu0
        %3552 = vmatprep.mubr.bf16.mxu0 0
        %3553 = vmatmul.mubr.bf16.gmra.mrb[0].mxu0 %v3456
        %v3554 = vpop.f32.mrb[0].mxu0
        %v3555 = vadd.f32 0.0, %v3554
        %v3556 = vpop.f32.mrb[0].mxu0
        %v3557 = vpop.f32.mrb[0].mxu0
        %v3558 = vadd.f32 0.0, %v3557
        %v3559 = vpop.f32.mrb[0].mxu0
        %3560 = vmatprep.mubr.bf16.mxu0 0
        %3561 = vmatmul.mubr.bf16.gmra.mrb[0].mxu0 %v3459
        %v3562 = vpop.f32.mrb[0].mxu0
        %v3563 = vadd.f32 0.0, %v3562
        %v3564 = vpop.f32.mrb[0].mxu0
        %v3565 = vpop.f32.mrb[0].mxu0
        %v3566 = vadd.f32 0.0, %v3565
        %v3567 = vpop.f32.mrb[0].mxu0
        %3568 = vmatprep.mubr.bf16.mxu0 0
        %3569 = vmatmul.mubr.bf16.gmra.mrb[0].mxu0 %v3462
        %v3570 = vpop.f32.mrb[0].mxu0
        %v3571 = vadd.f32 0.0, %v3570
        %v3572 = vpop.f32.mrb[0].mxu0
        %v3573 = vpop.f32.mrb[0].mxu0
        %v3574 = vadd.f32 0.0, %v3573
        %v3575 = vpop.f32.mrb[0].mxu0
        %3576 = vmatprep.mubr.bf16.mxu0 0
        %3577 = vmatmul.mubr.bf16.gmra.mrb[0].mxu0 %v3465
        %v3578 = vpop.f32.mrb[0].mxu0
        %v3579 = vadd.f32 0.0, %v3578
        %v3580 = vpop.f32.mrb[0].mxu0
        %v3581 = vpop.f32.mrb[0].mxu0
        %v3582 = vadd.f32 0.0, %v3581
        %v3583 = vpop.f32.mrb[0].mxu0
        %3584 = vmatprep.mubr.bf16.mxu0 0
        %3585 = vmatmul.mubr.bf16.gmra.mrb[0].mxu0 %v3468
        %v3586 = vpop.f32.mrb[0].mxu0
        %v3587 = vadd.f32 0.0, %v3586
        %v3588 = vpop.f32.mrb[0].mxu0
        %v3589 = vpop.f32.mrb[0].mxu0
        %v3590 = vadd.f32 0.0, %v3589
        %v3591 = vpop.f32.mrb[0].mxu0
        %3592 = vmatprep.mubr.bf16.mxu0 0
        %3593 = vmatmul.mubr.bf16.gmra.mrb[0].mxu0 %v3471
        %v3594 = vpop.f32.mrb[0].mxu0
        %v3595 = vadd.f32 0.0, %v3594
        %v3596 = vpop.f32.mrb[0].mxu0
        %v3597 = vpop.f32.mrb[0].mxu0
        %v3598 = vadd.f32 0.0, %v3597
        %v3599 = vpop.f32.mrb[0].mxu0
        %3600 = vmatprep.mubr.bf16.mxu0 0
        %3601 = vmatmul.mubr.bf16.gmra.mrb[0].mxu0 %v3474
        %v3602 = vpop.f32.mrb[0].mxu0
        %v3603 = vadd.f32 0.0, %v3602
        %v3604 = vpop.f32.mrb[0].mxu0
        %v3605 = vpop.f32.mrb[0].mxu0
        %v3606 = vadd.f32 0.0, %v3605
        %v3607 = vpop.f32.mrb[0].mxu0
        %3608 = vmatprep.mubr.bf16.mxu0 0
        %3609 = vmatmul.mubr.bf16.gmra.mrb[0].mxu0 %v3477
        %v3610 = vpop.f32.mrb[0].mxu0
        %v3611 = vadd.f32 0.0, %v3610
        %v3612 = vpop.f32.mrb[0].mxu0
        %v3613 = vpop.f32.mrb[0].mxu0
        %v3614 = vadd.f32 0.0, %v3613
        %v3615 = vpop.f32.mrb[0].mxu0
        %3616 = vmatprep.mubr.bf16.mxu0 0
        %3617 = vmatmul.mubr.bf16.gmra.mrb[0].mxu0 %v3480
        %v3618 = vpop.f32.mrb[0].mxu0
        %v3619 = vadd.f32 0.0, %v3618
        %v3620 = vpop.f32.mrb[0].mxu0
        %v3621 = vpop.f32.mrb[0].mxu0
        %v3622 = vadd.f32 0.0, %v3621
        %v3623 = vpop.f32.mrb[0].mxu0
        %3624 = vmatprep.mubr.bf16.mxu0 0
        %3625 = vmatmul.mubr.bf16.gmra.mrb[0].mxu0 %v3483
        %v3626 = vpop.f32.mrb[0].mxu0
        %v3627 = vadd.f32 0.0, %v3626
        %v3628 = vpop.f32.mrb[0].mxu0
        %v3629 = vpop.f32.mrb[0].mxu0
        %v3630 = vadd.f32 0.0, %v3629
        %v3631 = vpop.f32.mrb[0].mxu0
        %3632 = vdwg.mxu0
        %v3633 = vadd.f32 %v3224, %v3523
        %v3634 = vadd.f32 %v3225, %v3526
        %v3635 = vadd.f32 %v3226, %v3531
        %v3636 = vadd.f32 %v3227, %v3534
        %v3637 = vadd.f32 %v3228, %v3539
        %v3638 = vadd.f32 %v3229, %v3542
        %v3639 = vadd.f32 %v3230, %v3547
        %v3640 = vadd.f32 %v3231, %v3550
        %v3641 = vadd.f32 %v3232, %v3555
        %v3642 = vadd.f32 %v3233, %v3558
        %v3643 = vadd.f32 %v3234, %v3563
        %v3644 = vadd.f32 %v3235, %v3566
        %v3645 = vadd.f32 %v3236, %v3571
        %v3646 = vadd.f32 %v3237, %v3574
        %v3647 = vadd.f32 %v3238, %v3579
        %v3648 = vadd.f32 %v3239, %v3582
        %v3649 = vadd.f32 %v3240, %v3587
        %v3650 = vadd.f32 %v3241, %v3590
        %v3651 = vadd.f32 %v3242, %v3595
        %v3652 = vadd.f32 %v3243, %v3598
        %v3653 = vadd.f32 %v3244, %v3603
        %v3654 = vadd.f32 %v3245, %v3606
        %v3655 = vadd.f32 %v3246, %v3611
        %v3656 = vadd.f32 %v3247, %v3614
        %v3657 = vadd.f32 %v3248, %v3619
        %v3658 = vadd.f32 %v3249, %v3622
        %v3659 = vadd.f32 %v3250, %v3627
        %v3660 = vadd.f32 %v3251, %v3630
        %3661 = vst [vmem:[#allocation2] sm:$0xff] %v3633
        %3662 = vst [vmem:[#allocation2 + $0x8] sm:$0xff] %v3634
        %3663 = vst [vmem:[#allocation2 + $0x10] sm:$0xff] %v3635
        %3664 = vst [vmem:[#allocation2 + $0x18] sm:$0xff] %v3636
        %3665 = vst [vmem:[#allocation2 + $0x20] sm:$0xff] %v3637
        %3666 = vst [vmem:[#allocation2 + $0x28] sm:$0xff] %v3638
        %3667 = vst [vmem:[#allocation2 + $0x30] sm:$0xff] %v3639
        %3668 = vst [vmem:[#allocation2 + $0x38] sm:$0xff] %v3640
        %3669 = vst [vmem:[#allocation2 + $0x40] sm:$0xff] %v3641
        %3670 = vst [vmem:[#allocation2 + $0x48] sm:$0xff] %v3642
        %3671 = vst [vmem:[#allocation2 + $0x50] sm:$0xff] %v3643
        %3672 = vst [vmem:[#allocation2 + $0x58] sm:$0xff] %v3644
        %3673 = vst [vmem:[#allocation2 + $0x60] sm:$0xff] %v3645
        %3674 = vst [vmem:[#allocation2 + $0x68] sm:$0xff] %v3646
        %3675 = vst [vmem:[#allocation2 + $0x70] sm:$0xff] %v3647
        %3676 = vst [vmem:[#allocation2 + $0x78] sm:$0xff] %v3648
        %3677 = vst [vmem:[#allocation2 + $0x80] sm:$0xff] %v3649
        %3678 = vst [vmem:[#allocation2 + $0x88] sm:$0xff] %v3650
        %3679 = vst [vmem:[#allocation2 + $0x90] sm:$0xff] %v3651
        %3680 = vst [vmem:[#allocation2 + $0x98] sm:$0xff] %v3652
        %3681 = vst [vmem:[#allocation2 + $0xa0] sm:$0xff] %v3653
        %3682 = vst [vmem:[#allocation2 + $0xa8] sm:$0xff] %v3654
        %3683 = vst [vmem:[#allocation2 + $0xb0] sm:$0xff] %v3655
        %3684 = vst [vmem:[#allocation2 + $0xb8] sm:$0xff] %v3656
        %3685 = vst [vmem:[#allocation2 + $0xc0] sm:$0xff] %v3657
        %3686 = vst [vmem:[#allocation2 + $0xc8] sm:$0xff] %v3658
        %3687 = vst [vmem:[#allocation2 + $0xd0] sm:$0xff] %v3659
        %3688 = vst [vmem:[#allocation2 + $0xd8] sm:$0xff] %v3660
        %v3689 = vld [vmem:[%s238 + $0x10] sm:$0xe]
        %v3690 = vld [vmem:[%s238 + $0x14] sm:$0xf]
        %v3691 = vld [vmem:[%s238 + $0x18] sm:$0xf]
        %v3692 = vld [vmem:[%s238 + $0x1c] sm:$0xf]
        %v3693 = vld [vmem:[%s238 + $0x20] sm:$0xf]
        %v3694 = vld [vmem:[%s238 + $0x24] sm:$0xf]
        %v3695 = vld [vmem:[%s238 + $0x28] sm:$0xf]
        %v3696 = vld [vmem:[%s238 + $0x2c] sm:$0xf]
        %v3697 = vld [vmem:[%s238 + $0x30] sm:$0xf]
        %v3698 = vld [vmem:[%s238 + $0x34] sm:$0xf]
        %v3699 = vld [vmem:[%s238 + $0x38] sm:$0xf]
        %v3700 = vld [vmem:[%s238 + $0x3c] sm:$0xf]
        %v3701 = vld [vmem:[%s238 + $0x40] sm:$0xf]
        %v3702 = vld [vmem:[%s238 + $0x44] sm:$0xf]
        %v3703 = vld [vmem:[%s238 + $0x48] sm:$0xf]
        %v3704 = vld [vmem:[%s238 + $0x4c] sm:$0xf]
        %v3705 = vld [vmem:[%s238 + $0x50] sm:$0xf]
        %v3706 = vld [vmem:[%s238 + $0x54] sm:$0xf]
        %v3707 = vld [vmem:[%s238 + $0x58] sm:$0xf]
        %v3708 = vld [vmem:[%s238 + $0x5c] sm:$0xf]
        %v3709 = vld [vmem:[%s238 + $0x60] sm:$0xf]
        %v3710 = vld [vmem:[%s238 + $0x64] sm:$0xf]
        %v3711 = vld [vmem:[%s238 + $0x68] sm:$0xf]
        %v3712 = vld [vmem:[%s238 + $0x6c] sm:$0xf]
        %v3713 = vld [vmem:[%s238 + $0x70] sm:$0xf]
        %v3714 = vld [vmem:[%s238 + $0x74] sm:$0xf]
        %v3715 = vld [vmem:[%s238 + $0x78] sm:$0xf]
        %v3716 = vld [vmem:[%s238 + $0x7c] sm:$0xf]
        %v3717 = vld [vmem:[%s238 + $0x80] sm:$0x1]
        %v3718 = vld [vmem:[#allocation2] sm:$0xff]
        %v3719 = vld [vmem:[#allocation2 + $0x8] sm:$0xff]
        %v3720 = vld [vmem:[#allocation2 + $0x10] sm:$0xff]
        %v3721 = vld [vmem:[#allocation2 + $0x18] sm:$0xff]
        %v3722 = vld [vmem:[#allocation2 + $0x20] sm:$0xff]
        %v3723 = vld [vmem:[#allocation2 + $0x28] sm:$0xff]
        %v3724 = vld [vmem:[#allocation2 + $0x30] sm:$0xff]
        %v3725 = vld [vmem:[#allocation2 + $0x38] sm:$0xff]
        %v3726 = vld [vmem:[#allocation2 + $0x40] sm:$0xff]
        %v3727 = vld [vmem:[#allocation2 + $0x48] sm:$0xff]
        %v3728 = vld [vmem:[#allocation2 + $0x50] sm:$0xff]
        %v3729 = vld [vmem:[#allocation2 + $0x58] sm:$0xff]
        %v3730 = vld [vmem:[#allocation2 + $0x60] sm:$0xff]
        %v3731 = vld [vmem:[#allocation2 + $0x68] sm:$0xff]
        %v3732 = vld [vmem:[#allocation2 + $0x70] sm:$0xff]
        %v3733 = vld [vmem:[#allocation2 + $0x78] sm:$0xff]
        %v3734 = vld [vmem:[#allocation2 + $0x80] sm:$0xff]
        %v3735 = vld [vmem:[#allocation2 + $0x88] sm:$0xff]
        %v3736 = vld [vmem:[#allocation2 + $0x90] sm:$0xff]
        %v3737 = vld [vmem:[#allocation2 + $0x98] sm:$0xff]
        %v3738 = vld [vmem:[#allocation2 + $0xa0] sm:$0xff]
        %v3739 = vld [vmem:[#allocation2 + $0xa8] sm:$0xff]
        %v3740 = vld [vmem:[#allocation2 + $0xb0] sm:$0xff]
        %v3741 = vld [vmem:[#allocation2 + $0xb8] sm:$0xff]
        %v3742 = vld [vmem:[#allocation2 + $0xc0] sm:$0xff]
        %v3743 = vld [vmem:[#allocation2 + $0xc8] sm:$0xff]
        %v3744 = vld [vmem:[#allocation2 + $0xd0] sm:$0xff]
        %v3745 = vld [vmem:[#allocation2 + $0xd8] sm:$0xff]
        %s3746 = scalar_lea.vmem %s1, 16
        %v3747 = vld [vmem:[%s3746] sm:$0x3]
        %v3777 = vunpack.c.l.b16 %v3689
        %v3778 = vunpack.c.l.b16 %v3690
        %v3779 = vunpack.c.l.b16 %v3691
        %v3780 = vunpack.c.l.b16 %v3692
        %v3781 = vunpack.c.l.b16 %v3693
        %v3782 = vunpack.c.l.b16 %v3694
        %v3783 = vunpack.c.l.b16 %v3695
        %v3784 = vunpack.c.l.b16 %v3696
        %v3785 = vunpack.c.l.b16 %v3697
        %v3786 = vunpack.c.l.b16 %v3698
        %v3787 = vunpack.c.l.b16 %v3699
        %v3788 = vunpack.c.l.b16 %v3700
        %v3789 = vunpack.c.l.b16 %v3701
        %v3790 = vunpack.c.l.b16 %v3702
        %v3791 = vunpack.c.l.b16 %v3703
        %v3792 = vunpack.c.l.b16 %v3704
        %v3793 = vunpack.c.l.b16 %v3705
        %v3794 = vunpack.c.l.b16 %v3706
        %v3795 = vunpack.c.l.b16 %v3707
        %v3796 = vunpack.c.l.b16 %v3708
        %v3797 = vunpack.c.l.b16 %v3709
        %v3798 = vunpack.c.l.b16 %v3710
        %v3799 = vunpack.c.l.b16 %v3711
        %v3800 = vunpack.c.l.b16 %v3712
        %v3801 = vunpack.c.l.b16 %v3713
        %v3802 = vunpack.c.l.b16 %v3714
        %v3803 = vunpack.c.l.b16 %v3715
        %v3804 = vunpack.c.l.b16 %v3716
        %v3805 = vunpack.c.l.b16 %v3717
        %v3806 = vpack.c.b16 %v3778, %v3777
        %v3807 = vpack.c.b16 %v3780, %v3779
        %v3808 = vpack.c.b16 %v3782, %v3781
        %v3809 = vpack.c.b16 %v3784, %v3783
        %v3810 = vpack.c.b16 %v3786, %v3785
        %v3811 = vpack.c.b16 %v3788, %v3787
        %v3812 = vpack.c.b16 %v3790, %v3789
        %v3813 = vpack.c.b16 %v3792, %v3791
        %v3814 = vpack.c.b16 %v3794, %v3793
        %v3815 = vpack.c.b16 %v3796, %v3795
        %v3816 = vpack.c.b16 %v3798, %v3797
        %v3817 = vpack.c.b16 %v3800, %v3799
        %v3818 = vpack.c.b16 %v3802, %v3801
        %v3819 = vpack.c.b16 %v3804, %v3803
        %v3820 = vpack.c.b16 %v3805, %v3805
        %v3821 = vrot.slane %v3806, 1
        %v3822 = vrot.slane %v3807, 1
        %v3823 = vsel %vm1270, %v3821, %v3822
        %v3824 = vrot.slane %v3808, 1
        %v3825 = vsel %vm1270, %v3822, %v3824
        %v3826 = vrot.slane %v3809, 1
        %v3827 = vsel %vm1270, %v3824, %v3826
        %v3828 = vrot.slane %v3810, 1
        %v3829 = vsel %vm1270, %v3826, %v3828
        %v3830 = vrot.slane %v3811, 1
        %v3831 = vsel %vm1270, %v3828, %v3830
        %v3832 = vrot.slane %v3812, 1
        %v3833 = vsel %vm1270, %v3830, %v3832
        %v3834 = vrot.slane %v3813, 1
        %v3835 = vsel %vm1270, %v3832, %v3834
        %v3836 = vrot.slane %v3814, 1
        %v3837 = vsel %vm1270, %v3834, %v3836
        %v3838 = vrot.slane %v3815, 1
        %v3839 = vsel %vm1270, %v3836, %v3838
        %v3840 = vrot.slane %v3816, 1
        %v3841 = vsel %vm1270, %v3838, %v3840
        %v3842 = vrot.slane %v3817, 1
        %v3843 = vsel %vm1270, %v3840, %v3842
        %v3844 = vrot.slane %v3818, 1
        %v3845 = vsel %vm1270, %v3842, %v3844
        %v3846 = vrot.slane %v3819, 1
        %v3847 = vsel %vm1270, %v3844, %v3846
        %v3848 = vrot.slane %v3820, 1
        %v3849 = vsel %vm1270, %v3846, %v3848
        %v3851 = vsel %vm395, %v3823, 0
        %v3854 = vsel %vm395, %v3825, 0
        %v3857 = vsel %vm395, %v3827, 0
        %v3860 = vsel %vm395, %v3829, 0
        %v3863 = vsel %vm395, %v3831, 0
        %v3866 = vsel %vm395, %v3833, 0
        %v3869 = vsel %vm395, %v3835, 0
        %v3872 = vsel %vm395, %v3837, 0
        %v3875 = vsel %vm395, %v3839, 0
        %v3878 = vsel %vm395, %v3841, 0
        %v3881 = vsel %vm395, %v3843, 0
        %v3884 = vsel %vm395, %v3845, 0
        %v3887 = vsel %vm395, %v3847, 0
        %v3890 = vsel %vm395, %v3849, 0
        %v3893 = vsel %vm438, %v3747, 0
        %3895 = vmatprep.subr.bf16.mxu0 0
        %3896 = vmatpush1.bf16.msra.mxu0 %v3893
        %3897 = vmatprep.subr.bf16.mxu0 0
        %3898 = vmatpush1.bf16.msra.mxu0 0
        %3899 = vmatprep.subr.bf16.mxu0 0
        %3900 = vmatpush1.bf16.msra.mxu0 0
        %3901 = vmatprep.subr.bf16.mxu0 0
        %3902 = vmatpush1.bf16.msra.mxu0 0
        %3903 = vmatprep.subr.bf16.mxu0 0
        %3904 = vmatpush1.bf16.msra.mxu0 0
        %3905 = vmatprep.subr.bf16.mxu0 0
        %3906 = vmatpush1.bf16.msra.mxu0 0
        %3907 = vmatprep.subr.bf16.mxu0 0
        %3908 = vmatpush1.bf16.msra.mxu0 0
        %3909 = vmatprep.subr.bf16.mxu0 0
        %3910 = vmatpush1.bf16.msra.mxu0 0
        %3911 = vmatprep.subr.bf16.mxu0 0
        %3912 = vmatpush1.bf16.msra.mxu0 0
        %3913 = vmatprep.subr.bf16.mxu0 0
        %3914 = vmatpush1.bf16.msra.mxu0 0
        %3915 = vmatprep.subr.bf16.mxu0 0
        %3916 = vmatpush1.bf16.msra.mxu0 0
        %3917 = vmatprep.subr.bf16.mxu0 0
        %3918 = vmatpush1.bf16.msra.mxu0 0
        %3919 = vmatprep.subr.bf16.mxu0 0
        %3920 = vmatpush1.bf16.msra.mxu0 0
        %3921 = vmatprep.subr.bf16.mxu0 0
        %3922 = vmatpush1.bf16.msra.mxu0 0
        %3923 = vmatprep.subr.bf16.mxu0 0
        %3924 = vmatpush1.bf16.msra.mxu0 0
        %3925 = vmatprep.subr.bf16.mxu0 0
        %3926 = vmatpush1.bf16.msra.mxu0 0
        %3927 = vmatprep.mubr.bf16.mxu0 0
        %3928 = vmatmul.mubr.bf16.gmra.mrb[0].mxu0 %v3851
        %v3929 = vpop.f32.mrb[0].mxu0
        %v3930 = vadd.f32 0.0, %v3929
        %v3931 = vpop.f32.mrb[0].mxu0
        %v3932 = vpop.f32.mrb[0].mxu0
        %v3933 = vadd.f32 0.0, %v3932
        %v3934 = vpop.f32.mrb[0].mxu0
        %3935 = vmatprep.mubr.bf16.mxu0 0
        %3936 = vmatmul.mubr.bf16.gmra.mrb[0].mxu0 %v3854
        %v3937 = vpop.f32.mrb[0].mxu0
        %v3938 = vadd.f32 0.0, %v3937
        %v3939 = vpop.f32.mrb[0].mxu0
        %v3940 = vpop.f32.mrb[0].mxu0
        %v3941 = vadd.f32 0.0, %v3940
        %v3942 = vpop.f32.mrb[0].mxu0
        %3943 = vmatprep.mubr.bf16.mxu0 0
        %3944 = vmatmul.mubr.bf16.gmra.mrb[0].mxu0 %v3857
        %v3945 = vpop.f32.mrb[0].mxu0
        %v3946 = vadd.f32 0.0, %v3945
        %v3947 = vpop.f32.mrb[0].mxu0
        %v3948 = vpop.f32.mrb[0].mxu0
        %v3949 = vadd.f32 0.0, %v3948
        %v3950 = vpop.f32.mrb[0].mxu0
        %3951 = vmatprep.mubr.bf16.mxu0 0
        %3952 = vmatmul.mubr.bf16.gmra.mrb[0].mxu0 %v3860
        %v3953 = vpop.f32.mrb[0].mxu0
        %v3954 = vadd.f32 0.0, %v3953
        %v3955 = vpop.f32.mrb[0].mxu0
        %v3956 = vpop.f32.mrb[0].mxu0
        %v3957 = vadd.f32 0.0, %v3956
        %v3958 = vpop.f32.mrb[0].mxu0
        %3959 = vmatprep.mubr.bf16.mxu0 0
        %3960 = vmatmul.mubr.bf16.gmra.mrb[0].mxu0 %v3863
        %v3961 = vpop.f32.mrb[0].mxu0
        %v3962 = vadd.f32 0.0, %v3961
        %v3963 = vpop.f32.mrb[0].mxu0
        %v3964 = vpop.f32.mrb[0].mxu0
        %v3965 = vadd.f32 0.0, %v3964
        %v3966 = vpop.f32.mrb[0].mxu0
        %3967 = vmatprep.mubr.bf16.mxu0 0
        %3968 = vmatmul.mubr.bf16.gmra.mrb[0].mxu0 %v3866
        %v3969 = vpop.f32.mrb[0].mxu0
        %v3970 = vadd.f32 0.0, %v3969
        %v3971 = vpop.f32.mrb[0].mxu0
        %v3972 = vpop.f32.mrb[0].mxu0
        %v3973 = vadd.f32 0.0, %v3972
        %v3974 = vpop.f32.mrb[0].mxu0
        %3975 = vmatprep.mubr.bf16.mxu0 0
        %3976 = vmatmul.mubr.bf16.gmra.mrb[0].mxu0 %v3869
        %v3977 = vpop.f32.mrb[0].mxu0
        %v3978 = vadd.f32 0.0, %v3977
        %v3979 = vpop.f32.mrb[0].mxu0
        %v3980 = vpop.f32.mrb[0].mxu0
        %v3981 = vadd.f32 0.0, %v3980
        %v3982 = vpop.f32.mrb[0].mxu0
        %3983 = vmatprep.mubr.bf16.mxu0 0
        %3984 = vmatmul.mubr.bf16.gmra.mrb[0].mxu0 %v3872
        %v3985 = vpop.f32.mrb[0].mxu0
        %v3986 = vadd.f32 0.0, %v3985
        %v3987 = vpop.f32.mrb[0].mxu0
        %v3988 = vpop.f32.mrb[0].mxu0
        %v3989 = vadd.f32 0.0, %v3988
        %v3990 = vpop.f32.mrb[0].mxu0
        %3991 = vmatprep.mubr.bf16.mxu0 0
        %3992 = vmatmul.mubr.bf16.gmra.mrb[0].mxu0 %v3875
        %v3993 = vpop.f32.mrb[0].mxu0
        %v3994 = vadd.f32 0.0, %v3993
        %v3995 = vpop.f32.mrb[0].mxu0
        %v3996 = vpop.f32.mrb[0].mxu0
        %v3997 = vadd.f32 0.0, %v3996
        %v3998 = vpop.f32.mrb[0].mxu0
        %3999 = vmatprep.mubr.bf16.mxu0 0
        %4000 = vmatmul.mubr.bf16.gmra.mrb[0].mxu0 %v3878
        %v4001 = vpop.f32.mrb[0].mxu0
        %v4002 = vadd.f32 0.0, %v4001
        %v4003 = vpop.f32.mrb[0].mxu0
        %v4004 = vpop.f32.mrb[0].mxu0
        %v4005 = vadd.f32 0.0, %v4004
        %v4006 = vpop.f32.mrb[0].mxu0
        %4007 = vmatprep.mubr.bf16.mxu0 0
        %4008 = vmatmul.mubr.bf16.gmra.mrb[0].mxu0 %v3881
        %v4009 = vpop.f32.mrb[0].mxu0
        %v4010 = vadd.f32 0.0, %v4009
        %v4011 = vpop.f32.mrb[0].mxu0
        %v4012 = vpop.f32.mrb[0].mxu0
        %v4013 = vadd.f32 0.0, %v4012
        %v4014 = vpop.f32.mrb[0].mxu0
        %4015 = vmatprep.mubr.bf16.mxu0 0
        %4016 = vmatmul.mubr.bf16.gmra.mrb[0].mxu0 %v3884
        %v4017 = vpop.f32.mrb[0].mxu0
        %v4018 = vadd.f32 0.0, %v4017
        %v4019 = vpop.f32.mrb[0].mxu0
        %v4020 = vpop.f32.mrb[0].mxu0
        %v4021 = vadd.f32 0.0, %v4020
        %v4022 = vpop.f32.mrb[0].mxu0
        %4023 = vmatprep.mubr.bf16.mxu0 0
        %4024 = vmatmul.mubr.bf16.gmra.mrb[0].mxu0 %v3887
        %v4025 = vpop.f32.mrb[0].mxu0
        %v4026 = vadd.f32 0.0, %v4025
        %v4027 = vpop.f32.mrb[0].mxu0
        %v4028 = vpop.f32.mrb[0].mxu0
        %v4029 = vadd.f32 0.0, %v4028
        %v4030 = vpop.f32.mrb[0].mxu0
        %4031 = vmatprep.mubr.bf16.mxu0 0
        %4032 = vmatmul.mubr.bf16.gmra.mrb[0].mxu0 %v3890
        %v4033 = vpop.f32.mrb[0].mxu0
        %v4034 = vadd.f32 0.0, %v4033
        %v4035 = vpop.f32.mrb[0].mxu0
        %v4036 = vpop.f32.mrb[0].mxu0
        %v4037 = vadd.f32 0.0, %v4036
        %v4038 = vpop.f32.mrb[0].mxu0
        %4039 = vdwg.mxu0
        %v4040 = vadd.f32 %v3718, %v3930
        %v4041 = vadd.f32 %v3719, %v3933
        %v4042 = vadd.f32 %v3720, %v3938
        %v4043 = vadd.f32 %v3721, %v3941
        %v4044 = vadd.f32 %v3722, %v3946
        %v4045 = vadd.f32 %v3723, %v3949
        %v4046 = vadd.f32 %v3724, %v3954
        %v4047 = vadd.f32 %v3725, %v3957
        %v4048 = vadd.f32 %v3726, %v3962
        %v4049 = vadd.f32 %v3727, %v3965
        %v4050 = vadd.f32 %v3728, %v3970
        %v4051 = vadd.f32 %v3729, %v3973
        %v4052 = vadd.f32 %v3730, %v3978
        %v4053 = vadd.f32 %v3731, %v3981
        %v4054 = vadd.f32 %v3732, %v3986
        %v4055 = vadd.f32 %v3733, %v3989
        %v4056 = vadd.f32 %v3734, %v3994
        %v4057 = vadd.f32 %v3735, %v3997
        %v4058 = vadd.f32 %v3736, %v4002
        %v4059 = vadd.f32 %v3737, %v4005
        %v4060 = vadd.f32 %v3738, %v4010
        %v4061 = vadd.f32 %v3739, %v4013
        %v4062 = vadd.f32 %v3740, %v4018
        %v4063 = vadd.f32 %v3741, %v4021
        %v4064 = vadd.f32 %v3742, %v4026
        %v4065 = vadd.f32 %v3743, %v4029
        %v4066 = vadd.f32 %v3744, %v4034
        %v4067 = vadd.f32 %v3745, %v4037
        %4068 = vst [vmem:[#allocation2] sm:$0xff] %v4040
        %4069 = vst [vmem:[#allocation2 + $0x8] sm:$0xff] %v4041
        %4070 = vst [vmem:[#allocation2 + $0x10] sm:$0xff] %v4042
        %4071 = vst [vmem:[#allocation2 + $0x18] sm:$0xff] %v4043
        %4072 = vst [vmem:[#allocation2 + $0x20] sm:$0xff] %v4044
        %4073 = vst [vmem:[#allocation2 + $0x28] sm:$0xff] %v4045
        %4074 = vst [vmem:[#allocation2 + $0x30] sm:$0xff] %v4046
        %4075 = vst [vmem:[#allocation2 + $0x38] sm:$0xff] %v4047
        %4076 = vst [vmem:[#allocation2 + $0x40] sm:$0xff] %v4048
        %4077 = vst [vmem:[#allocation2 + $0x48] sm:$0xff] %v4049
        %4078 = vst [vmem:[#allocation2 + $0x50] sm:$0xff] %v4050
        %4079 = vst [vmem:[#allocation2 + $0x58] sm:$0xff] %v4051
        %4080 = vst [vmem:[#allocation2 + $0x60] sm:$0xff] %v4052
        %4081 = vst [vmem:[#allocation2 + $0x68] sm:$0xff] %v4053
        %4082 = vst [vmem:[#allocation2 + $0x70] sm:$0xff] %v4054
        %4083 = vst [vmem:[#allocation2 + $0x78] sm:$0xff] %v4055
        %4084 = vst [vmem:[#allocation2 + $0x80] sm:$0xff] %v4056
        %4085 = vst [vmem:[#allocation2 + $0x88] sm:$0xff] %v4057
        %4086 = vst [vmem:[#allocation2 + $0x90] sm:$0xff] %v4058
        %4087 = vst [vmem:[#allocation2 + $0x98] sm:$0xff] %v4059
        %4088 = vst [vmem:[#allocation2 + $0xa0] sm:$0xff] %v4060
        %4089 = vst [vmem:[#allocation2 + $0xa8] sm:$0xff] %v4061
        %4090 = vst [vmem:[#allocation2 + $0xb0] sm:$0xff] %v4062
        %4091 = vst [vmem:[#allocation2 + $0xb8] sm:$0xff] %v4063
        %4092 = vst [vmem:[#allocation2 + $0xc0] sm:$0xff] %v4064
        %4093 = vst [vmem:[#allocation2 + $0xc8] sm:$0xff] %v4065
        %4094 = vst [vmem:[#allocation2 + $0xd0] sm:$0xff] %v4066
        %4095 = vst [vmem:[#allocation2 + $0xd8] sm:$0xff] %v4067
        %v4096 = vld [vmem:[#allocation2] sm:$0xff]
        %v4097 = vld [vmem:[#allocation2 + $0x8] sm:$0xff]
        %v4098 = vld [vmem:[#allocation2 + $0x10] sm:$0xff]
        %v4099 = vld [vmem:[#allocation2 + $0x18] sm:$0xff]
        %v4100 = vld [vmem:[#allocation2 + $0x20] sm:$0xff]
        %v4101 = vld [vmem:[#allocation2 + $0x28] sm:$0xff]
        %v4102 = vld [vmem:[#allocation2 + $0x30] sm:$0xff]
        %v4103 = vld [vmem:[#allocation2 + $0x38] sm:$0xff]
        %v4104 = vld [vmem:[#allocation2 + $0x40] sm:$0xff]
        %v4105 = vld [vmem:[#allocation2 + $0x48] sm:$0xff]
        %v4106 = vld [vmem:[#allocation2 + $0x50] sm:$0xff]
        %v4107 = vld [vmem:[#allocation2 + $0x58] sm:$0xff]
        %v4108 = vld [vmem:[#allocation2 + $0x60] sm:$0xff]
        %v4109 = vld [vmem:[#allocation2 + $0x68] sm:$0xff]
        %v4110 = vld [vmem:[#allocation2 + $0x70] sm:$0xff]
        %v4111 = vld [vmem:[#allocation2 + $0x78] sm:$0xff]
        %v4112 = vld [vmem:[#allocation2 + $0x80] sm:$0xff]
        %v4113 = vld [vmem:[#allocation2 + $0x88] sm:$0xff]
        %v4114 = vld [vmem:[#allocation2 + $0x90] sm:$0xff]
        %v4115 = vld [vmem:[#allocation2 + $0x98] sm:$0xff]
        %v4116 = vld [vmem:[#allocation2 + $0xa0] sm:$0xff]
        %v4117 = vld [vmem:[#allocation2 + $0xa8] sm:$0xff]
        %v4118 = vld [vmem:[#allocation2 + $0xb0] sm:$0xff]
        %v4119 = vld [vmem:[#allocation2 + $0xb8] sm:$0xff]
        %v4120 = vld [vmem:[#allocation2 + $0xc0] sm:$0xff]
        %v4121 = vld [vmem:[#allocation2 + $0xc8] sm:$0xff]
        %v4122 = vld [vmem:[#allocation2 + $0xd0] sm:$0xff]
        %v4123 = vld [vmem:[#allocation2 + $0xd8] sm:$0xff]
        %v4124 = vld [vmem:[%s2] sm:$0xff]
        %v4125 = vld [vmem:[%s2 + $0x8] sm:$0xff]
        %v4126 = vld [vmem:[%s2 + $0x10] sm:$0xff]
        %v4127 = vld [vmem:[%s2 + $0x18] sm:$0xff]
        %v4128 = vld [vmem:[%s2 + $0x20] sm:$0xff]
        %v4129 = vld [vmem:[%s2 + $0x28] sm:$0xff]
        %v4130 = vld [vmem:[%s2 + $0x30] sm:$0xff]
        %v4131 = vld [vmem:[%s2 + $0x38] sm:$0xff]
        %v4132 = vld [vmem:[%s2 + $0x40] sm:$0xff]
        %v4133 = vld [vmem:[%s2 + $0x48] sm:$0xff]
        %v4134 = vld [vmem:[%s2 + $0x50] sm:$0xff]
        %v4135 = vld [vmem:[%s2 + $0x58] sm:$0xff]
        %v4136 = vld [vmem:[%s2 + $0x60] sm:$0xff]
        %v4137 = vld [vmem:[%s2 + $0x68] sm:$0xff]
        %v4138 = vld [vmem:[%s2 + $0x70] sm:$0xff]
        %v4139 = vld [vmem:[%s2 + $0x78] sm:$0xff]
        %v4140 = vld [vmem:[%s2 + $0x80] sm:$0xff]
        %v4141 = vld [vmem:[%s2 + $0x88] sm:$0xff]
        %v4142 = vld [vmem:[%s2 + $0x90] sm:$0xff]
        %v4143 = vld [vmem:[%s2 + $0x98] sm:$0xff]
        %v4144 = vld [vmem:[%s2 + $0xa0] sm:$0xff]
        %v4145 = vld [vmem:[%s2 + $0xa8] sm:$0xff]
        %v4146 = vld [vmem:[%s2 + $0xb0] sm:$0xff]
        %v4147 = vld [vmem:[%s2 + $0xb8] sm:$0xff]
        %v4148 = vld [vmem:[%s2 + $0xc0] sm:$0xff]
        %v4149 = vld [vmem:[%s2 + $0xc8] sm:$0xff]
        %v4150 = vld [vmem:[%s2 + $0xd0] sm:$0xff]
        %v4151 = vld [vmem:[%s2 + $0xd8] sm:$0xff]
        %4153 = vset.pattern.permute.xlu0 0
        %4154 = vperm.xlu0 %4153, %v4124
        %v4155 = vpop.permute.xlu0 %4154
        %4158 = vset.pattern.permute.xlu0 0
        %4159 = vperm.xlu0 %4158, %v4125
        %v4160 = vpop.permute.xlu0 %4159
        %4163 = vset.pattern.permute.xlu0 0
        %4164 = vperm.xlu0 %4163, %v4126
        %v4165 = vpop.permute.xlu0 %4164
        %4168 = vset.pattern.permute.xlu0 0
        %4169 = vperm.xlu0 %4168, %v4127
        %v4170 = vpop.permute.xlu0 %4169
        %4173 = vset.pattern.permute.xlu0 0
        %4174 = vperm.xlu0 %4173, %v4128
        %v4175 = vpop.permute.xlu0 %4174
        %4178 = vset.pattern.permute.xlu0 0
        %4179 = vperm.xlu0 %4178, %v4129
        %v4180 = vpop.permute.xlu0 %4179
        %4183 = vset.pattern.permute.xlu0 0
        %4184 = vperm.xlu0 %4183, %v4130
        %v4185 = vpop.permute.xlu0 %4184
        %4188 = vset.pattern.permute.xlu0 0
        %4189 = vperm.xlu0 %4188, %v4131
        %v4190 = vpop.permute.xlu0 %4189
        %4193 = vset.pattern.permute.xlu0 0
        %4194 = vperm.xlu0 %4193, %v4132
        %v4195 = vpop.permute.xlu0 %4194
        %4198 = vset.pattern.permute.xlu0 0
        %4199 = vperm.xlu0 %4198, %v4133
        %v4200 = vpop.permute.xlu0 %4199
        %4203 = vset.pattern.permute.xlu0 0
        %4204 = vperm.xlu0 %4203, %v4134
        %v4205 = vpop.permute.xlu0 %4204
        %4208 = vset.pattern.permute.xlu0 0
        %4209 = vperm.xlu0 %4208, %v4135
        %v4210 = vpop.permute.xlu0 %4209
        %4213 = vset.pattern.permute.xlu0 0
        %4214 = vperm.xlu0 %4213, %v4136
        %v4215 = vpop.permute.xlu0 %4214
        %4218 = vset.pattern.permute.xlu0 0
        %4219 = vperm.xlu0 %4218, %v4137
        %v4220 = vpop.permute.xlu0 %4219
        %4223 = vset.pattern.permute.xlu0 0
        %4224 = vperm.xlu0 %4223, %v4138
        %v4225 = vpop.permute.xlu0 %4224
        %4228 = vset.pattern.permute.xlu0 0
        %4229 = vperm.xlu0 %4228, %v4139
        %v4230 = vpop.permute.xlu0 %4229
        %4233 = vset.pattern.permute.xlu0 0
        %4234 = vperm.xlu0 %4233, %v4140
        %v4235 = vpop.permute.xlu0 %4234
        %4238 = vset.pattern.permute.xlu0 0
        %4239 = vperm.xlu0 %4238, %v4141
        %v4240 = vpop.permute.xlu0 %4239
        %4243 = vset.pattern.permute.xlu0 0
        %4244 = vperm.xlu0 %4243, %v4142
        %v4245 = vpop.permute.xlu0 %4244
        %4248 = vset.pattern.permute.xlu0 0
        %4249 = vperm.xlu0 %4248, %v4143
        %v4250 = vpop.permute.xlu0 %4249
        %4253 = vset.pattern.permute.xlu0 0
        %4254 = vperm.xlu0 %4253, %v4144
        %v4255 = vpop.permute.xlu0 %4254
        %4258 = vset.pattern.permute.xlu0 0
        %4259 = vperm.xlu0 %4258, %v4145
        %v4260 = vpop.permute.xlu0 %4259
        %4263 = vset.pattern.permute.xlu0 0
        %4264 = vperm.xlu0 %4263, %v4146
        %v4265 = vpop.permute.xlu0 %4264
        %4268 = vset.pattern.permute.xlu0 0
        %4269 = vperm.xlu0 %4268, %v4147
        %v4270 = vpop.permute.xlu0 %4269
        %4273 = vset.pattern.permute.xlu0 0
        %4274 = vperm.xlu0 %4273, %v4148
        %v4275 = vpop.permute.xlu0 %4274
        %4278 = vset.pattern.permute.xlu0 0
        %4279 = vperm.xlu0 %4278, %v4149
        %v4280 = vpop.permute.xlu0 %4279
        %4283 = vset.pattern.permute.xlu0 0
        %4284 = vperm.xlu0 %4283, %v4150
        %v4285 = vpop.permute.xlu0 %4284
        %4288 = vset.pattern.permute.xlu0 0
        %4289 = vperm.xlu0 %4288, %v4151
        %v4290 = vpop.permute.xlu0 %4289
        %v4292 = vmul.f32 %v4096, %v4155
        %v4293 = vmul.f32 %v4097, %v4160
        %v4294 = vmul.f32 %v4098, %v4165
        %v4295 = vmul.f32 %v4099, %v4170
        %v4296 = vmul.f32 %v4100, %v4175
        %v4297 = vmul.f32 %v4101, %v4180
        %v4298 = vmul.f32 %v4102, %v4185
        %v4299 = vmul.f32 %v4103, %v4190
        %v4300 = vmul.f32 %v4104, %v4195
        %v4301 = vmul.f32 %v4105, %v4200
        %v4302 = vmul.f32 %v4106, %v4205
        %v4303 = vmul.f32 %v4107, %v4210
        %v4304 = vmul.f32 %v4108, %v4215
        %v4305 = vmul.f32 %v4109, %v4220
        %v4306 = vmul.f32 %v4110, %v4225
        %v4307 = vmul.f32 %v4111, %v4230
        %v4308 = vmul.f32 %v4112, %v4235
        %v4309 = vmul.f32 %v4113, %v4240
        %v4310 = vmul.f32 %v4114, %v4245
        %v4311 = vmul.f32 %v4115, %v4250
        %v4312 = vmul.f32 %v4116, %v4255
        %v4313 = vmul.f32 %v4117, %v4260
        %v4314 = vmul.f32 %v4118, %v4265
        %v4315 = vmul.f32 %v4119, %v4270
        %v4316 = vmul.f32 %v4120, %v4275
        %v4317 = vmul.f32 %v4121, %v4280
        %v4318 = vmul.f32 %v4122, %v4285
        %v4319 = vmul.f32 %v4123, %v4290
        %v4320 = vadd.f32 %v4292, %v4293
        %v4321 = vadd.f32 %v4320, %v4294
        %v4322 = vadd.f32 %v4321, %v4295
        %v4323 = vadd.f32 %v4322, %v4296
        %v4324 = vadd.f32 %v4323, %v4297
        %v4325 = vadd.f32 %v4324, %v4298
        %v4326 = vadd.f32 %v4325, %v4299
        %v4327 = vadd.f32 %v4326, %v4300
        %v4328 = vadd.f32 %v4327, %v4301
        %v4329 = vadd.f32 %v4328, %v4302
        %v4330 = vadd.f32 %v4329, %v4303
        %v4331 = vadd.f32 %v4330, %v4304
        %v4332 = vadd.f32 %v4331, %v4305
        %v4333 = vadd.f32 %v4332, %v4306
        %v4334 = vadd.f32 %v4333, %v4307
        %v4335 = vadd.f32 %v4334, %v4308
        %v4336 = vadd.f32 %v4335, %v4309
        %v4337 = vadd.f32 %v4336, %v4310
        %v4338 = vadd.f32 %v4337, %v4311
        %v4339 = vadd.f32 %v4338, %v4312
        %v4340 = vadd.f32 %v4339, %v4313
        %v4341 = vadd.f32 %v4340, %v4314
        %v4342 = vadd.f32 %v4341, %v4315
        %v4343 = vadd.f32 %v4342, %v4316
        %v4344 = vadd.f32 %v4343, %v4317
        %v4345 = vadd.f32 %v4344, %v4318
        %v4346 = vadd.f32 %v4345, %v4319
        %v4347 = vrot.slane %v4346, 4
        %v4348 = vadd.f32 %v4346, %v4347
        %v4349 = vrot.slane %v4348, 2
        %v4350 = vadd.f32 %v4348, %v4349
        %v4351 = vrot.slane %v4350, 1
        %v4352 = vadd.f32 %v4350, %v4351
        %4353 = vst [vmem:[%s227] sm:$0x1] %v4352
        %v4354 = vmul.f32 %v4292, %v4292
        %v4355 = vmul.f32 %v4293, %v4293
        %v4356 = vmul.f32 %v4294, %v4294
        %v4357 = vmul.f32 %v4295, %v4295
        %v4358 = vmul.f32 %v4296, %v4296
        %v4359 = vmul.f32 %v4297, %v4297
        %v4360 = vmul.f32 %v4298, %v4298
        %v4361 = vmul.f32 %v4299, %v4299
        %v4362 = vmul.f32 %v4300, %v4300
        %v4363 = vmul.f32 %v4301, %v4301
        %v4364 = vmul.f32 %v4302, %v4302
        %v4365 = vmul.f32 %v4303, %v4303
        %v4366 = vmul.f32 %v4304, %v4304
        %v4367 = vmul.f32 %v4305, %v4305
        %v4368 = vmul.f32 %v4306, %v4306
        %v4369 = vmul.f32 %v4307, %v4307
        %v4370 = vmul.f32 %v4308, %v4308
        %v4371 = vmul.f32 %v4309, %v4309
        %v4372 = vmul.f32 %v4310, %v4310
        %v4373 = vmul.f32 %v4311, %v4311
        %v4374 = vmul.f32 %v4312, %v4312
        %v4375 = vmul.f32 %v4313, %v4313
        %v4376 = vmul.f32 %v4314, %v4314
        %v4377 = vmul.f32 %v4315, %v4315
        %v4378 = vmul.f32 %v4316, %v4316
        %v4379 = vmul.f32 %v4317, %v4317
        %v4380 = vmul.f32 %v4318, %v4318
        %v4381 = vmul.f32 %v4319, %v4319
        %v4382 = vadd.f32 %v4354, %v4355
        %v4383 = vadd.f32 %v4382, %v4356
        %v4384 = vadd.f32 %v4383, %v4357
        %v4385 = vadd.f32 %v4384, %v4358
        %v4386 = vadd.f32 %v4385, %v4359
        %v4387 = vadd.f32 %v4386, %v4360
        %v4388 = vadd.f32 %v4387, %v4361
        %v4389 = vadd.f32 %v4388, %v4362
        %v4390 = vadd.f32 %v4389, %v4363
        %v4391 = vadd.f32 %v4390, %v4364
        %v4392 = vadd.f32 %v4391, %v4365
        %v4393 = vadd.f32 %v4392, %v4366
        %v4394 = vadd.f32 %v4393, %v4367
        %v4395 = vadd.f32 %v4394, %v4368
        %v4396 = vadd.f32 %v4395, %v4369
        %v4397 = vadd.f32 %v4396, %v4370
        %v4398 = vadd.f32 %v4397, %v4371
        %v4399 = vadd.f32 %v4398, %v4372
        %v4400 = vadd.f32 %v4399, %v4373
        %v4401 = vadd.f32 %v4400, %v4374
        %v4402 = vadd.f32 %v4401, %v4375
        %v4403 = vadd.f32 %v4402, %v4376
        %v4404 = vadd.f32 %v4403, %v4377
        %v4405 = vadd.f32 %v4404, %v4378
        %v4406 = vadd.f32 %v4405, %v4379
        %v4407 = vadd.f32 %v4406, %v4380
        %v4408 = vadd.f32 %v4407, %v4381
        %v4409 = vrot.slane %v4408, 4
        %v4410 = vadd.f32 %v4408, %v4409
        %v4411 = vrot.slane %v4410, 2
        %v4412 = vadd.f32 %v4410, %v4411
        %v4413 = vrot.slane %v4412, 1
        %v4414 = vadd.f32 %v4412, %v4413
        %4415 = vst [vmem:[%s233] sm:$0x1] %v4414
        %v4416 = vpack.c.bf16 %v4097, %v4096
        %v4417 = vpack.c.bf16 %v4099, %v4098
        %v4418 = vpack.c.bf16 %v4101, %v4100
        %v4419 = vpack.c.bf16 %v4103, %v4102
        %v4420 = vpack.c.bf16 %v4105, %v4104
        %v4421 = vpack.c.bf16 %v4107, %v4106
        %v4422 = vpack.c.bf16 %v4109, %v4108
        %v4423 = vpack.c.bf16 %v4111, %v4110
        %v4424 = vpack.c.bf16 %v4113, %v4112
        %v4425 = vpack.c.bf16 %v4115, %v4114
        %v4426 = vpack.c.bf16 %v4117, %v4116
        %v4427 = vpack.c.bf16 %v4119, %v4118
        %v4428 = vpack.c.bf16 %v4121, %v4120
        %v4429 = vpack.c.bf16 %v4123, %v4122
        %v4444 = vunpack.c.l.b16 %v4416
        %v4445 = vunpack.c.h.b16 %v4416
        %v4446 = vunpack.c.l.b16 %v4417
        %v4447 = vunpack.c.h.b16 %v4417
        %v4448 = vunpack.c.l.b16 %v4418
        %v4449 = vunpack.c.h.b16 %v4418
        %v4450 = vunpack.c.l.b16 %v4419
        %v4451 = vunpack.c.h.b16 %v4419
        %v4452 = vunpack.c.l.b16 %v4420
        %v4453 = vunpack.c.h.b16 %v4420
        %v4454 = vunpack.c.l.b16 %v4421
        %v4455 = vunpack.c.h.b16 %v4421
        %v4456 = vunpack.c.l.b16 %v4422
        %v4457 = vunpack.c.h.b16 %v4422
        %v4458 = vunpack.c.l.b16 %v4423
        %v4459 = vunpack.c.h.b16 %v4423
        %v4460 = vunpack.c.l.b16 %v4424
        %v4461 = vunpack.c.h.b16 %v4424
        %v4462 = vunpack.c.l.b16 %v4425
        %v4463 = vunpack.c.h.b16 %v4425
        %v4464 = vunpack.c.l.b16 %v4426
        %v4465 = vunpack.c.h.b16 %v4426
        %v4466 = vunpack.c.l.b16 %v4427
        %v4467 = vunpack.c.h.b16 %v4427
        %v4468 = vunpack.c.l.b16 %v4428
        %v4469 = vunpack.c.h.b16 %v4428
        %v4470 = vunpack.c.l.b16 %v4429
        %v4471 = vunpack.c.h.b16 %v4429
        %v4472 = vpack.c.b16 %v4444, %v4444
        %v4473 = vpack.c.b16 %v4445, %v4445
        %v4474 = vpack.c.b16 %v4446, %v4446
        %v4475 = vpack.c.b16 %v4447, %v4447
        %v4476 = vpack.c.b16 %v4448, %v4448
        %v4477 = vpack.c.b16 %v4449, %v4449
        %v4478 = vpack.c.b16 %v4450, %v4450
        %v4479 = vpack.c.b16 %v4451, %v4451
        %v4480 = vpack.c.b16 %v4452, %v4452
        %v4481 = vpack.c.b16 %v4453, %v4453
        %v4482 = vpack.c.b16 %v4454, %v4454
        %v4483 = vpack.c.b16 %v4455, %v4455
        %v4484 = vpack.c.b16 %v4456, %v4456
        %v4485 = vpack.c.b16 %v4457, %v4457
        %v4486 = vpack.c.b16 %v4458, %v4458
        %v4487 = vpack.c.b16 %v4459, %v4459
        %v4488 = vpack.c.b16 %v4460, %v4460
        %v4489 = vpack.c.b16 %v4461, %v4461
        %v4490 = vpack.c.b16 %v4462, %v4462
        %v4491 = vpack.c.b16 %v4463, %v4463
        %v4492 = vpack.c.b16 %v4464, %v4464
        %v4493 = vpack.c.b16 %v4465, %v4465
        %v4494 = vpack.c.b16 %v4466, %v4466
        %v4495 = vpack.c.b16 %v4467, %v4467
        %v4496 = vpack.c.b16 %v4468, %v4468
        %v4497 = vpack.c.b16 %v4469, %v4469
        %v4498 = vpack.c.b16 %v4470, %v4470
        %v4499 = vpack.c.b16 %v4471, %v4471
        %4528 = vst [vmem:[%s221] sm:$0xf] %v4472
        %4529 = vst [vmem:[%s221 + $0x4] sm:$0xf] %v4473
        %4530 = vst [vmem:[%s221 + $0x8] sm:$0xf] %v4474
        %4531 = vst [vmem:[%s221 + $0xc] sm:$0xf] %v4475
        %4532 = vst [vmem:[%s221 + $0x10] sm:$0xf] %v4476
        %4533 = vst [vmem:[%s221 + $0x14] sm:$0xf] %v4477
        %4534 = vst [vmem:[%s221 + $0x18] sm:$0xf] %v4478
        %4535 = vst [vmem:[%s221 + $0x1c] sm:$0xf] %v4479
        %4536 = vst [vmem:[%s221 + $0x20] sm:$0xf] %v4480
        %4537 = vst [vmem:[%s221 + $0x24] sm:$0xf] %v4481
        %4538 = vst [vmem:[%s221 + $0x28] sm:$0xf] %v4482
        %4539 = vst [vmem:[%s221 + $0x2c] sm:$0xf] %v4483
        %4540 = vst [vmem:[%s221 + $0x30] sm:$0xf] %v4484
        %4541 = vst [vmem:[%s221 + $0x34] sm:$0xf] %v4485
        %4542 = vst [vmem:[%s221 + $0x38] sm:$0xf] %v4486
        %4543 = vst [vmem:[%s221 + $0x3c] sm:$0xf] %v4487
        %4544 = vst [vmem:[%s221 + $0x40] sm:$0xf] %v4488
        %4545 = vst [vmem:[%s221 + $0x44] sm:$0xf] %v4489
        %4546 = vst [vmem:[%s221 + $0x48] sm:$0xf] %v4490
        %4547 = vst [vmem:[%s221 + $0x4c] sm:$0xf] %v4491
        %4548 = vst [vmem:[%s221 + $0x50] sm:$0xf] %v4492
        %4549 = vst [vmem:[%s221 + $0x54] sm:$0xf] %v4493
        %4550 = vst [vmem:[%s221 + $0x58] sm:$0xf] %v4494
        %4551 = vst [vmem:[%s221 + $0x5c] sm:$0xf] %v4495
        %4552 = vst [vmem:[%s221 + $0x60] sm:$0xf] %v4496
        %4553 = vst [vmem:[%s221 + $0x64] sm:$0xf] %v4497
        %4554 = vst [vmem:[%s221 + $0x68] sm:$0xf] %v4498
        %4555 = vst [vmem:[%s221 + $0x6c] sm:$0xf] %v4499
        %s4556 = sand.u32 %s99, 1
        %s4557 = scalar_lea.sflag [#allocation4], %s4556
        %s4558 = sand.u32 %s99, 1
        %s4559 = smul.addr %s4558, 112
        %s4560 = scalar_lea.vmem [#allocation3], %s4559
        %s4561 = sand.u32 %s23, 1
        %s4562 = scalar_lea.sflag [#allocation6], %s4561
        %s4563 = sand.u32 %s125, 1
        %s4564 = scalar_lea.vmem [#allocation5], %s4563
        %s4565 = sand.u32 %s23, 1
        %s4566 = scalar_lea.sflag [#allocation6], %s4565
        %s4567 = sand.u32 %s151, 1
        %s4568 = scalar_lea.vmem [#allocation7], %s4567
        // Predicated region
        $region33: #{tpu_custom_call.1} parent=31 // pred_check
          %p4569 = pneg %p109
        $region34: #{tpu_custom_call.1} parent=31 // pred_check_branch
          %4571 = sbr.rel (%p4569) target = $region36
        $region35: #{tpu_custom_call.1} parent=31 // pred_region
          %s4573 = ssub.s32 1792, 1792
          %4574 = vsyncadd %s4557, %s4573
          %s4575 = smul.addr %s23, 28
          %s4576 = smul.addr %s4575, 64
          %s4577 = scalar_lea.hbm %s3, %s4576
          %s4578 = sshll.u32 %s4560, 4
          %s4579 = int_to_ptr.vmem [resolvable:$true] %s4578
          %4584 = dma.vmem_to_hbm [thread:$0]  %s4579, 1792, %s4577, %s4557, 64, 64, 4
        $region36: #{tpu_custom_call.1} parent=31 // pred_fallthru
          _
        // Predicated region
        $region37: #{tpu_custom_call.1} parent=31 // pred_check
          %p4585 = pneg %p135
        $region38: #{tpu_custom_call.1} parent=31 // pred_check_branch
          %4587 = sbr.rel (%p4585) target = $region40
        $region39: #{tpu_custom_call.1} parent=31 // pred_region
          %s4589 = ssub.s32 16, 16
          %4590 = vsyncadd %s4562, %s4589
          %s4591 = smul.addr %s23, 16
          %s4592 = scalar_lea.hbm %s4, %s4591
          %s4594 = sshll.u32 %s4564, 4
          %s4595 = int_to_ptr.vmem [resolvable:$true] %s4594
          %4597 = dma.vmem_to_hbm [thread:$0]  %s4595, 16, %s4592, %s4562
        $region40: #{tpu_custom_call.1} parent=31 // pred_fallthru
          _
        // Predicated region
        $region41: #{tpu_custom_call.1} parent=31 // pred_check
          %p4598 = pneg %p161
        $region42: #{tpu_custom_call.1} parent=31 // pred_check_branch
          %4600 = sbr.rel (%p4598) target = $region44
        $region43: #{tpu_custom_call.1} parent=31 // pred_region
          %s4602 = ssub.s32 16, 16
          %4603 = vsyncadd %s4566, %s4602
          %s4604 = smul.addr %s23, 16
          %s4605 = scalar_lea.hbm %s5, %s4604
          %s4607 = sshll.u32 %s4568, 4
          %s4608 = int_to_ptr.vmem [resolvable:$true] %s4607
          %4610 = dma.vmem_to_hbm [thread:$0]  %s4608, 16, %s4605, %s4566
        $region44: #{tpu_custom_call.1} parent=31 // pred_fallthru
          _
      $region32: #{tpu_custom_call.1} parent=5 // pred_fallthru
        _
      %p4611 = scmp.le.s32.totalorder 2, %s18
      // Predicated region
      $region45: #{tpu_custom_call.1} parent=5 // pred_check
        %p4612 = pneg %p4611
      $region46: #{tpu_custom_call.1} parent=5 // pred_check_branch
        %4614 = sbr.rel (%p4612) target = $region48
      $region47: #{tpu_custom_call.1} parent=5 // pred_region
        %s4615 = ssub.s32 %s18, 2
        // Predicated region
        $region49: #{tpu_custom_call.1} parent=47 // pred_check
          %p4616 = pneg %p115
        $region50: #{tpu_custom_call.1} parent=47 // pred_check_branch
          %4618 = sbr.rel (%p4616) target = $region52
        $region51: #{tpu_custom_call.1} parent=47 // pred_region
          %s4619 = sand.u32 %s100, 1
          %s4620 = scalar_lea.sflag [#allocation4], %s4619
          %s4621 = sand.u32 %s100, 1
          %s4622 = smul.addr %s4621, 112
          %s4623 = scalar_lea.vmem [#allocation3], %s4622
          %4624 = dma.done %s4620, 1792
        $region52: #{tpu_custom_call.1} parent=47 // pred_fallthru
          _
        // Predicated region
        $region53: #{tpu_custom_call.1} parent=47 // pred_check
          %p4625 = pneg %p141
        $region54: #{tpu_custom_call.1} parent=47 // pred_check_branch
          %4627 = sbr.rel (%p4625) target = $region56
        $region55: #{tpu_custom_call.1} parent=47 // pred_region
          %s4628 = sand.u32 %s24, 1
          %s4629 = scalar_lea.sflag [#allocation6], %s4628
          %s4630 = sand.u32 %s126, 1
          %s4631 = scalar_lea.vmem [#allocation5], %s4630
          %4632 = dma.done %s4629, 16
        $region56: #{tpu_custom_call.1} parent=47 // pred_fallthru
          _
        // Predicated region
        $region57: #{tpu_custom_call.1} parent=47 // pred_check
          %p4633 = pneg %p167
        $region58: #{tpu_custom_call.1} parent=47 // pred_check_branch
          %4635 = sbr.rel (%p4633) target = $region60
        $region59: #{tpu_custom_call.1} parent=47 // pred_region
          %s4636 = sand.u32 %s24, 1
          %s4637 = scalar_lea.sflag [#allocation6], %s4636
          %s4638 = sand.u32 %s152, 1
          %s4639 = scalar_lea.vmem [#allocation7], %s4638
          %4640 = dma.done %s4637, 16
        $region60: #{tpu_custom_call.1} parent=47 // pred_fallthru
          _
      $region48: #{tpu_custom_call.1} parent=5 // pred_fallthru
        _
    $region6: #{tpu_custom_call.1} parent=1 // loop_footer
      %s22 = sadd.s32 1, %s18
    $region7: #{tpu_custom_call.1} parent=1 // loop_footer_branch
      %17 = sbr.rel target = $region3
    $region8: #{tpu_custom_call.1} parent=1 // loop_exit
      _
    %4641 = vsyncpa [#allocation4], 1
    %s4642 = scalar_lea.sflag [#allocation4], 1
    %4643 = vsyncpa %s4642, 1
    %4644 = vsyncpa [#allocation6], 1
    %s4645 = scalar_lea.sflag [#allocation6], 1
    %4646 = vsyncpa %s4645, 1

</llo_original>
